<compile_context>
chip_gen: v7x
topology: tpu7x:2x2x1
jax: 0.10.0
libtpu: 0.0.40
codegen_flags: <defaults>
</compile_context>

<pallas_src>
import functools

import jax
import jax.numpy as jnp
from jax.experimental import pallas as pl
from jax.experimental.pallas import tpu as pltpu


# ----------------------------------------------------------------------------
# Fused kernel: mask-mul + 3 self-attention encoders + tanh + eta-scaled
# concat + linear_window_3h, for `batch_block` batch rows per grid step.
# All feature refs are 2-D (Bt*S, H) slabs (lane/sublane dense).
# ----------------------------------------------------------------------------
def lsa_fused_kernel(g_ref, spc_ref, lcf_ref, left_ref, right_ref,
                     wqkv_c_ref, bqkv_c_ref,
                     wqkv_l_ref, bqkv_l_ref,
                     wqkv_r_ref, bqkv_r_ref,
                     w3_ref, b3_ref,
                     o_ref, *, num_heads, head_dim, seq, batch_block):
    nh, dh, S, bt = num_heads, head_dim, seq, batch_block
    hidden = nh * dh
    M = bt * S

    # Mask multiplies in bf16 (masks arrive bf16 from the host).
    g = g_ref[...].astype(jnp.bfloat16)                     # (M, H)
    masked = g * spc_ref[...]                               # spc_mask * global
    x_lcf = g * lcf_ref[...]
    x_left = masked * left_ref[...]
    x_right = masked * right_ref[...]

    def encode(x_bf, wqkv_ref, bqkv_ref):
        # Single lane-dense QKV projection: (M,H)x(H,3H), bf16 in / f32 acc.
        # 1/sqrt(dh) is pre-folded into the Q columns and Q bias.
        qkv = jnp.dot(x_bf, wqkv_ref[...],
                      preferred_element_type=jnp.float32) + bqkv_ref[...]

        head_ctx = []
        for h in range(nh):                                  # static unroll
            q = qkv[:, h * dh:(h + 1) * dh]
            k = qkv[:, hidden + h * dh:hidden + (h + 1) * dh]
            v = qkv[:, 2 * hidden + h * dh:2 * hidden + (h + 1) * dh]
            # Batch the bt rows of this grid step through one attention dot.
            q = q.reshape(bt, S, dh).astype(jnp.bfloat16)
            k = k.reshape(bt, S, dh).astype(jnp.bfloat16)
            v = v.reshape(bt, S, dh).astype(jnp.bfloat16)
            s = jnp.einsum("bqd,bkd->bqk", q, k,
                           preferred_element_type=jnp.float32)
            s = s - jnp.max(s, axis=-1, keepdims=True)
            p = jnp.exp(s)
            p = p * pl.reciprocal(jnp.sum(p, axis=-1, keepdims=True),
                                  approx=True)
            c = jnp.einsum("bqk,bkd->bqd", p.astype(jnp.bfloat16), v,
                           preferred_element_type=jnp.float32)
            head_ctx.append(c.reshape(M, dh))
        ctx = jnp.concatenate(head_ctx, axis=-1)             # (M, H) f32
        return jnp.tanh(ctx).astype(jnp.bfloat16)            # (M, H) bf16

    lcf = encode(x_lcf, wqkv_c_ref, bqkv_c_ref)
    left = encode(x_left, wqkv_l_ref, bqkv_l_ref)
    right = encode(x_right, wqkv_r_ref, bqkv_r_ref)

    # linear_window_3h on concat(lcf, eta1*left, eta2*right): eta1/eta2 are
    # folded into the (H,H) row blocks of w3 outside the kernel, so the concat
    # becomes three full-K matmuls summed on the VPU.
    out = (jnp.dot(lcf, w3_ref[0], preferred_element_type=jnp.float32)
           + jnp.dot(left, w3_ref[1], preferred_element_type=jnp.float32)
           + jnp.dot(right, w3_ref[2], preferred_element_type=jnp.float32)
           + b3_ref[...])
    o_ref[...] = out                                          # (M, H) f32


# ----------------------------------------------------------------------------
# Host-side weight packing — all layout plumbing and the eta / 1/sqrt(dh)
# folding happen here, once per call, in plain JAX.
# ----------------------------------------------------------------------------
def _pack_qkv_2d(enc_params, head_dim):
    """(Wq,bq,Wk,bk,Wv,bv) -> Wqkv (H,3H) bf16, bqkv (1,3H) f32 (scale folded)."""
    wq, bq, wk, bk, wv, bv = enc_params
    inv_sqrt_dh = 1.0 / (head_dim ** 0.5)
    w = jnp.concatenate([wq * inv_sqrt_dh, wk, wv], axis=1)
    b = jnp.concatenate([bq * inv_sqrt_dh, bk, bv], axis=1)
    return w.astype(jnp.bfloat16), b.astype(jnp.float32)


def _pack_w3(w3, eta1, eta2, hidden):
    """(3H,H) -> (3,H,H) bf16 with eta1/eta2 folded into blocks 1 and 2."""
    blocks = [w3[0:hidden],
              w3[hidden:2 * hidden] * eta1,
              w3[2 * hidden:3 * hidden] * eta2]
    return jnp.stack(blocks, axis=0).astype(jnp.bfloat16)


def _default_batch_block(batch):
    """Biggest row-block that still leaves >=2 grid steps (v7x has 2 TCs)."""
    for bt in (8, 4, 2, 1):
        if batch % bt == 0 and batch // bt >= 2:
            return bt
    return 1


# ----------------------------------------------------------------------------
# Full LSA forward (window='lr', eta>=0 branch), single pallas_call.
# ----------------------------------------------------------------------------
@functools.partial(jax.jit, static_argnames=("num_heads", "batch_block"))
def lsa_forward(global_ctx, spc_mask, lcf_m, left_lcf_m, right_lcf_m, params,
                *, num_heads, batch_block=None):
    B, S, H = global_ctx.shape
    head_dim = H // num_heads
    bt = _default_batch_block(B) if batch_block is None else batch_block
    assert B % bt == 0 and H == num_heads * head_dim

    wqkv_c, bqkv_c = _pack_qkv_2d(params["enc"], head_dim)
    wqkv_l, bqkv_l = _pack_qkv_2d(params["enc_l"], head_dim)
    wqkv_r, bqkv_r = _pack_qkv_2d(params["enc_r"], head_dim)
    w3 = _pack_w3(params["w3"], params["etas"][0], params["etas"][1], H)
    b3 = params["b3"].astype(jnp.float32)

    # 2-D (B*S, H) slabs for all features (dense loads / stores).  Masks are
    # 0/1-ish values -> bf16 halves their DMA bytes.
    g2d = global_ctx.reshape(B * S, H)
    def _mask2d(m):
        return m.astype(jnp.bfloat16).reshape(B * S, H)
    spc2d = _mask2d(spc_mask)
    lcf2d = _mask2d(lcf_m)
    left2d = _mask2d(left_lcf_m)
    right2d = _mask2d(right_lcf_m)

    M = bt * S
    feat_spec = pl.BlockSpec((M, H), lambda i: (i, 0))
    wqkv_spec = pl.BlockSpec((H, 3 * H), lambda i: (0, 0))
    bqkv_spec = pl.BlockSpec((1, 3 * H), lambda i: (0, 0))
    w3_spec = pl.BlockSpec((3, H, H), lambda i: (0, 0, 0))
    b3_spec = pl.BlockSpec((1, H), lambda i: (0, 0))

    kernel = functools.partial(lsa_fused_kernel, num_heads=num_heads,
                               head_dim=head_dim, seq=S, batch_block=bt)
    out2d = pl.pallas_call(
        kernel,
        out_shape=jax.ShapeDtypeStruct((B * S, H), jnp.float32),
        grid_spec=pltpu.PrefetchScalarGridSpec(
            num_scalar_prefetch=0,
            grid=(B // bt,),
            in_specs=[feat_spec, feat_spec, feat_spec, feat_spec, feat_spec,
                      wqkv_spec, bqkv_spec,
                      wqkv_spec, bqkv_spec,
                      wqkv_spec, bqkv_spec,
                      w3_spec, b3_spec],
            out_specs=pl.BlockSpec((M, H), lambda i: (i, 0))),
        compiler_params=pltpu.CompilerParams(dimension_semantics=("parallel",)),
    )(g2d, spc2d, lcf2d, left2d, right2d,
      wqkv_c, bqkv_c, wqkv_l, bqkv_l, wqkv_r, bqkv_r, w3, b3)
    return out2d.reshape(B, S, H)


# ----------------------------------------------------------------------------
# Pure-JAX f32 reference (for correctness check)
# ----------------------------------------------------------------------------
def ref_encoder(x, wq, bq, wk, bk, wv, bv, *, num_heads):
    B, S, H = x.shape
    dh = H // num_heads
    q = (x @ wq + bq).reshape(B, S, num_heads, dh).transpose(0, 2, 1, 3)
    k = (x @ wk + bk).reshape(B, S, num_heads, dh).transpose(0, 2, 1, 3)
    v = (x @ wv + bv).reshape(B, S, num_heads, dh).transpose(0, 2, 1, 3)
    scores = jnp.einsum("bhqd,bhkd->bhqk", q, k) / (dh ** 0.5)
    p = jax.nn.softmax(scores, axis=-1)
    ctx = jnp.einsum("bhqk,bhkd->bhqd", p, v).transpose(0, 2, 1, 3).reshape(B, S, H)
    return jnp.tanh(ctx)


def ref_lsa(global_ctx, spc_mask, lcf_m, left_lcf_m, right_lcf_m, params, *, num_heads):
    masked = spc_mask * global_ctx
    lcf = ref_encoder(global_ctx * lcf_m, *params["enc"], num_heads=num_heads)
    left = ref_encoder(masked * left_lcf_m, *params["enc_l"], num_heads=num_heads)
    right = ref_encoder(masked * right_lcf_m, *params["enc_r"], num_heads=num_heads)
    eta1, eta2 = params["etas"][0], params["etas"][1]
    cat = jnp.concatenate([lcf, eta1 * left, eta2 * right], axis=-1)
    return cat @ params["w3"] + params["b3"]


if __name__ == "__main__":
    B, S, H = 2, 8, 32
    NUM_HEADS = 4
    ETA = 0.5  # opt.eta (>= 0), opt.window = 'lr'

    key = jax.random.PRNGKey(0)
    keys = jax.random.split(key, 10)

    def enc_params(k):
        ks = jax.random.split(k, 6)
        s = 0.05
        return (jax.random.normal(ks[0], (H, H), jnp.float32) * s,
                jax.random.normal(ks[1], (1, H), jnp.float32) * s,
                jax.random.normal(ks[2], (H, H), jnp.float32) * s,
                jax.random.normal(ks[3], (1, H), jnp.float32) * s,
                jax.random.normal(ks[4], (H, H), jnp.float32) * s,
                jax.random.normal(ks[5], (1, H), jnp.float32) * s)

    params = {
        "enc":   enc_params(keys[0]),
        "enc_l": enc_params(keys[1]),
        "enc_r": enc_params(keys[2]),
        # nn.Linear(3H, H): stored pre-transposed as (3H, H)
        "w3": jax.random.normal(keys[3], (3 * H, H), jnp.float32) * 0.05,
        "b3": jax.random.normal(keys[4], (1, H), jnp.float32) * 0.05,
        "etas": jnp.array([ETA, ETA], dtype=jnp.float32),
    }

    global_ctx = jax.random.normal(keys[5], (B, S, H), jnp.float32)
    spc_mask = jax.random.bernoulli(keys[6], 0.7, (B, S, H)).astype(jnp.float32)
    lcf_m = jax.random.uniform(keys[7], (B, S, H), jnp.float32)
    left_lcf_m = jax.random.uniform(keys[8], (B, S, H), jnp.float32)
    right_lcf_m = jax.random.uniform(keys[9], (B, S, H), jnp.float32)

    out = lsa_forward(global_ctx, spc_mask, lcf_m, left_lcf_m, right_lcf_m,
                      params, num_heads=NUM_HEADS)
    out = jax.block_until_ready(out)

    ref = ref_lsa(global_ctx, spc_mask, lcf_m, left_lcf_m, right_lcf_m,
                  params, num_heads=NUM_HEADS)
    assert out.shape == (B, S, H)
    max_err = float(jnp.max(jnp.abs(out - ref)))
    # bf16 MXU operands / bf16 masks + approx-reciprocal softmax vs f32 ref.
    assert max_err < 3e-2, f"mismatch vs JAX reference (max abs err {max_err})"

    print("KERNEL_OK")
</pallas_src>

<mosaic_0001>
module attributes {stable_mosaic.version = 11 : i64} {
  func.func @lsa_fused_kernel(%arg0: i32, %arg1: memref<8x32xf32, #tpu.memory_space<vmem>>, %arg2: memref<8x32xbf16, #tpu.memory_space<vmem>>, %arg3: memref<8x32xbf16, #tpu.memory_space<vmem>>, %arg4: memref<8x32xbf16, #tpu.memory_space<vmem>>, %arg5: memref<8x32xbf16, #tpu.memory_space<vmem>>, %arg6: memref<32x96xbf16, #tpu.memory_space<vmem>>, %arg7: memref<1x96xf32, #tpu.memory_space<vmem>>, %arg8: memref<32x96xbf16, #tpu.memory_space<vmem>>, %arg9: memref<1x96xf32, #tpu.memory_space<vmem>>, %arg10: memref<32x96xbf16, #tpu.memory_space<vmem>>, %arg11: memref<1x96xf32, #tpu.memory_space<vmem>>, %arg12: memref<3x32x32xbf16, #tpu.memory_space<vmem>>, %arg13: memref<1x32xf32, #tpu.memory_space<vmem>>, %arg14: memref<8x32xf32, #tpu.memory_space<vmem>>) attributes {dimension_semantics = [#tpu.dimension_semantics<parallel>], iteration_bounds = array<i64: 2>, scalar_prefetch = 0 : i64, scratch_operands = 0 : i64, tpu.core_type = #tpu.core_type<tc>, window_params = [{transform_indices = @transform_0, window_bounds = array<i64: 8, 32>}, {transform_indices = @transform_1, window_bounds = array<i64: 8, 32>}, {transform_indices = @transform_2, window_bounds = array<i64: 8, 32>}, {transform_indices = @transform_3, window_bounds = array<i64: 8, 32>}, {transform_indices = @transform_4, window_bounds = array<i64: 8, 32>}, {pipeline_mode = #tpu.pipeline_mode<synchronous>, transform_indices = @transform_5, window_bounds = array<i64: 32, 96>}, {pipeline_mode = #tpu.pipeline_mode<synchronous>, transform_indices = @transform_6, window_bounds = array<i64: 1, 96>}, {pipeline_mode = #tpu.pipeline_mode<synchronous>, transform_indices = @transform_7, window_bounds = array<i64: 32, 96>}, {pipeline_mode = #tpu.pipeline_mode<synchronous>, transform_indices = @transform_8, window_bounds = array<i64: 1, 96>}, {pipeline_mode = #tpu.pipeline_mode<synchronous>, transform_indices = @transform_9, window_bounds = array<i64: 32, 96>}, {pipeline_mode = #tpu.pipeline_mode<synchronous>, transform_indices = @transform_10, window_bounds = array<i64: 1, 96>}, {pipeline_mode = #tpu.pipeline_mode<synchronous>, transform_indices = @transform_11, window_bounds = array<i64: 3, 32, 32>}, {pipeline_mode = #tpu.pipeline_mode<synchronous>, transform_indices = @transform_12, window_bounds = array<i64: 1, 32>}, {transform_indices = @transform_13, window_bounds = array<i64: 8, 32>}]} {
    %c0 = arith.constant 0 : index
    %c0_0 = arith.constant 0 : index
    %0 = vector.load %arg1[%c0, %c0_0] : memref<8x32xf32, #tpu.memory_space<vmem>>, vector<8x32xf32>
    %1 = arith.truncf %0 : vector<8x32xf32> to vector<8x32xbf16>
    %c0_1 = arith.constant 0 : index
    %c0_2 = arith.constant 0 : index
    %2 = vector.load %arg2[%c0_1, %c0_2] : memref<8x32xbf16, #tpu.memory_space<vmem>>, vector<8x32xbf16>
    %3 = arith.mulf %1, %2 : vector<8x32xbf16>
    %c0_3 = arith.constant 0 : index
    %c0_4 = arith.constant 0 : index
    %4 = vector.load %arg3[%c0_3, %c0_4] : memref<8x32xbf16, #tpu.memory_space<vmem>>, vector<8x32xbf16>
    %5 = arith.mulf %1, %4 : vector<8x32xbf16>
    %c0_5 = arith.constant 0 : index
    %c0_6 = arith.constant 0 : index
    %6 = vector.load %arg4[%c0_5, %c0_6] : memref<8x32xbf16, #tpu.memory_space<vmem>>, vector<8x32xbf16>
    %7 = arith.mulf %3, %6 : vector<8x32xbf16>
    %c0_7 = arith.constant 0 : index
    %c0_8 = arith.constant 0 : index
    %8 = vector.load %arg5[%c0_7, %c0_8] : memref<8x32xbf16, #tpu.memory_space<vmem>>, vector<8x32xbf16>
    %9 = arith.mulf %3, %8 : vector<8x32xbf16>
    %c0_9 = arith.constant 0 : index
    %c0_10 = arith.constant 0 : index
    %10 = vector.load %arg6[%c0_9, %c0_10] : memref<32x96xbf16, #tpu.memory_space<vmem>>, vector<32x96xbf16>
    %cst = arith.constant dense<0.000000e+00> : vector<8x96xf32>
    %11 = tpu.matmul %5, %10, %cst {dimension_numbers = #tpu.dot_dimension_numbers<[1], [0], [0], [1], [0, 0, 1, 1], [], []>} : vector<8x32xbf16>, vector<32x96xbf16>, vector<8x96xf32> -> vector<8x96xf32>
    %c0_11 = arith.constant 0 : index
    %c0_12 = arith.constant 0 : index
    %12 = vector.load %arg7[%c0_11, %c0_12] : memref<1x96xf32, #tpu.memory_space<vmem>>, vector<1x96xf32>
    %13 = vector.broadcast %12 : vector<1x96xf32> to vector<8x96xf32>
    %14 = arith.addf %11, %13 : vector<8x96xf32>
    %15 = vector.extract_strided_slice %14 {offsets = [0, 0], sizes = [8, 8], strides = [1, 1]} : vector<8x96xf32> to vector<8x8xf32>
    %16 = vector.extract_strided_slice %14 {offsets = [0, 32], sizes = [8, 8], strides = [1, 1]} : vector<8x96xf32> to vector<8x8xf32>
    %17 = vector.extract_strided_slice %14 {offsets = [0, 64], sizes = [8, 8], strides = [1, 1]} : vector<8x96xf32> to vector<8x8xf32>
    %18 = vector.shape_cast %15 : vector<8x8xf32> to vector<1x8x8xf32>
    %19 = arith.truncf %18 : vector<1x8x8xf32> to vector<1x8x8xbf16>
    %20 = vector.shape_cast %16 : vector<8x8xf32> to vector<1x8x8xf32>
    %21 = arith.truncf %20 : vector<1x8x8xf32> to vector<1x8x8xbf16>
    %22 = vector.shape_cast %17 : vector<8x8xf32> to vector<1x8x8xf32>
    %23 = arith.truncf %22 : vector<1x8x8xf32> to vector<1x8x8xbf16>
    "tpu.trace_start"() <{level = 10 : i32, message = "bqd,bkd->bqk"}> : () -> ()
    %cst_13 = arith.constant dense<0.000000e+00> : vector<1x8x8xf32>
    %24 = tpu.matmul %19, %21, %cst_13 {dimension_numbers = #tpu.dot_dimension_numbers<[2], [2], [1], [1], [0, 0, 0, 1, 1, 1], [0], [0]>} : vector<1x8x8xbf16>, vector<1x8x8xbf16>, vector<1x8x8xf32> -> vector<1x8x8xf32>
    "tpu.trace_stop"() : () -> ()
    %cst_14 = arith.constant dense<0xFF800000> : vector<1x8xf32>
    %25 = vector.multi_reduction <maximumf>, %24, %cst_14 [2] : vector<1x8x8xf32> to vector<1x8xf32>
    %26 = vector.shape_cast %25 : vector<1x8xf32> to vector<1x8x1xf32>
    %27 = vector.broadcast %26 : vector<1x8x1xf32> to vector<1x8x8xf32>
    %28 = arith.subf %24, %27 : vector<1x8x8xf32>
    %29 = math.exp %28 : vector<1x8x8xf32>
    %cst_15 = arith.constant dense<0.000000e+00> : vector<1x8xf32>
    %30 = vector.multi_reduction <add>, %29, %cst_15 [2] : vector<1x8x8xf32> to vector<1x8xf32>
    %31 = vector.shape_cast %30 : vector<1x8xf32> to vector<1x8x1xf32>
    %32 = tpu.reciprocal %31 {approx = true} : vector<1x8x1xf32> -> vector<1x8x1xf32>
    %33 = vector.broadcast %32 : vector<1x8x1xf32> to vector<1x8x8xf32>
    %34 = arith.mulf %29, %33 : vector<1x8x8xf32>
    %35 = arith.truncf %34 : vector<1x8x8xf32> to vector<1x8x8xbf16>
    "tpu.trace_start"() <{level = 10 : i32, message = "bqk,bkd->bqd"}> : () -> ()
    %cst_16 = arith.constant dense<0.000000e+00> : vector<1x8x8xf32>
    %36 = tpu.matmul %35, %23, %cst_16 {dimension_numbers = #tpu.dot_dimension_numbers<[2], [1], [1], [2], [0, 0, 0, 1, 1, 2], [0], [0]>} : vector<1x8x8xbf16>, vector<1x8x8xbf16>, vector<1x8x8xf32> -> vector<1x8x8xf32>
    "tpu.trace_stop"() : () -> ()
    %37 = vector.shape_cast %36 : vector<1x8x8xf32> to vector<8x8xf32>
    %38 = vector.extract_strided_slice %14 {offsets = [0, 8], sizes = [8, 8], strides = [1, 1]} : vector<8x96xf32> to vector<8x8xf32>
    %39 = vector.extract_strided_slice %14 {offsets = [0, 40], sizes = [8, 8], strides = [1, 1]} : vector<8x96xf32> to vector<8x8xf32>
    %40 = vector.extract_strided_slice %14 {offsets = [0, 72], sizes = [8, 8], strides = [1, 1]} : vector<8x96xf32> to vector<8x8xf32>
    %41 = vector.shape_cast %38 : vector<8x8xf32> to vector<1x8x8xf32>
    %42 = arith.truncf %41 : vector<1x8x8xf32> to vector<1x8x8xbf16>
    %43 = vector.shape_cast %39 : vector<8x8xf32> to vector<1x8x8xf32>
    %44 = arith.truncf %43 : vector<1x8x8xf32> to vector<1x8x8xbf16>
    %45 = vector.shape_cast %40 : vector<8x8xf32> to vector<1x8x8xf32>
    %46 = arith.truncf %45 : vector<1x8x8xf32> to vector<1x8x8xbf16>
    "tpu.trace_start"() <{level = 10 : i32, message = "bqd,bkd->bqk"}> : () -> ()
    %cst_17 = arith.constant dense<0.000000e+00> : vector<1x8x8xf32>
    %47 = tpu.matmul %42, %44, %cst_17 {dimension_numbers = #tpu.dot_dimension_numbers<[2], [2], [1], [1], [0, 0, 0, 1, 1, 1], [0], [0]>} : vector<1x8x8xbf16>, vector<1x8x8xbf16>, vector<1x8x8xf32> -> vector<1x8x8xf32>
    "tpu.trace_stop"() : () -> ()
    %cst_18 = arith.constant dense<0xFF800000> : vector<1x8xf32>
    %48 = vector.multi_reduction <maximumf>, %47, %cst_18 [2] : vector<1x8x8xf32> to vector<1x8xf32>
    %49 = vector.shape_cast %48 : vector<1x8xf32> to vector<1x8x1xf32>
    %50 = vector.broadcast %49 : vector<1x8x1xf32> to vector<1x8x8xf32>
    %51 = arith.subf %47, %50 : vector<1x8x8xf32>
    %52 = math.exp %51 : vector<1x8x8xf32>
    %cst_19 = arith.constant dense<0.000000e+00> : vector<1x8xf32>
    %53 = vector.multi_reduction <add>, %52, %cst_19 [2] : vector<1x8x8xf32> to vector<1x8xf32>
    %54 = vector.shape_cast %53 : vector<1x8xf32> to vector<1x8x1xf32>
    %55 = tpu.reciprocal %54 {approx = true} : vector<1x8x1xf32> -> vector<1x8x1xf32>
    %56 = vector.broadcast %55 : vector<1x8x1xf32> to vector<1x8x8xf32>
    %57 = arith.mulf %52, %56 : vector<1x8x8xf32>
    %58 = arith.truncf %57 : vector<1x8x8xf32> to vector<1x8x8xbf16>
    "tpu.trace_start"() <{level = 10 : i32, message = "bqk,bkd->bqd"}> : () -> ()
    %cst_20 = arith.constant dense<0.000000e+00> : vector<1x8x8xf32>
    %59 = tpu.matmul %58, %46, %cst_20 {dimension_numbers = #tpu.dot_dimension_numbers<[2], [1], [1], [2], [0, 0, 0, 1, 1, 2], [0], [0]>} : vector<1x8x8xbf16>, vector<1x8x8xbf16>, vector<1x8x8xf32> -> vector<1x8x8xf32>
    "tpu.trace_stop"() : () -> ()
    %60 = vector.shape_cast %59 : vector<1x8x8xf32> to vector<8x8xf32>
    %61 = vector.extract_strided_slice %14 {offsets = [0, 16], sizes = [8, 8], strides = [1, 1]} : vector<8x96xf32> to vector<8x8xf32>
    %62 = vector.extract_strided_slice %14 {offsets = [0, 48], sizes = [8, 8], strides = [1, 1]} : vector<8x96xf32> to vector<8x8xf32>
    %63 = vector.extract_strided_slice %14 {offsets = [0, 80], sizes = [8, 8], strides = [1, 1]} : vector<8x96xf32> to vector<8x8xf32>
    %64 = vector.shape_cast %61 : vector<8x8xf32> to vector<1x8x8xf32>
    %65 = arith.truncf %64 : vector<1x8x8xf32> to vector<1x8x8xbf16>
    %66 = vector.shape_cast %62 : vector<8x8xf32> to vector<1x8x8xf32>
    %67 = arith.truncf %66 : vector<1x8x8xf32> to vector<1x8x8xbf16>
    %68 = vector.shape_cast %63 : vector<8x8xf32> to vector<1x8x8xf32>
    %69 = arith.truncf %68 : vector<1x8x8xf32> to vector<1x8x8xbf16>
    "tpu.trace_start"() <{level = 10 : i32, message = "bqd,bkd->bqk"}> : () -> ()
    %cst_21 = arith.constant dense<0.000000e+00> : vector<1x8x8xf32>
    %70 = tpu.matmul %65, %67, %cst_21 {dimension_numbers = #tpu.dot_dimension_numbers<[2], [2], [1], [1], [0, 0, 0, 1, 1, 1], [0], [0]>} : vector<1x8x8xbf16>, vector<1x8x8xbf16>, vector<1x8x8xf32> -> vector<1x8x8xf32>
    "tpu.trace_stop"() : () -> ()
    %cst_22 = arith.constant dense<0xFF800000> : vector<1x8xf32>
    %71 = vector.multi_reduction <maximumf>, %70, %cst_22 [2] : vector<1x8x8xf32> to vector<1x8xf32>
    %72 = vector.shape_cast %71 : vector<1x8xf32> to vector<1x8x1xf32>
    %73 = vector.broadcast %72 : vector<1x8x1xf32> to vector<1x8x8xf32>
    %74 = arith.subf %70, %73 : vector<1x8x8xf32>
    %75 = math.exp %74 : vector<1x8x8xf32>
    %cst_23 = arith.constant dense<0.000000e+00> : vector<1x8xf32>
    %76 = vector.multi_reduction <add>, %75, %cst_23 [2] : vector<1x8x8xf32> to vector<1x8xf32>
    %77 = vector.shape_cast %76 : vector<1x8xf32> to vector<1x8x1xf32>
    %78 = tpu.reciprocal %77 {approx = true} : vector<1x8x1xf32> -> vector<1x8x1xf32>
    %79 = vector.broadcast %78 : vector<1x8x1xf32> to vector<1x8x8xf32>
    %80 = arith.mulf %75, %79 : vector<1x8x8xf32>
    %81 = arith.truncf %80 : vector<1x8x8xf32> to vector<1x8x8xbf16>
    "tpu.trace_start"() <{level = 10 : i32, message = "bqk,bkd->bqd"}> : () -> ()
    %cst_24 = arith.constant dense<0.000000e+00> : vector<1x8x8xf32>
    %82 = tpu.matmul %81, %69, %cst_24 {dimension_numbers = #tpu.dot_dimension_numbers<[2], [1], [1], [2], [0, 0, 0, 1, 1, 2], [0], [0]>} : vector<1x8x8xbf16>, vector<1x8x8xbf16>, vector<1x8x8xf32> -> vector<1x8x8xf32>
    "tpu.trace_stop"() : () -> ()
    %83 = vector.shape_cast %82 : vector<1x8x8xf32> to vector<8x8xf32>
    %84 = vector.extract_strided_slice %14 {offsets = [0, 24], sizes = [8, 8], strides = [1, 1]} : vector<8x96xf32> to vector<8x8xf32>
    %85 = vector.extract_strided_slice %14 {offsets = [0, 56], sizes = [8, 8], strides = [1, 1]} : vector<8x96xf32> to vector<8x8xf32>
    %86 = vector.extract_strided_slice %14 {offsets = [0, 88], sizes = [8, 8], strides = [1, 1]} : vector<8x96xf32> to vector<8x8xf32>
    %87 = vector.shape_cast %84 : vector<8x8xf32> to vector<1x8x8xf32>
    %88 = arith.truncf %87 : vector<1x8x8xf32> to vector<1x8x8xbf16>
    %89 = vector.shape_cast %85 : vector<8x8xf32> to vector<1x8x8xf32>
    %90 = arith.truncf %89 : vector<1x8x8xf32> to vector<1x8x8xbf16>
    %91 = vector.shape_cast %86 : vector<8x8xf32> to vector<1x8x8xf32>
    %92 = arith.truncf %91 : vector<1x8x8xf32> to vector<1x8x8xbf16>
    "tpu.trace_start"() <{level = 10 : i32, message = "bqd,bkd->bqk"}> : () -> ()
    %cst_25 = arith.constant dense<0.000000e+00> : vector<1x8x8xf32>
    %93 = tpu.matmul %88, %90, %cst_25 {dimension_numbers = #tpu.dot_dimension_numbers<[2], [2], [1], [1], [0, 0, 0, 1, 1, 1], [0], [0]>} : vector<1x8x8xbf16>, vector<1x8x8xbf16>, vector<1x8x8xf32> -> vector<1x8x8xf32>
    "tpu.trace_stop"() : () -> ()
    %cst_26 = arith.constant dense<0xFF800000> : vector<1x8xf32>
    %94 = vector.multi_reduction <maximumf>, %93, %cst_26 [2] : vector<1x8x8xf32> to vector<1x8xf32>
    %95 = vector.shape_cast %94 : vector<1x8xf32> to vector<1x8x1xf32>
    %96 = vector.broadcast %95 : vector<1x8x1xf32> to vector<1x8x8xf32>
    %97 = arith.subf %93, %96 : vector<1x8x8xf32>
    %98 = math.exp %97 : vector<1x8x8xf32>
    %cst_27 = arith.constant dense<0.000000e+00> : vector<1x8xf32>
    %99 = vector.multi_reduction <add>, %98, %cst_27 [2] : vector<1x8x8xf32> to vector<1x8xf32>
    %100 = vector.shape_cast %99 : vector<1x8xf32> to vector<1x8x1xf32>
    %101 = tpu.reciprocal %100 {approx = true} : vector<1x8x1xf32> -> vector<1x8x1xf32>
    %102 = vector.broadcast %101 : vector<1x8x1xf32> to vector<1x8x8xf32>
    %103 = arith.mulf %98, %102 : vector<1x8x8xf32>
    %104 = arith.truncf %103 : vector<1x8x8xf32> to vector<1x8x8xbf16>
    "tpu.trace_start"() <{level = 10 : i32, message = "bqk,bkd->bqd"}> : () -> ()
    %cst_28 = arith.constant dense<0.000000e+00> : vector<1x8x8xf32>
    %105 = tpu.matmul %104, %92, %cst_28 {dimension_numbers = #tpu.dot_dimension_numbers<[2], [1], [1], [2], [0, 0, 0, 1, 1, 2], [0], [0]>} : vector<1x8x8xbf16>, vector<1x8x8xbf16>, vector<1x8x8xf32> -> vector<1x8x8xf32>
    "tpu.trace_stop"() : () -> ()
    %106 = vector.shape_cast %105 : vector<1x8x8xf32> to vector<8x8xf32>
    %107 = tpu.concatenate %37, %60, %83, %106 in 1 : vector<8x8xf32>, vector<8x8xf32>, vector<8x8xf32>, vector<8x8xf32> -> vector<8x32xf32>
    %108 = math.tanh %107 : vector<8x32xf32>
    %109 = arith.truncf %108 : vector<8x32xf32> to vector<8x32xbf16>
    %c0_29 = arith.constant 0 : index
    %c0_30 = arith.constant 0 : index
    %110 = vector.load %arg8[%c0_29, %c0_30] : memref<32x96xbf16, #tpu.memory_space<vmem>>, vector<32x96xbf16>
    %cst_31 = arith.constant dense<0.000000e+00> : vector<8x96xf32>
    %111 = tpu.matmul %7, %110, %cst_31 {dimension_numbers = #tpu.dot_dimension_numbers<[1], [0], [0], [1], [0, 0, 1, 1], [], []>} : vector<8x32xbf16>, vector<32x96xbf16>, vector<8x96xf32> -> vector<8x96xf32>
    %c0_32 = arith.constant 0 : index
    %c0_33 = arith.constant 0 : index
    %112 = vector.load %arg9[%c0_32, %c0_33] : memref<1x96xf32, #tpu.memory_space<vmem>>, vector<1x96xf32>
    %113 = vector.broadcast %112 : vector<1x96xf32> to vector<8x96xf32>
    %114 = arith.addf %111, %113 : vector<8x96xf32>
    %115 = vector.extract_strided_slice %114 {offsets = [0, 0], sizes = [8, 8], strides = [1, 1]} : vector<8x96xf32> to vector<8x8xf32>
    %116 = vector.extract_strided_slice %114 {offsets = [0, 32], sizes = [8, 8], strides = [1, 1]} : vector<8x96xf32> to vector<8x8xf32>
    %117 = vector.extract_strided_slice %114 {offsets = [0, 64], sizes = [8, 8], strides = [1, 1]} : vector<8x96xf32> to vector<8x8xf32>
    %118 = vector.shape_cast %115 : vector<8x8xf32> to vector<1x8x8xf32>
    %119 = arith.truncf %118 : vector<1x8x8xf32> to vector<1x8x8xbf16>
    %120 = vector.shape_cast %116 : vector<8x8xf32> to vector<1x8x8xf32>
    %121 = arith.truncf %120 : vector<1x8x8xf32> to vector<1x8x8xbf16>
    %122 = vector.shape_cast %117 : vector<8x8xf32> to vector<1x8x8xf32>
    %123 = arith.truncf %122 : vector<1x8x8xf32> to vector<1x8x8xbf16>
    "tpu.trace_start"() <{level = 10 : i32, message = "bqd,bkd->bqk"}> : () -> ()
    %cst_34 = arith.constant dense<0.000000e+00> : vector<1x8x8xf32>
    %124 = tpu.matmul %119, %121, %cst_34 {dimension_numbers = #tpu.dot_dimension_numbers<[2], [2], [1], [1], [0, 0, 0, 1, 1, 1], [0], [0]>} : vector<1x8x8xbf16>, vector<1x8x8xbf16>, vector<1x8x8xf32> -> vector<1x8x8xf32>
    "tpu.trace_stop"() : () -> ()
    %cst_35 = arith.constant dense<0xFF800000> : vector<1x8xf32>
    %125 = vector.multi_reduction <maximumf>, %124, %cst_35 [2] : vector<1x8x8xf32> to vector<1x8xf32>
    %126 = vector.shape_cast %125 : vector<1x8xf32> to vector<1x8x1xf32>
    %127 = vector.broadcast %126 : vector<1x8x1xf32> to vector<1x8x8xf32>
    %128 = arith.subf %124, %127 : vector<1x8x8xf32>
    %129 = math.exp %128 : vector<1x8x8xf32>
    %cst_36 = arith.constant dense<0.000000e+00> : vector<1x8xf32>
    %130 = vector.multi_reduction <add>, %129, %cst_36 [2] : vector<1x8x8xf32> to vector<1x8xf32>
    %131 = vector.shape_cast %130 : vector<1x8xf32> to vector<1x8x1xf32>
    %132 = tpu.reciprocal %131 {approx = true} : vector<1x8x1xf32> -> vector<1x8x1xf32>
    %133 = vector.broadcast %132 : vector<1x8x1xf32> to vector<1x8x8xf32>
    %134 = arith.mulf %129, %133 : vector<1x8x8xf32>
    %135 = arith.truncf %134 : vector<1x8x8xf32> to vector<1x8x8xbf16>
    "tpu.trace_start"() <{level = 10 : i32, message = "bqk,bkd->bqd"}> : () -> ()
    %cst_37 = arith.constant dense<0.000000e+00> : vector<1x8x8xf32>
    %136 = tpu.matmul %135, %123, %cst_37 {dimension_numbers = #tpu.dot_dimension_numbers<[2], [1], [1], [2], [0, 0, 0, 1, 1, 2], [0], [0]>} : vector<1x8x8xbf16>, vector<1x8x8xbf16>, vector<1x8x8xf32> -> vector<1x8x8xf32>
    "tpu.trace_stop"() : () -> ()
    %137 = vector.shape_cast %136 : vector<1x8x8xf32> to vector<8x8xf32>
    %138 = vector.extract_strided_slice %114 {offsets = [0, 8], sizes = [8, 8], strides = [1, 1]} : vector<8x96xf32> to vector<8x8xf32>
    %139 = vector.extract_strided_slice %114 {offsets = [0, 40], sizes = [8, 8], strides = [1, 1]} : vector<8x96xf32> to vector<8x8xf32>
    %140 = vector.extract_strided_slice %114 {offsets = [0, 72], sizes = [8, 8], strides = [1, 1]} : vector<8x96xf32> to vector<8x8xf32>
    %141 = vector.shape_cast %138 : vector<8x8xf32> to vector<1x8x8xf32>
    %142 = arith.truncf %141 : vector<1x8x8xf32> to vector<1x8x8xbf16>
    %143 = vector.shape_cast %139 : vector<8x8xf32> to vector<1x8x8xf32>
    %144 = arith.truncf %143 : vector<1x8x8xf32> to vector<1x8x8xbf16>
    %145 = vector.shape_cast %140 : vector<8x8xf32> to vector<1x8x8xf32>
    %146 = arith.truncf %145 : vector<1x8x8xf32> to vector<1x8x8xbf16>
    "tpu.trace_start"() <{level = 10 : i32, message = "bqd,bkd->bqk"}> : () -> ()
    %cst_38 = arith.constant dense<0.000000e+00> : vector<1x8x8xf32>
    %147 = tpu.matmul %142, %144, %cst_38 {dimension_numbers = #tpu.dot_dimension_numbers<[2], [2], [1], [1], [0, 0, 0, 1, 1, 1], [0], [0]>} : vector<1x8x8xbf16>, vector<1x8x8xbf16>, vector<1x8x8xf32> -> vector<1x8x8xf32>
    "tpu.trace_stop"() : () -> ()
    %cst_39 = arith.constant dense<0xFF800000> : vector<1x8xf32>
    %148 = vector.multi_reduction <maximumf>, %147, %cst_39 [2] : vector<1x8x8xf32> to vector<1x8xf32>
    %149 = vector.shape_cast %148 : vector<1x8xf32> to vector<1x8x1xf32>
    %150 = vector.broadcast %149 : vector<1x8x1xf32> to vector<1x8x8xf32>
    %151 = arith.subf %147, %150 : vector<1x8x8xf32>
    %152 = math.exp %151 : vector<1x8x8xf32>
    %cst_40 = arith.constant dense<0.000000e+00> : vector<1x8xf32>
    %153 = vector.multi_reduction <add>, %152, %cst_40 [2] : vector<1x8x8xf32> to vector<1x8xf32>
    %154 = vector.shape_cast %153 : vector<1x8xf32> to vector<1x8x1xf32>
    %155 = tpu.reciprocal %154 {approx = true} : vector<1x8x1xf32> -> vector<1x8x1xf32>
    %156 = vector.broadcast %155 : vector<1x8x1xf32> to vector<1x8x8xf32>
    %157 = arith.mulf %152, %156 : vector<1x8x8xf32>
    %158 = arith.truncf %157 : vector<1x8x8xf32> to vector<1x8x8xbf16>
    "tpu.trace_start"() <{level = 10 : i32, message = "bqk,bkd->bqd"}> : () -> ()
    %cst_41 = arith.constant dense<0.000000e+00> : vector<1x8x8xf32>
    %159 = tpu.matmul %158, %146, %cst_41 {dimension_numbers = #tpu.dot_dimension_numbers<[2], [1], [1], [2], [0, 0, 0, 1, 1, 2], [0], [0]>} : vector<1x8x8xbf16>, vector<1x8x8xbf16>, vector<1x8x8xf32> -> vector<1x8x8xf32>
    "tpu.trace_stop"() : () -> ()
    %160 = vector.shape_cast %159 : vector<1x8x8xf32> to vector<8x8xf32>
    %161 = vector.extract_strided_slice %114 {offsets = [0, 16], sizes = [8, 8], strides = [1, 1]} : vector<8x96xf32> to vector<8x8xf32>
    %162 = vector.extract_strided_slice %114 {offsets = [0, 48], sizes = [8, 8], strides = [1, 1]} : vector<8x96xf32> to vector<8x8xf32>
    %163 = vector.extract_strided_slice %114 {offsets = [0, 80], sizes = [8, 8], strides = [1, 1]} : vector<8x96xf32> to vector<8x8xf32>
    %164 = vector.shape_cast %161 : vector<8x8xf32> to vector<1x8x8xf32>
    %165 = arith.truncf %164 : vector<1x8x8xf32> to vector<1x8x8xbf16>
    %166 = vector.shape_cast %162 : vector<8x8xf32> to vector<1x8x8xf32>
    %167 = arith.truncf %166 : vector<1x8x8xf32> to vector<1x8x8xbf16>
    %168 = vector.shape_cast %163 : vector<8x8xf32> to vector<1x8x8xf32>
    %169 = arith.truncf %168 : vector<1x8x8xf32> to vector<1x8x8xbf16>
    "tpu.trace_start"() <{level = 10 : i32, message = "bqd,bkd->bqk"}> : () -> ()
    %cst_42 = arith.constant dense<0.000000e+00> : vector<1x8x8xf32>
    %170 = tpu.matmul %165, %167, %cst_42 {dimension_numbers = #tpu.dot_dimension_numbers<[2], [2], [1], [1], [0, 0, 0, 1, 1, 1], [0], [0]>} : vector<1x8x8xbf16>, vector<1x8x8xbf16>, vector<1x8x8xf32> -> vector<1x8x8xf32>
    "tpu.trace_stop"() : () -> ()
    %cst_43 = arith.constant dense<0xFF800000> : vector<1x8xf32>
    %171 = vector.multi_reduction <maximumf>, %170, %cst_43 [2] : vector<1x8x8xf32> to vector<1x8xf32>
    %172 = vector.shape_cast %171 : vector<1x8xf32> to vector<1x8x1xf32>
    %173 = vector.broadcast %172 : vector<1x8x1xf32> to vector<1x8x8xf32>
    %174 = arith.subf %170, %173 : vector<1x8x8xf32>
    %175 = math.exp %174 : vector<1x8x8xf32>
    %cst_44 = arith.constant dense<0.000000e+00> : vector<1x8xf32>
    %176 = vector.multi_reduction <add>, %175, %cst_44 [2] : vector<1x8x8xf32> to vector<1x8xf32>
    %177 = vector.shape_cast %176 : vector<1x8xf32> to vector<1x8x1xf32>
    %178 = tpu.reciprocal %177 {approx = true} : vector<1x8x1xf32> -> vector<1x8x1xf32>
    %179 = vector.broadcast %178 : vector<1x8x1xf32> to vector<1x8x8xf32>
    %180 = arith.mulf %175, %179 : vector<1x8x8xf32>
    %181 = arith.truncf %180 : vector<1x8x8xf32> to vector<1x8x8xbf16>
    "tpu.trace_start"() <{level = 10 : i32, message = "bqk,bkd->bqd"}> : () -> ()
    %cst_45 = arith.constant dense<0.000000e+00> : vector<1x8x8xf32>
    %182 = tpu.matmul %181, %169, %cst_45 {dimension_numbers = #tpu.dot_dimension_numbers<[2], [1], [1], [2], [0, 0, 0, 1, 1, 2], [0], [0]>} : vector<1x8x8xbf16>, vector<1x8x8xbf16>, vector<1x8x8xf32> -> vector<1x8x8xf32>
    "tpu.trace_stop"() : () -> ()
    %183 = vector.shape_cast %182 : vector<1x8x8xf32> to vector<8x8xf32>
    %184 = vector.extract_strided_slice %114 {offsets = [0, 24], sizes = [8, 8], strides = [1, 1]} : vector<8x96xf32> to vector<8x8xf32>
    %185 = vector.extract_strided_slice %114 {offsets = [0, 56], sizes = [8, 8], strides = [1, 1]} : vector<8x96xf32> to vector<8x8xf32>
    %186 = vector.extract_strided_slice %114 {offsets = [0, 88], sizes = [8, 8], strides = [1, 1]} : vector<8x96xf32> to vector<8x8xf32>
    %187 = vector.shape_cast %184 : vector<8x8xf32> to vector<1x8x8xf32>
    %188 = arith.truncf %187 : vector<1x8x8xf32> to vector<1x8x8xbf16>
    %189 = vector.shape_cast %185 : vector<8x8xf32> to vector<1x8x8xf32>
    %190 = arith.truncf %189 : vector<1x8x8xf32> to vector<1x8x8xbf16>
    %191 = vector.shape_cast %186 : vector<8x8xf32> to vector<1x8x8xf32>
    %192 = arith.truncf %191 : vector<1x8x8xf32> to vector<1x8x8xbf16>
    "tpu.trace_start"() <{level = 10 : i32, message = "bqd,bkd->bqk"}> : () -> ()
    %cst_46 = arith.constant dense<0.000000e+00> : vector<1x8x8xf32>
    %193 = tpu.matmul %188, %190, %cst_46 {dimension_numbers = #tpu.dot_dimension_numbers<[2], [2], [1], [1], [0, 0, 0, 1, 1, 1], [0], [0]>} : vector<1x8x8xbf16>, vector<1x8x8xbf16>, vector<1x8x8xf32> -> vector<1x8x8xf32>
    "tpu.trace_stop"() : () -> ()
    %cst_47 = arith.constant dense<0xFF800000> : vector<1x8xf32>
    %194 = vector.multi_reduction <maximumf>, %193, %cst_47 [2] : vector<1x8x8xf32> to vector<1x8xf32>
    %195 = vector.shape_cast %194 : vector<1x8xf32> to vector<1x8x1xf32>
    %196 = vector.broadcast %195 : vector<1x8x1xf32> to vector<1x8x8xf32>
    %197 = arith.subf %193, %196 : vector<1x8x8xf32>
    %198 = math.exp %197 : vector<1x8x8xf32>
    %cst_48 = arith.constant dense<0.000000e+00> : vector<1x8xf32>
    %199 = vector.multi_reduction <add>, %198, %cst_48 [2] : vector<1x8x8xf32> to vector<1x8xf32>
    %200 = vector.shape_cast %199 : vector<1x8xf32> to vector<1x8x1xf32>
    %201 = tpu.reciprocal %200 {approx = true} : vector<1x8x1xf32> -> vector<1x8x1xf32>
    %202 = vector.broadcast %201 : vector<1x8x1xf32> to vector<1x8x8xf32>
    %203 = arith.mulf %198, %202 : vector<1x8x8xf32>
    %204 = arith.truncf %203 : vector<1x8x8xf32> to vector<1x8x8xbf16>
    "tpu.trace_start"() <{level = 10 : i32, message = "bqk,bkd->bqd"}> : () -> ()
    %cst_49 = arith.constant dense<0.000000e+00> : vector<1x8x8xf32>
    %205 = tpu.matmul %204, %192, %cst_49 {dimension_numbers = #tpu.dot_dimension_numbers<[2], [1], [1], [2], [0, 0, 0, 1, 1, 2], [0], [0]>} : vector<1x8x8xbf16>, vector<1x8x8xbf16>, vector<1x8x8xf32> -> vector<1x8x8xf32>
    "tpu.trace_stop"() : () -> ()
    %206 = vector.shape_cast %205 : vector<1x8x8xf32> to vector<8x8xf32>
    %207 = tpu.concatenate %137, %160, %183, %206 in 1 : vector<8x8xf32>, vector<8x8xf32>, vector<8x8xf32>, vector<8x8xf32> -> vector<8x32xf32>
    %208 = math.tanh %207 : vector<8x32xf32>
    %209 = arith.truncf %208 : vector<8x32xf32> to vector<8x32xbf16>
    %c0_50 = arith.constant 0 : index
    %c0_51 = arith.constant 0 : index
    %210 = vector.load %arg10[%c0_50, %c0_51] : memref<32x96xbf16, #tpu.memory_space<vmem>>, vector<32x96xbf16>
    %cst_52 = arith.constant dense<0.000000e+00> : vector<8x96xf32>
    %211 = tpu.matmul %9, %210, %cst_52 {dimension_numbers = #tpu.dot_dimension_numbers<[1], [0], [0], [1], [0, 0, 1, 1], [], []>} : vector<8x32xbf16>, vector<32x96xbf16>, vector<8x96xf32> -> vector<8x96xf32>
    %c0_53 = arith.constant 0 : index
    %c0_54 = arith.constant 0 : index
    %212 = vector.load %arg11[%c0_53, %c0_54] : memref<1x96xf32, #tpu.memory_space<vmem>>, vector<1x96xf32>
    %213 = vector.broadcast %212 : vector<1x96xf32> to vector<8x96xf32>
    %214 = arith.addf %211, %213 : vector<8x96xf32>
    %215 = vector.extract_strided_slice %214 {offsets = [0, 0], sizes = [8, 8], strides = [1, 1]} : vector<8x96xf32> to vector<8x8xf32>
    %216 = vector.extract_strided_slice %214 {offsets = [0, 32], sizes = [8, 8], strides = [1, 1]} : vector<8x96xf32> to vector<8x8xf32>
    %217 = vector.extract_strided_slice %214 {offsets = [0, 64], sizes = [8, 8], strides = [1, 1]} : vector<8x96xf32> to vector<8x8xf32>
    %218 = vector.shape_cast %215 : vector<8x8xf32> to vector<1x8x8xf32>
    %219 = arith.truncf %218 : vector<1x8x8xf32> to vector<1x8x8xbf16>
    %220 = vector.shape_cast %216 : vector<8x8xf32> to vector<1x8x8xf32>
    %221 = arith.truncf %220 : vector<1x8x8xf32> to vector<1x8x8xbf16>
    %222 = vector.shape_cast %217 : vector<8x8xf32> to vector<1x8x8xf32>
    %223 = arith.truncf %222 : vector<1x8x8xf32> to vector<1x8x8xbf16>
    "tpu.trace_start"() <{level = 10 : i32, message = "bqd,bkd->bqk"}> : () -> ()
    %cst_55 = arith.constant dense<0.000000e+00> : vector<1x8x8xf32>
    %224 = tpu.matmul %219, %221, %cst_55 {dimension_numbers = #tpu.dot_dimension_numbers<[2], [2], [1], [1], [0, 0, 0, 1, 1, 1], [0], [0]>} : vector<1x8x8xbf16>, vector<1x8x8xbf16>, vector<1x8x8xf32> -> vector<1x8x8xf32>
    "tpu.trace_stop"() : () -> ()
    %cst_56 = arith.constant dense<0xFF800000> : vector<1x8xf32>
    %225 = vector.multi_reduction <maximumf>, %224, %cst_56 [2] : vector<1x8x8xf32> to vector<1x8xf32>
    %226 = vector.shape_cast %225 : vector<1x8xf32> to vector<1x8x1xf32>
    %227 = vector.broadcast %226 : vector<1x8x1xf32> to vector<1x8x8xf32>
    %228 = arith.subf %224, %227 : vector<1x8x8xf32>
    %229 = math.exp %228 : vector<1x8x8xf32>
    %cst_57 = arith.constant dense<0.000000e+00> : vector<1x8xf32>
    %230 = vector.multi_reduction <add>, %229, %cst_57 [2] : vector<1x8x8xf32> to vector<1x8xf32>
    %231 = vector.shape_cast %230 : vector<1x8xf32> to vector<1x8x1xf32>
    %232 = tpu.reciprocal %231 {approx = true} : vector<1x8x1xf32> -> vector<1x8x1xf32>
    %233 = vector.broadcast %232 : vector<1x8x1xf32> to vector<1x8x8xf32>
    %234 = arith.mulf %229, %233 : vector<1x8x8xf32>
    %235 = arith.truncf %234 : vector<1x8x8xf32> to vector<1x8x8xbf16>
    "tpu.trace_start"() <{level = 10 : i32, message = "bqk,bkd->bqd"}> : () -> ()
    %cst_58 = arith.constant dense<0.000000e+00> : vector<1x8x8xf32>
    %236 = tpu.matmul %235, %223, %cst_58 {dimension_numbers = #tpu.dot_dimension_numbers<[2], [1], [1], [2], [0, 0, 0, 1, 1, 2], [0], [0]>} : vector<1x8x8xbf16>, vector<1x8x8xbf16>, vector<1x8x8xf32> -> vector<1x8x8xf32>
    "tpu.trace_stop"() : () -> ()
    %237 = vector.shape_cast %236 : vector<1x8x8xf32> to vector<8x8xf32>
    %238 = vector.extract_strided_slice %214 {offsets = [0, 8], sizes = [8, 8], strides = [1, 1]} : vector<8x96xf32> to vector<8x8xf32>
    %239 = vector.extract_strided_slice %214 {offsets = [0, 40], sizes = [8, 8], strides = [1, 1]} : vector<8x96xf32> to vector<8x8xf32>
    %240 = vector.extract_strided_slice %214 {offsets = [0, 72], sizes = [8, 8], strides = [1, 1]} : vector<8x96xf32> to vector<8x8xf32>
    %241 = vector.shape_cast %238 : vector<8x8xf32> to vector<1x8x8xf32>
    %242 = arith.truncf %241 : vector<1x8x8xf32> to vector<1x8x8xbf16>
    %243 = vector.shape_cast %239 : vector<8x8xf32> to vector<1x8x8xf32>
    %244 = arith.truncf %243 : vector<1x8x8xf32> to vector<1x8x8xbf16>
    %245 = vector.shape_cast %240 : vector<8x8xf32> to vector<1x8x8xf32>
    %246 = arith.truncf %245 : vector<1x8x8xf32> to vector<1x8x8xbf16>
    "tpu.trace_start"() <{level = 10 : i32, message = "bqd,bkd->bqk"}> : () -> ()
    %cst_59 = arith.constant dense<0.000000e+00> : vector<1x8x8xf32>
    %247 = tpu.matmul %242, %244, %cst_59 {dimension_numbers = #tpu.dot_dimension_numbers<[2], [2], [1], [1], [0, 0, 0, 1, 1, 1], [0], [0]>} : vector<1x8x8xbf16>, vector<1x8x8xbf16>, vector<1x8x8xf32> -> vector<1x8x8xf32>
    "tpu.trace_stop"() : () -> ()
    %cst_60 = arith.constant dense<0xFF800000> : vector<1x8xf32>
    %248 = vector.multi_reduction <maximumf>, %247, %cst_60 [2] : vector<1x8x8xf32> to vector<1x8xf32>
    %249 = vector.shape_cast %248 : vector<1x8xf32> to vector<1x8x1xf32>
    %250 = vector.broadcast %249 : vector<1x8x1xf32> to vector<1x8x8xf32>
    %251 = arith.subf %247, %250 : vector<1x8x8xf32>
    %252 = math.exp %251 : vector<1x8x8xf32>
    %cst_61 = arith.constant dense<0.000000e+00> : vector<1x8xf32>
    %253 = vector.multi_reduction <add>, %252, %cst_61 [2] : vector<1x8x8xf32> to vector<1x8xf32>
    %254 = vector.shape_cast %253 : vector<1x8xf32> to vector<1x8x1xf32>
    %255 = tpu.reciprocal %254 {approx = true} : vector<1x8x1xf32> -> vector<1x8x1xf32>
    %256 = vector.broadcast %255 : vector<1x8x1xf32> to vector<1x8x8xf32>
    %257 = arith.mulf %252, %256 : vector<1x8x8xf32>
    %258 = arith.truncf %257 : vector<1x8x8xf32> to vector<1x8x8xbf16>
    "tpu.trace_start"() <{level = 10 : i32, message = "bqk,bkd->bqd"}> : () -> ()
    %cst_62 = arith.constant dense<0.000000e+00> : vector<1x8x8xf32>
    %259 = tpu.matmul %258, %246, %cst_62 {dimension_numbers = #tpu.dot_dimension_numbers<[2], [1], [1], [2], [0, 0, 0, 1, 1, 2], [0], [0]>} : vector<1x8x8xbf16>, vector<1x8x8xbf16>, vector<1x8x8xf32> -> vector<1x8x8xf32>
    "tpu.trace_stop"() : () -> ()
    %260 = vector.shape_cast %259 : vector<1x8x8xf32> to vector<8x8xf32>
    %261 = vector.extract_strided_slice %214 {offsets = [0, 16], sizes = [8, 8], strides = [1, 1]} : vector<8x96xf32> to vector<8x8xf32>
    %262 = vector.extract_strided_slice %214 {offsets = [0, 48], sizes = [8, 8], strides = [1, 1]} : vector<8x96xf32> to vector<8x8xf32>
    %263 = vector.extract_strided_slice %214 {offsets = [0, 80], sizes = [8, 8], strides = [1, 1]} : vector<8x96xf32> to vector<8x8xf32>
    %264 = vector.shape_cast %261 : vector<8x8xf32> to vector<1x8x8xf32>
    %265 = arith.truncf %264 : vector<1x8x8xf32> to vector<1x8x8xbf16>
    %266 = vector.shape_cast %262 : vector<8x8xf32> to vector<1x8x8xf32>
    %267 = arith.truncf %266 : vector<1x8x8xf32> to vector<1x8x8xbf16>
    %268 = vector.shape_cast %263 : vector<8x8xf32> to vector<1x8x8xf32>
    %269 = arith.truncf %268 : vector<1x8x8xf32> to vector<1x8x8xbf16>
    "tpu.trace_start"() <{level = 10 : i32, message = "bqd,bkd->bqk"}> : () -> ()
    %cst_63 = arith.constant dense<0.000000e+00> : vector<1x8x8xf32>
    %270 = tpu.matmul %265, %267, %cst_63 {dimension_numbers = #tpu.dot_dimension_numbers<[2], [2], [1], [1], [0, 0, 0, 1, 1, 1], [0], [0]>} : vector<1x8x8xbf16>, vector<1x8x8xbf16>, vector<1x8x8xf32> -> vector<1x8x8xf32>
    "tpu.trace_stop"() : () -> ()
    %cst_64 = arith.constant dense<0xFF800000> : vector<1x8xf32>
    %271 = vector.multi_reduction <maximumf>, %270, %cst_64 [2] : vector<1x8x8xf32> to vector<1x8xf32>
    %272 = vector.shape_cast %271 : vector<1x8xf32> to vector<1x8x1xf32>
    %273 = vector.broadcast %272 : vector<1x8x1xf32> to vector<1x8x8xf32>
    %274 = arith.subf %270, %273 : vector<1x8x8xf32>
    %275 = math.exp %274 : vector<1x8x8xf32>
    %cst_65 = arith.constant dense<0.000000e+00> : vector<1x8xf32>
    %276 = vector.multi_reduction <add>, %275, %cst_65 [2] : vector<1x8x8xf32> to vector<1x8xf32>
    %277 = vector.shape_cast %276 : vector<1x8xf32> to vector<1x8x1xf32>
    %278 = tpu.reciprocal %277 {approx = true} : vector<1x8x1xf32> -> vector<1x8x1xf32>
    %279 = vector.broadcast %278 : vector<1x8x1xf32> to vector<1x8x8xf32>
    %280 = arith.mulf %275, %279 : vector<1x8x8xf32>
    %281 = arith.truncf %280 : vector<1x8x8xf32> to vector<1x8x8xbf16>
    "tpu.trace_start"() <{level = 10 : i32, message = "bqk,bkd->bqd"}> : () -> ()
    %cst_66 = arith.constant dense<0.000000e+00> : vector<1x8x8xf32>
    %282 = tpu.matmul %281, %269, %cst_66 {dimension_numbers = #tpu.dot_dimension_numbers<[2], [1], [1], [2], [0, 0, 0, 1, 1, 2], [0], [0]>} : vector<1x8x8xbf16>, vector<1x8x8xbf16>, vector<1x8x8xf32> -> vector<1x8x8xf32>
    "tpu.trace_stop"() : () -> ()
    %283 = vector.shape_cast %282 : vector<1x8x8xf32> to vector<8x8xf32>
    %284 = vector.extract_strided_slice %214 {offsets = [0, 24], sizes = [8, 8], strides = [1, 1]} : vector<8x96xf32> to vector<8x8xf32>
    %285 = vector.extract_strided_slice %214 {offsets = [0, 56], sizes = [8, 8], strides = [1, 1]} : vector<8x96xf32> to vector<8x8xf32>
    %286 = vector.extract_strided_slice %214 {offsets = [0, 88], sizes = [8, 8], strides = [1, 1]} : vector<8x96xf32> to vector<8x8xf32>
    %287 = vector.shape_cast %284 : vector<8x8xf32> to vector<1x8x8xf32>
    %288 = arith.truncf %287 : vector<1x8x8xf32> to vector<1x8x8xbf16>
    %289 = vector.shape_cast %285 : vector<8x8xf32> to vector<1x8x8xf32>
    %290 = arith.truncf %289 : vector<1x8x8xf32> to vector<1x8x8xbf16>
    %291 = vector.shape_cast %286 : vector<8x8xf32> to vector<1x8x8xf32>
    %292 = arith.truncf %291 : vector<1x8x8xf32> to vector<1x8x8xbf16>
    "tpu.trace_start"() <{level = 10 : i32, message = "bqd,bkd->bqk"}> : () -> ()
    %cst_67 = arith.constant dense<0.000000e+00> : vector<1x8x8xf32>
    %293 = tpu.matmul %288, %290, %cst_67 {dimension_numbers = #tpu.dot_dimension_numbers<[2], [2], [1], [1], [0, 0, 0, 1, 1, 1], [0], [0]>} : vector<1x8x8xbf16>, vector<1x8x8xbf16>, vector<1x8x8xf32> -> vector<1x8x8xf32>
    "tpu.trace_stop"() : () -> ()
    %cst_68 = arith.constant dense<0xFF800000> : vector<1x8xf32>
    %294 = vector.multi_reduction <maximumf>, %293, %cst_68 [2] : vector<1x8x8xf32> to vector<1x8xf32>
    %295 = vector.shape_cast %294 : vector<1x8xf32> to vector<1x8x1xf32>
    %296 = vector.broadcast %295 : vector<1x8x1xf32> to vector<1x8x8xf32>
    %297 = arith.subf %293, %296 : vector<1x8x8xf32>
    %298 = math.exp %297 : vector<1x8x8xf32>
    %cst_69 = arith.constant dense<0.000000e+00> : vector<1x8xf32>
    %299 = vector.multi_reduction <add>, %298, %cst_69 [2] : vector<1x8x8xf32> to vector<1x8xf32>
    %300 = vector.shape_cast %299 : vector<1x8xf32> to vector<1x8x1xf32>
    %301 = tpu.reciprocal %300 {approx = true} : vector<1x8x1xf32> -> vector<1x8x1xf32>
    %302 = vector.broadcast %301 : vector<1x8x1xf32> to vector<1x8x8xf32>
    %303 = arith.mulf %298, %302 : vector<1x8x8xf32>
    %304 = arith.truncf %303 : vector<1x8x8xf32> to vector<1x8x8xbf16>
    "tpu.trace_start"() <{level = 10 : i32, message = "bqk,bkd->bqd"}> : () -> ()
    %cst_70 = arith.constant dense<0.000000e+00> : vector<1x8x8xf32>
    %305 = tpu.matmul %304, %292, %cst_70 {dimension_numbers = #tpu.dot_dimension_numbers<[2], [1], [1], [2], [0, 0, 0, 1, 1, 2], [0], [0]>} : vector<1x8x8xbf16>, vector<1x8x8xbf16>, vector<1x8x8xf32> -> vector<1x8x8xf32>
    "tpu.trace_stop"() : () -> ()
    %306 = vector.shape_cast %305 : vector<1x8x8xf32> to vector<8x8xf32>
    %307 = tpu.concatenate %237, %260, %283, %306 in 1 : vector<8x8xf32>, vector<8x8xf32>, vector<8x8xf32>, vector<8x8xf32> -> vector<8x32xf32>
    %308 = math.tanh %307 : vector<8x32xf32>
    %309 = arith.truncf %308 : vector<8x32xf32> to vector<8x32xbf16>
    %c0_71 = arith.constant 0 : index
    %c0_72 = arith.constant 0 : index
    %c0_73 = arith.constant 0 : index
    %310 = vector.load %arg12[%c0_71, %c0_72, %c0_73] : memref<3x32x32xbf16, #tpu.memory_space<vmem>>, vector<1x32x32xbf16>
    %311 = vector.shape_cast %310 : vector<1x32x32xbf16> to vector<32x32xbf16>
    %cst_74 = arith.constant dense<0.000000e+00> : vector<8x32xf32>
    %312 = tpu.matmul %109, %311, %cst_74 {dimension_numbers = #tpu.dot_dimension_numbers<[1], [0], [0], [1], [0, 0, 1, 1], [], []>} : vector<8x32xbf16>, vector<32x32xbf16>, vector<8x32xf32> -> vector<8x32xf32>
    %c1 = arith.constant 1 : index
    %c0_75 = arith.constant 0 : index
    %c0_76 = arith.constant 0 : index
    %313 = vector.load %arg12[%c1, %c0_75, %c0_76] : memref<3x32x32xbf16, #tpu.memory_space<vmem>>, vector<1x32x32xbf16>
    %314 = vector.shape_cast %313 : vector<1x32x32xbf16> to vector<32x32xbf16>
    %cst_77 = arith.constant dense<0.000000e+00> : vector<8x32xf32>
    %315 = tpu.matmul %209, %314, %cst_77 {dimension_numbers = #tpu.dot_dimension_numbers<[1], [0], [0], [1], [0, 0, 1, 1], [], []>} : vector<8x32xbf16>, vector<32x32xbf16>, vector<8x32xf32> -> vector<8x32xf32>
    %316 = arith.addf %312, %315 : vector<8x32xf32>
    %c2 = arith.constant 2 : index
    %c0_78 = arith.constant 0 : index
    %c0_79 = arith.constant 0 : index
    %317 = vector.load %arg12[%c2, %c0_78, %c0_79] : memref<3x32x32xbf16, #tpu.memory_space<vmem>>, vector<1x32x32xbf16>
    %318 = vector.shape_cast %317 : vector<1x32x32xbf16> to vector<32x32xbf16>
    %cst_80 = arith.constant dense<0.000000e+00> : vector<8x32xf32>
    %319 = tpu.matmul %309, %318, %cst_80 {dimension_numbers = #tpu.dot_dimension_numbers<[1], [0], [0], [1], [0, 0, 1, 1], [], []>} : vector<8x32xbf16>, vector<32x32xbf16>, vector<8x32xf32> -> vector<8x32xf32>
    %320 = arith.addf %316, %319 : vector<8x32xf32>
    %c0_81 = arith.constant 0 : index
    %c0_82 = arith.constant 0 : index
    %321 = vector.load %arg13[%c0_81, %c0_82] : memref<1x32xf32, #tpu.memory_space<vmem>>, vector<1x32xf32>
    %322 = vector.broadcast %321 : vector<1x32xf32> to vector<8x32xf32>
    %323 = arith.addf %320, %322 : vector<8x32xf32>
    %c0_83 = arith.constant 0 : index
    %c0_84 = arith.constant 0 : index
    %324 = vector.load %arg14[%c0_83, %c0_84] : memref<8x32xf32, #tpu.memory_space<vmem>>, vector<8x32xf32>
    tpu.vector_store %arg14[%c0_83, %c0_84], %323 {strides = array<i32>} : memref<8x32xf32, #tpu.memory_space<vmem>>, vector<8x32xf32>,
    return
  }
  func.func @transform_0(%arg0: i32) -> (i32, i32) {
    %c0_i32 = arith.constant 0 : i32
    %c0_i32_0 = arith.constant 0 : i32
    return %arg0, %c0_i32 : i32, i32
  }
  func.func @transform_1(%arg0: i32) -> (i32, i32) {
    %c0_i32 = arith.constant 0 : i32
    %c0_i32_0 = arith.constant 0 : i32
    return %arg0, %c0_i32 : i32, i32
  }
  func.func @transform_2(%arg0: i32) -> (i32, i32) {
    %c0_i32 = arith.constant 0 : i32
    %c0_i32_0 = arith.constant 0 : i32
    return %arg0, %c0_i32 : i32, i32
  }
  func.func @transform_3(%arg0: i32) -> (i32, i32) {
    %c0_i32 = arith.constant 0 : i32
    %c0_i32_0 = arith.constant 0 : i32
    return %arg0, %c0_i32 : i32, i32
  }
  func.func @transform_4(%arg0: i32) -> (i32, i32) {
    %c0_i32 = arith.constant 0 : i32
    %c0_i32_0 = arith.constant 0 : i32
    return %arg0, %c0_i32 : i32, i32
  }
  func.func @transform_5(%arg0: i32) -> (i32, i32) {
    %c0_i32 = arith.constant 0 : i32
    %c0_i32_0 = arith.constant 0 : i32
    %c0_i32_1 = arith.constant 0 : i32
    return %c0_i32, %c0_i32_0 : i32, i32
  }
  func.func @transform_6(%arg0: i32) -> (i32, i32) {
    %c0_i32 = arith.constant 0 : i32
    %c0_i32_0 = arith.constant 0 : i32
    %c0_i32_1 = arith.constant 0 : i32
    return %c0_i32, %c0_i32_0 : i32, i32
  }
  func.func @transform_7(%arg0: i32) -> (i32, i32) {
    %c0_i32 = arith.constant 0 : i32
    %c0_i32_0 = arith.constant 0 : i32
    %c0_i32_1 = arith.constant 0 : i32
    return %c0_i32, %c0_i32_0 : i32, i32
  }
  func.func @transform_8(%arg0: i32) -> (i32, i32) {
    %c0_i32 = arith.constant 0 : i32
    %c0_i32_0 = arith.constant 0 : i32
    %c0_i32_1 = arith.constant 0 : i32
    return %c0_i32, %c0_i32_0 : i32, i32
  }
  func.func @transform_9(%arg0: i32) -> (i32, i32) {
    %c0_i32 = arith.constant 0 : i32
    %c0_i32_0 = arith.constant 0 : i32
    %c0_i32_1 = arith.constant 0 : i32
    return %c0_i32, %c0_i32_0 : i32, i32
  }
  func.func @transform_10(%arg0: i32) -> (i32, i32) {
    %c0_i32 = arith.constant 0 : i32
    %c0_i32_0 = arith.constant 0 : i32
    %c0_i32_1 = arith.constant 0 : i32
    return %c0_i32, %c0_i32_0 : i32, i32
  }
  func.func @transform_11(%arg0: i32) -> (i32, i32, i32) {
    %c0_i32 = arith.constant 0 : i32
    %c0_i32_0 = arith.constant 0 : i32
    %c0_i32_1 = arith.constant 0 : i32
    %c0_i32_2 = arith.constant 0 : i32
    return %c0_i32, %c0_i32_0, %c0_i32_1 : i32, i32, i32
  }
  func.func @transform_12(%arg0: i32) -> (i32, i32) {
    %c0_i32 = arith.constant 0 : i32
    %c0_i32_0 = arith.constant 0 : i32
    %c0_i32_1 = arith.constant 0 : i32
    return %c0_i32, %c0_i32_0 : i32, i32
  }
  func.func @transform_13(%arg0: i32) -> (i32, i32) {
    %c0_i32 = arith.constant 0 : i32
    %c0_i32_0 = arith.constant 0 : i32
    return %arg0, %c0_i32 : i32, i32
  }
}

</mosaic_0001>

<llo_original>
// kernel: lsa_forward.1
$region0: #{lsa_forward.1}
  #allocation0 [shape = 'u32[]', space=smem, size = 0x4, offset = 0x4, fixed_abs, tag = 'smem constant byte address 0x4 - core index']
  #allocation1 [shape = 'u32[144,128]{1,0:T(1,128)}', space=vmem, size = 0x12000, scoped, tag = 'internal scratch']
  %s0 = inlined_call_operand.vmem [shape: f32[16,32], index: 0, kind: input, shape index: {}]
  %s1 = inlined_call_operand.vmem [shape: bf16[16,32], index: 1, kind: input, shape index: {}]
  %s2 = inlined_call_operand.vmem [shape: bf16[16,32], index: 2, kind: input, shape index: {}]
  %s3 = inlined_call_operand.vmem [shape: bf16[16,32], index: 3, kind: input, shape index: {}]
  %s4 = inlined_call_operand.vmem [shape: bf16[16,32], index: 4, kind: input, shape index: {}]
  %s5 = inlined_call_operand.vmem [shape: bf16[32,96], index: 5, kind: input, shape index: {}]
  %s6 = inlined_call_operand.vmem [shape: f32[1,96], index: 6, kind: input, shape index: {}]
  %s7 = inlined_call_operand.vmem [shape: bf16[32,96], index: 7, kind: input, shape index: {}]
  %s8 = inlined_call_operand.vmem [shape: f32[1,96], index: 8, kind: input, shape index: {}]
  %s9 = inlined_call_operand.vmem [shape: bf16[32,96], index: 9, kind: input, shape index: {}]
  %s10 = inlined_call_operand.vmem [shape: f32[1,96], index: 10, kind: input, shape index: {}]
  %s11 = inlined_call_operand.vmem [shape: bf16[3,32,32], index: 11, kind: input, shape index: {}]
  %s12 = inlined_call_operand.vmem [shape: f32[1,32], index: 12, kind: input, shape index: {}]
  %s13 = inlined_call_operand.hbm [shape: f32[16,32], index: 13, kind: output, shape index: {}]
  %s14 = sld [smem:[#allocation0]]
  $region85: #{lsa_forward.1} parent=0
    _
  %s16 = ssub.s32 1, %s14
  %s17 = scalar_select 0, %s16, %s14
  $region1: #{lsa_forward.1} parent=0
    #allocation2 [shape = 'u8[8192]{0}', space=vmem, size = 0x2000, scoped, tag = 'output window, operand 0']
    #allocation3 [shape = 's32[2]{0}', space=sflag, size = 0x8, scoped, tag = 'scoped memory for lsa_forward.1']
    %18 = vsyncpa [#allocation3], 0
    %s19 = scalar_lea.sflag [#allocation3], 1
    %20 = vsyncpa %s19, 0
    loop: start=0, step=1, limit=4
    $region2: #{lsa_forward.1} parent=1 // loop_pre_header
      _
    $region3: #{lsa_forward.1} parent=1 // loop_header
      %s22 = sphi 0, %s26
      %p23 = scmp.ge.s32.totalorder %s22, 4
      %s32 = sphi 0, %s34
      %s35 = sphi 0, %s32
      %s36 = sphi 0, %s35
      %s52 = sphi 0, %s36
      %s58 = sphi 0, %s60
      %s61 = sphi 0, %s58
      %s62 = sphi 0, %s61
      %s78 = sphi 0, %s62
      %s84 = sphi 0, %s86
      %s87 = sphi 0, %s84
      %s88 = sphi 0, %s87
      %s104 = sphi 0, %s88
      %s110 = sphi 0, %s112
      %s113 = sphi 0, %s110
      %s114 = sphi 0, %s113
      %s130 = sphi 0, %s114
      %s136 = sphi 0, %s138
      %s139 = sphi 0, %s136
      %s140 = sphi 0, %s139
      %s156 = sphi 0, %s140
      %s160 = sphi 0, %s160
      %s162 = sphi 0, %s160
      %s163 = sphi 0, %s162
      %s177 = sphi 0, %s163
      %s181 = sphi 0, %s181
      %s183 = sphi 0, %s181
      %s184 = sphi 0, %s183
      %s198 = sphi 0, %s184
      %s202 = sphi 0, %s202
      %s204 = sphi 0, %s202
      %s205 = sphi 0, %s204
      %s219 = sphi 0, %s205
      %s223 = sphi 0, %s223
      %s225 = sphi 0, %s223
      %s226 = sphi 0, %s225
      %s240 = sphi 0, %s226
      %s244 = sphi 0, %s244
      %s246 = sphi 0, %s244
      %s247 = sphi 0, %s246
      %s261 = sphi 0, %s247
      %s265 = sphi 0, %s265
      %s267 = sphi 0, %s265
      %s268 = sphi 0, %s267
      %s282 = sphi 0, %s268
      %s286 = sphi 0, %s286
      %s288 = sphi 0, %s286
      %s289 = sphi 0, %s288
      %s303 = sphi 0, %s289
      %s307 = sphi 0, %s307
      %s309 = sphi 0, %s307
      %s310 = sphi 0, %s309
      %s324 = sphi 0, %s310
      %s330 = sphi 0, %s332
      %s333 = sphi 0, %s330
      %s334 = sphi 0, %s333
      %s350 = sphi 0, %s334
    $region4: #{lsa_forward.1} parent=1 // loop_header_branch
      %25 = sbr.rel (%p23) target = $region8
    $region5: #{lsa_forward.1} parent=1 // loop_body
      %s27 = ssub.s32 %s22, 1
      %s28 = ssub.s32 %s22, 2
      %s29 = sadd.s32 %s22, 1
      %s30 = ssub.s32 %s22, %s29
      %p31 = scmp.eq.s32.totalorder %s30, 0
      %s33 = sadd.s32 %s32, 1
      %s34 = scalar_select %p31, %s32, %s33
      %p37 = pneg %p31
      %p38 = scmp.eq.s32.totalorder %s22, 1
      %p39 = por %p37, %p38
      %p40 = scmp.ne.s32.totalorder %s32, %s35
      %p41 = scmp.eq.s32.totalorder %s22, 0
      %p42 = por %p40, %p41
      %p43 = scmp.ne.s32.totalorder %s32, %s35
      %p44 = scmp.eq.s32.totalorder %s27, 1
      %p45 = por %p43, %p44
      %p46 = scmp.ne.s32.totalorder %s35, %s36
      %p47 = scmp.eq.s32.totalorder %s27, 0
      %p48 = por %p46, %p47
      %p49 = scmp.ne.s32.totalorder %s35, %s36
      %p50 = scmp.eq.s32.totalorder %s28, 1
      %p51 = por %p49, %p50
      %p53 = scmp.ne.s32.totalorder %s36, %s52
      %p54 = scmp.eq.s32.totalorder %s28, 0
      %p55 = por %p53, %p54
      %s56 = ssub.s32 %s22, %s29
      %p57 = scmp.eq.s32.totalorder %s56, 0
      %s59 = sadd.s32 %s58, 1
      %s60 = scalar_select %p57, %s58, %s59
      %p63 = pneg %p57
      %p64 = scmp.eq.s32.totalorder %s22, 1
      %p65 = por %p63, %p64
      %p66 = scmp.ne.s32.totalorder %s58, %s61
      %p67 = scmp.eq.s32.totalorder %s22, 0
      %p68 = por %p66, %p67
      %p69 = scmp.ne.s32.totalorder %s58, %s61
      %p70 = scmp.eq.s32.totalorder %s27, 1
      %p71 = por %p69, %p70
      %p72 = scmp.ne.s32.totalorder %s61, %s62
      %p73 = scmp.eq.s32.totalorder %s27, 0
      %p74 = por %p72, %p73
      %p75 = scmp.ne.s32.totalorder %s61, %s62
      %p76 = scmp.eq.s32.totalorder %s28, 1
      %p77 = por %p75, %p76
      %p79 = scmp.ne.s32.totalorder %s62, %s78
      %p80 = scmp.eq.s32.totalorder %s28, 0
      %p81 = por %p79, %p80
      %s82 = ssub.s32 %s22, %s29
      %p83 = scmp.eq.s32.totalorder %s82, 0
      %s85 = sadd.s32 %s84, 1
      %s86 = scalar_select %p83, %s84, %s85
      %p89 = pneg %p83
      %p90 = scmp.eq.s32.totalorder %s22, 1
      %p91 = por %p89, %p90
      %p92 = scmp.ne.s32.totalorder %s84, %s87
      %p93 = scmp.eq.s32.totalorder %s22, 0
      %p94 = por %p92, %p93
      %p95 = scmp.ne.s32.totalorder %s84, %s87
      %p96 = scmp.eq.s32.totalorder %s27, 1
      %p97 = por %p95, %p96
      %p98 = scmp.ne.s32.totalorder %s87, %s88
      %p99 = scmp.eq.s32.totalorder %s27, 0
      %p100 = por %p98, %p99
      %p101 = scmp.ne.s32.totalorder %s87, %s88
      %p102 = scmp.eq.s32.totalorder %s28, 1
      %p103 = por %p101, %p102
      %p105 = scmp.ne.s32.totalorder %s88, %s104
      %p106 = scmp.eq.s32.totalorder %s28, 0
      %p107 = por %p105, %p106
      %s108 = ssub.s32 %s22, %s29
      %p109 = scmp.eq.s32.totalorder %s108, 0
      %s111 = sadd.s32 %s110, 1
      %s112 = scalar_select %p109, %s110, %s111
      %p115 = pneg %p109
      %p116 = scmp.eq.s32.totalorder %s22, 1
      %p117 = por %p115, %p116
      %p118 = scmp.ne.s32.totalorder %s110, %s113
      %p119 = scmp.eq.s32.totalorder %s22, 0
      %p120 = por %p118, %p119
      %p121 = scmp.ne.s32.totalorder %s110, %s113
      %p122 = scmp.eq.s32.totalorder %s27, 1
      %p123 = por %p121, %p122
      %p124 = scmp.ne.s32.totalorder %s113, %s114
      %p125 = scmp.eq.s32.totalorder %s27, 0
      %p126 = por %p124, %p125
      %p127 = scmp.ne.s32.totalorder %s113, %s114
      %p128 = scmp.eq.s32.totalorder %s28, 1
      %p129 = por %p127, %p128
      %p131 = scmp.ne.s32.totalorder %s114, %s130
      %p132 = scmp.eq.s32.totalorder %s28, 0
      %p133 = por %p131, %p132
      %s134 = ssub.s32 %s22, %s29
      %p135 = scmp.eq.s32.totalorder %s134, 0
      %s137 = sadd.s32 %s136, 1
      %s138 = scalar_select %p135, %s136, %s137
      %p141 = pneg %p135
      %p142 = scmp.eq.s32.totalorder %s22, 1
      %p143 = por %p141, %p142
      %p144 = scmp.ne.s32.totalorder %s136, %s139
      %p145 = scmp.eq.s32.totalorder %s22, 0
      %p146 = por %p144, %p145
      %p147 = scmp.ne.s32.totalorder %s136, %s139
      %p148 = scmp.eq.s32.totalorder %s27, 1
      %p149 = por %p147, %p148
      %p150 = scmp.ne.s32.totalorder %s139, %s140
      %p151 = scmp.eq.s32.totalorder %s27, 0
      %p152 = por %p150, %p151
      %p153 = scmp.ne.s32.totalorder %s139, %s140
      %p154 = scmp.eq.s32.totalorder %s28, 1
      %p155 = por %p153, %p154
      %p157 = scmp.ne.s32.totalorder %s140, %s156
      %p158 = scmp.eq.s32.totalorder %s28, 0
      %p159 = por %p157, %p158
      %s161 = sadd.s32 %s160, 1
      %p164 = scmp.eq.s32.totalorder %s22, 1
      %p165 = scmp.ne.s32.totalorder %s160, %s162
      %p166 = scmp.eq.s32.totalorder %s22, 0
      %p167 = por %p165, %p166
      %p168 = scmp.ne.s32.totalorder %s160, %s162
      %p169 = scmp.eq.s32.totalorder %s27, 1
      %p170 = por %p168, %p169
      %p171 = scmp.ne.s32.totalorder %s162, %s163
      %p172 = scmp.eq.s32.totalorder %s27, 0
      %p173 = por %p171, %p172
      %p174 = scmp.ne.s32.totalorder %s162, %s163
      %p175 = scmp.eq.s32.totalorder %s28, 1
      %p176 = por %p174, %p175
      %p178 = scmp.ne.s32.totalorder %s163, %s177
      %p179 = scmp.eq.s32.totalorder %s28, 0
      %p180 = por %p178, %p179
      %s182 = sadd.s32 %s181, 1
      %p185 = scmp.eq.s32.totalorder %s22, 1
      %p186 = scmp.ne.s32.totalorder %s181, %s183
      %p187 = scmp.eq.s32.totalorder %s22, 0
      %p188 = por %p186, %p187
      %p189 = scmp.ne.s32.totalorder %s181, %s183
      %p190 = scmp.eq.s32.totalorder %s27, 1
      %p191 = por %p189, %p190
      %p192 = scmp.ne.s32.totalorder %s183, %s184
      %p193 = scmp.eq.s32.totalorder %s27, 0
      %p194 = por %p192, %p193
      %p195 = scmp.ne.s32.totalorder %s183, %s184
      %p196 = scmp.eq.s32.totalorder %s28, 1
      %p197 = por %p195, %p196
      %p199 = scmp.ne.s32.totalorder %s184, %s198
      %p200 = scmp.eq.s32.totalorder %s28, 0
      %p201 = por %p199, %p200
      %s203 = sadd.s32 %s202, 1
      %p206 = scmp.eq.s32.totalorder %s22, 1
      %p207 = scmp.ne.s32.totalorder %s202, %s204
      %p208 = scmp.eq.s32.totalorder %s22, 0
      %p209 = por %p207, %p208
      %p210 = scmp.ne.s32.totalorder %s202, %s204
      %p211 = scmp.eq.s32.totalorder %s27, 1
      %p212 = por %p210, %p211
      %p213 = scmp.ne.s32.totalorder %s204, %s205
      %p214 = scmp.eq.s32.totalorder %s27, 0
      %p215 = por %p213, %p214
      %p216 = scmp.ne.s32.totalorder %s204, %s205
      %p217 = scmp.eq.s32.totalorder %s28, 1
      %p218 = por %p216, %p217
      %p220 = scmp.ne.s32.totalorder %s205, %s219
      %p221 = scmp.eq.s32.totalorder %s28, 0
      %p222 = por %p220, %p221
      %s224 = sadd.s32 %s223, 1
      %p227 = scmp.eq.s32.totalorder %s22, 1
      %p228 = scmp.ne.s32.totalorder %s223, %s225
      %p229 = scmp.eq.s32.totalorder %s22, 0
      %p230 = por %p228, %p229
      %p231 = scmp.ne.s32.totalorder %s223, %s225
      %p232 = scmp.eq.s32.totalorder %s27, 1
      %p233 = por %p231, %p232
      %p234 = scmp.ne.s32.totalorder %s225, %s226
      %p235 = scmp.eq.s32.totalorder %s27, 0
      %p236 = por %p234, %p235
      %p237 = scmp.ne.s32.totalorder %s225, %s226
      %p238 = scmp.eq.s32.totalorder %s28, 1
      %p239 = por %p237, %p238
      %p241 = scmp.ne.s32.totalorder %s226, %s240
      %p242 = scmp.eq.s32.totalorder %s28, 0
      %p243 = por %p241, %p242
      %s245 = sadd.s32 %s244, 1
      %p248 = scmp.eq.s32.totalorder %s22, 1
      %p249 = scmp.ne.s32.totalorder %s244, %s246
      %p250 = scmp.eq.s32.totalorder %s22, 0
      %p251 = por %p249, %p250
      %p252 = scmp.ne.s32.totalorder %s244, %s246
      %p253 = scmp.eq.s32.totalorder %s27, 1
      %p254 = por %p252, %p253
      %p255 = scmp.ne.s32.totalorder %s246, %s247
      %p256 = scmp.eq.s32.totalorder %s27, 0
      %p257 = por %p255, %p256
      %p258 = scmp.ne.s32.totalorder %s246, %s247
      %p259 = scmp.eq.s32.totalorder %s28, 1
      %p260 = por %p258, %p259
      %p262 = scmp.ne.s32.totalorder %s247, %s261
      %p263 = scmp.eq.s32.totalorder %s28, 0
      %p264 = por %p262, %p263
      %s266 = sadd.s32 %s265, 1
      %p269 = scmp.eq.s32.totalorder %s22, 1
      %p270 = scmp.ne.s32.totalorder %s265, %s267
      %p271 = scmp.eq.s32.totalorder %s22, 0
      %p272 = por %p270, %p271
      %p273 = scmp.ne.s32.totalorder %s265, %s267
      %p274 = scmp.eq.s32.totalorder %s27, 1
      %p275 = por %p273, %p274
      %p276 = scmp.ne.s32.totalorder %s267, %s268
      %p277 = scmp.eq.s32.totalorder %s27, 0
      %p278 = por %p276, %p277
      %p279 = scmp.ne.s32.totalorder %s267, %s268
      %p280 = scmp.eq.s32.totalorder %s28, 1
      %p281 = por %p279, %p280
      %p283 = scmp.ne.s32.totalorder %s268, %s282
      %p284 = scmp.eq.s32.totalorder %s28, 0
      %p285 = por %p283, %p284
      %s287 = sadd.s32 %s286, 1
      %p290 = scmp.eq.s32.totalorder %s22, 1
      %p291 = scmp.ne.s32.totalorder %s286, %s288
      %p292 = scmp.eq.s32.totalorder %s22, 0
      %p293 = por %p291, %p292
      %p294 = scmp.ne.s32.totalorder %s286, %s288
      %p295 = scmp.eq.s32.totalorder %s27, 1
      %p296 = por %p294, %p295
      %p297 = scmp.ne.s32.totalorder %s288, %s289
      %p298 = scmp.eq.s32.totalorder %s27, 0
      %p299 = por %p297, %p298
      %p300 = scmp.ne.s32.totalorder %s288, %s289
      %p301 = scmp.eq.s32.totalorder %s28, 1
      %p302 = por %p300, %p301
      %p304 = scmp.ne.s32.totalorder %s289, %s303
      %p305 = scmp.eq.s32.totalorder %s28, 0
      %p306 = por %p304, %p305
      %s308 = sadd.s32 %s307, 1
      %p311 = scmp.eq.s32.totalorder %s22, 1
      %p312 = scmp.ne.s32.totalorder %s307, %s309
      %p313 = scmp.eq.s32.totalorder %s22, 0
      %p314 = por %p312, %p313
      %p315 = scmp.ne.s32.totalorder %s307, %s309
      %p316 = scmp.eq.s32.totalorder %s27, 1
      %p317 = por %p315, %p316
      %p318 = scmp.ne.s32.totalorder %s309, %s310
      %p319 = scmp.eq.s32.totalorder %s27, 0
      %p320 = por %p318, %p319
      %p321 = scmp.ne.s32.totalorder %s309, %s310
      %p322 = scmp.eq.s32.totalorder %s28, 1
      %p323 = por %p321, %p322
      %p325 = scmp.ne.s32.totalorder %s310, %s324
      %p326 = scmp.eq.s32.totalorder %s28, 0
      %p327 = por %p325, %p326
      %s328 = ssub.s32 %s22, %s29
      %p329 = scmp.eq.s32.totalorder %s328, 0
      %s331 = sadd.s32 %s330, 1
      %s332 = scalar_select %p329, %s330, %s331
      %p335 = pneg %p329
      %p336 = scmp.eq.s32.totalorder %s22, 1
      %p337 = por %p335, %p336
      %p338 = scmp.ne.s32.totalorder %s330, %s333
      %p339 = scmp.eq.s32.totalorder %s22, 0
      %p340 = por %p338, %p339
      %p341 = scmp.ne.s32.totalorder %s330, %s333
      %p342 = scmp.eq.s32.totalorder %s27, 1
      %p343 = por %p341, %p342
      %p344 = scmp.ne.s32.totalorder %s333, %s334
      %p345 = scmp.eq.s32.totalorder %s27, 0
      %p346 = por %p344, %p345
      %p347 = scmp.ne.s32.totalorder %s333, %s334
      %p348 = scmp.eq.s32.totalorder %s28, 1
      %p349 = por %p347, %p348
      %p351 = scmp.ne.s32.totalorder %s334, %s350
      %p352 = scmp.eq.s32.totalorder %s28, 0
      %p353 = por %p351, %p352
      %p354 = scmp.le.s32.totalorder 1, %s22
      %p355 = scmp.lt.s32.totalorder %s22, 3
      %p356 = pnand %p354, %p355
      %p357 = pneg %p356
      // Predicated region
      $region9: #{lsa_forward.1} parent=5 // pred_check
        _
      $region10: #{lsa_forward.1} parent=5 // pred_check_branch
        %359 = sbr.rel (%p356) target = $region12
      $region11: #{lsa_forward.1} parent=5 // pred_region
        %s360 = ssub.s32 %s22, 1
        // Predicated region
        $region13: #{lsa_forward.1} parent=11 // pred_check
          %p361 = pneg %p173
        $region14: #{lsa_forward.1} parent=11 // pred_check_branch
          %363 = sbr.rel (%p361) target = $region16
        $region15: #{lsa_forward.1} parent=11 // pred_region
          _
        $region16: #{lsa_forward.1} parent=11 // pred_fallthru
          _
        // Predicated region
        $region17: #{lsa_forward.1} parent=11 // pred_check
          %p364 = pneg %p194
        $region18: #{lsa_forward.1} parent=11 // pred_check_branch
          %366 = sbr.rel (%p364) target = $region20
        $region19: #{lsa_forward.1} parent=11 // pred_region
          _
        $region20: #{lsa_forward.1} parent=11 // pred_fallthru
          _
        // Predicated region
        $region21: #{lsa_forward.1} parent=11 // pred_check
          %p367 = pneg %p215
        $region22: #{lsa_forward.1} parent=11 // pred_check_branch
          %369 = sbr.rel (%p367) target = $region24
        $region23: #{lsa_forward.1} parent=11 // pred_region
          _
        $region24: #{lsa_forward.1} parent=11 // pred_fallthru
          _
        // Predicated region
        $region25: #{lsa_forward.1} parent=11 // pred_check
          %p370 = pneg %p236
        $region26: #{lsa_forward.1} parent=11 // pred_check_branch
          %372 = sbr.rel (%p370) target = $region28
        $region27: #{lsa_forward.1} parent=11 // pred_region
          _
        $region28: #{lsa_forward.1} parent=11 // pred_fallthru
          _
        // Predicated region
        $region29: #{lsa_forward.1} parent=11 // pred_check
          %p373 = pneg %p257
        $region30: #{lsa_forward.1} parent=11 // pred_check_branch
          %375 = sbr.rel (%p373) target = $region32
        $region31: #{lsa_forward.1} parent=11 // pred_region
          _
        $region32: #{lsa_forward.1} parent=11 // pred_fallthru
          _
        // Predicated region
        $region33: #{lsa_forward.1} parent=11 // pred_check
          %p376 = pneg %p278
        $region34: #{lsa_forward.1} parent=11 // pred_check_branch
          %378 = sbr.rel (%p376) target = $region36
        $region35: #{lsa_forward.1} parent=11 // pred_region
          _
        $region36: #{lsa_forward.1} parent=11 // pred_fallthru
          _
        // Predicated region
        $region37: #{lsa_forward.1} parent=11 // pred_check
          %p379 = pneg %p299
        $region38: #{lsa_forward.1} parent=11 // pred_check_branch
          %381 = sbr.rel (%p379) target = $region40
        $region39: #{lsa_forward.1} parent=11 // pred_region
          _
        $region40: #{lsa_forward.1} parent=11 // pred_fallthru
          _
        // Predicated region
        $region41: #{lsa_forward.1} parent=11 // pred_check
          %p382 = pneg %p320
        $region42: #{lsa_forward.1} parent=11 // pred_check_branch
          %384 = sbr.rel (%p382) target = $region44
        $region43: #{lsa_forward.1} parent=11 // pred_region
          _
        $region44: #{lsa_forward.1} parent=11 // pred_fallthru
          _
      $region12: #{lsa_forward.1} parent=5 // pred_fallthru
        _
      %p385 = scmp.lt.s32.totalorder %s22, 2
      // Predicated region
      $region45: #{lsa_forward.1} parent=5 // pred_check
        %p386 = pneg %p385
      $region46: #{lsa_forward.1} parent=5 // pred_check_branch
        %388 = sbr.rel (%p386) target = $region48
      $region47: #{lsa_forward.1} parent=5 // pred_region
        // Predicated region
        $region49: #{lsa_forward.1} parent=47 // pred_check
          %p389 = pneg %p42
        $region50: #{lsa_forward.1} parent=47 // pred_check_branch
          %391 = sbr.rel (%p389) target = $region52
        $region51: #{lsa_forward.1} parent=47 // pred_region
          %p392 = scmp.lt.s32.totalorder %s22, 1
          %s393 = scalar_select %p392, %s22, 1
          %s394 = smul.addr %s393, 8
          %s395 = scalar_lea.vmem %s0, %s394
        $region52: #{lsa_forward.1} parent=47 // pred_fallthru
          _
        // Predicated region
        $region53: #{lsa_forward.1} parent=47 // pred_check
          %p396 = pneg %p68
        $region54: #{lsa_forward.1} parent=47 // pred_check_branch
          %398 = sbr.rel (%p396) target = $region56
        $region55: #{lsa_forward.1} parent=47 // pred_region
          %p399 = scmp.lt.s32.totalorder %s22, 1
          %s400 = scalar_select %p399, %s22, 1
          %s401 = smul.addr %s400, 4
          %s402 = scalar_lea.vmem %s1, %s401
        $region56: #{lsa_forward.1} parent=47 // pred_fallthru
          _
        // Predicated region
        $region57: #{lsa_forward.1} parent=47 // pred_check
          %p403 = pneg %p94
        $region58: #{lsa_forward.1} parent=47 // pred_check_branch
          %405 = sbr.rel (%p403) target = $region60
        $region59: #{lsa_forward.1} parent=47 // pred_region
          %p406 = scmp.lt.s32.totalorder %s22, 1
          %s407 = scalar_select %p406, %s22, 1
          %s408 = smul.addr %s407, 4
          %s409 = scalar_lea.vmem %s2, %s408
        $region60: #{lsa_forward.1} parent=47 // pred_fallthru
          _
        // Predicated region
        $region61: #{lsa_forward.1} parent=47 // pred_check
          %p410 = pneg %p120
        $region62: #{lsa_forward.1} parent=47 // pred_check_branch
          %412 = sbr.rel (%p410) target = $region64
        $region63: #{lsa_forward.1} parent=47 // pred_region
          %p413 = scmp.lt.s32.totalorder %s22, 1
          %s414 = scalar_select %p413, %s22, 1
          %s415 = smul.addr %s414, 4
          %s416 = scalar_lea.vmem %s3, %s415
        $region64: #{lsa_forward.1} parent=47 // pred_fallthru
          _
        // Predicated region
        $region65: #{lsa_forward.1} parent=47 // pred_check
          %p417 = pneg %p146
        $region66: #{lsa_forward.1} parent=47 // pred_check_branch
          %419 = sbr.rel (%p417) target = $region68
        $region67: #{lsa_forward.1} parent=47 // pred_region
          %p420 = scmp.lt.s32.totalorder %s22, 1
          %s421 = scalar_select %p420, %s22, 1
          %s422 = smul.addr %s421, 4
          %s423 = scalar_lea.vmem %s4, %s422
        $region68: #{lsa_forward.1} parent=47 // pred_fallthru
          _
      $region48: #{lsa_forward.1} parent=5 // pred_fallthru
        _
      %p424 = scmp.le.s32.totalorder 1, %s22
      %p425 = scmp.lt.s32.totalorder %s22, 3
      %p426 = pnand %p424, %p425
      %p427 = pneg %p426
      // Predicated region
      $region69: #{lsa_forward.1} parent=5 // pred_check
        _
      $region70: #{lsa_forward.1} parent=5 // pred_check_branch
        %429 = sbr.rel (%p426) target = $region72
      $region71: #{lsa_forward.1} parent=5 // pred_region
        %s430 = ssub.s32 %s22, 1
        %p431 = scmp.lt.s32.totalorder %s27, 1
        %s432 = scalar_select %p431, %s27, 1
        %s433 = smul.addr %s432, 8
        %s434 = scalar_lea.vmem %s0, %s433
        %p435 = pneg %p48
        %p436 = pneg %p45
        %p437 = scmp.lt.s32.totalorder %s27, 1
        %s438 = scalar_select %p437, %s27, 1
        %s439 = smul.addr %s438, 4
        %s440 = scalar_lea.vmem %s1, %s439
        %p441 = pneg %p74
        %p442 = pneg %p71
        %p443 = scmp.lt.s32.totalorder %s27, 1
        %s444 = scalar_select %p443, %s27, 1
        %s445 = smul.addr %s444, 4
        %s446 = scalar_lea.vmem %s2, %s445
        %p447 = pneg %p100
        %p448 = pneg %p97
        %p449 = scmp.lt.s32.totalorder %s27, 1
        %s450 = scalar_select %p449, %s27, 1
        %s451 = smul.addr %s450, 4
        %s452 = scalar_lea.vmem %s3, %s451
        %p453 = pneg %p126
        %p454 = pneg %p123
        %p455 = scmp.lt.s32.totalorder %s27, 1
        %s456 = scalar_select %p455, %s27, 1
        %s457 = smul.addr %s456, 4
        %s458 = scalar_lea.vmem %s4, %s457
        %p459 = pneg %p152
        %p460 = pneg %p149
        %p461 = pneg %p173
        %p462 = pneg %p170
        %p463 = pneg %p194
        %p464 = pneg %p191
        %p465 = pneg %p215
        %p466 = pneg %p212
        %p467 = pneg %p236
        %p468 = pneg %p233
        %p469 = pneg %p257
        %p470 = pneg %p254
        %p471 = pneg %p278
        %p472 = pneg %p275
        %p473 = pneg %p299
        %p474 = pneg %p296
        %p475 = pneg %p320
        %p476 = pneg %p317
        %p477 = pneg %p346
        %p478 = pneg %p343
        %s479 = sand.u32 %s333, 1
        %s480 = scalar_lea.sflag [#allocation3], %s479
        %s481 = sand.u32 %s333, 1
        %s482 = smul.addr %s481, 8
        %s483 = scalar_lea.vmem [#allocation2], %s482
        %p484 = scmp.lt.s32.totalorder %s27, 1
        %s485 = scalar_select %p484, %s27, 1
        %s486 = smul.addr %s485, 8
        %s487 = scalar_lea.vmem %s0, %s486
        %p488 = scmp.lt.s32.totalorder %s27, 1
        %s489 = scalar_select %p488, %s27, 1
        %s490 = smul.addr %s489, 4
        %s491 = scalar_lea.vmem %s1, %s490
        %p492 = scmp.lt.s32.totalorder %s27, 1
        %s493 = scalar_select %p492, %s27, 1
        %s494 = smul.addr %s493, 4
        %s495 = scalar_lea.vmem %s2, %s494
        %p496 = scmp.lt.s32.totalorder %s27, 1
        %s497 = scalar_select %p496, %s27, 1
        %s498 = smul.addr %s497, 4
        %s499 = scalar_lea.vmem %s3, %s498
        %p500 = scmp.lt.s32.totalorder %s27, 1
        %s501 = scalar_select %p500, %s27, 1
        %s502 = smul.addr %s501, 4
        %s503 = scalar_lea.vmem %s4, %s502
        %v505 = vld [vmem:[%s487] sm:$0xff]
        %v506 = vpack.c.bf16 %v505, %v505
        %v507 = vld [vmem:[%s491] sm:$0xf]
        %v508 = vmul.bf16 %v506, %v507
        %v509 = vld [vmem:[%s495] sm:$0xf]
        %v510 = vmul.bf16 %v506, %v509
        %v511 = vld [vmem:[%s499] sm:$0xf]
        %v512 = vmul.bf16 %v508, %v511
        %v513 = vld [vmem:[%s503] sm:$0xf]
        %v514 = vmul.bf16 %v508, %v513
        %v515 = vld [vmem:[%s5] sm:$0xf]
        %v516 = vld [vmem:[%s5 + $0x4] sm:$0xf]
        %v517 = vld [vmem:[%s5 + $0x8] sm:$0xf]
        %v518 = vld [vmem:[%s5 + $0xc] sm:$0xf]
        %v519 = vld [vmem:[%s6] sm:$0x1]
        %v521 = vlaneseq
        %v522 = vshrl.u32 %v521, 7
        %v523 = vsub.s32 0, %v522
        %v524 = vrot.slane %v519, %v523
        %v530 = vunpack.c.l.b16 %v515
        %v531 = vunpack.c.l.b16 %v516
        %v532 = vunpack.c.l.b16 %v517
        %v533 = vunpack.c.l.b16 %v518
        %v534 = vpack.c.b16 %v531, %v530
        %v535 = vpack.c.b16 %v533, %v532
        %vm538 = vcmask 261120
        %v540 = vsel %vm538, %v510, 0
        %542 = vmatprep.subr.bf16.mxu0 0
        %543 = vmatpush1.bf16.msra.mxu0 %v534
        %544 = vmatprep.subr.bf16.mxu0 0
        %545 = vmatpush1.bf16.msra.mxu0 %v535
        %546 = vmatprep.subr.bf16.mxu0 0
        %547 = vmatpush1.bf16.msra.mxu0 0
        %548 = vmatprep.subr.bf16.mxu0 0
        %549 = vmatpush1.bf16.msra.mxu0 0
        %550 = vmatprep.subr.bf16.mxu0 0
        %551 = vmatpush1.bf16.msra.mxu0 0
        %552 = vmatprep.subr.bf16.mxu0 0
        %553 = vmatpush1.bf16.msra.mxu0 0
        %554 = vmatprep.subr.bf16.mxu0 0
        %555 = vmatpush1.bf16.msra.mxu0 0
        %556 = vmatprep.subr.bf16.mxu0 0
        %557 = vmatpush1.bf16.msra.mxu0 0
        %558 = vmatprep.subr.bf16.mxu0 0
        %559 = vmatpush1.bf16.msra.mxu0 0
        %560 = vmatprep.subr.bf16.mxu0 0
        %561 = vmatpush1.bf16.msra.mxu0 0
        %562 = vmatprep.subr.bf16.mxu0 0
        %563 = vmatpush1.bf16.msra.mxu0 0
        %564 = vmatprep.subr.bf16.mxu0 0
        %565 = vmatpush1.bf16.msra.mxu0 0
        %566 = vmatprep.subr.bf16.mxu0 0
        %567 = vmatpush1.bf16.msra.mxu0 0
        %568 = vmatprep.subr.bf16.mxu0 0
        %569 = vmatpush1.bf16.msra.mxu0 0
        %570 = vmatprep.subr.bf16.mxu0 0
        %571 = vmatpush1.bf16.msra.mxu0 0
        %572 = vmatprep.subr.bf16.mxu0 0
        %573 = vmatpush1.bf16.msra.mxu0 0
        %574 = vmatprep.mubr.bf16.mxu0 0
        %575 = vmatmul.mubr.bf16.gmra.mrb[0].mxu0 %v540
        %v576 = vpop.f32.mrb[0].mxu0
        %v577 = vadd.f32 %v524, %v576
        %v578 = vpop.f32.mrb[0].mxu0
        %v579 = vpop.f32.mrb[0].mxu0
        %v580 = vpop.f32.mrb[0].mxu0
        %581 = vdwg.mxu0
        %v582 = vpack.c.bf16 %v577, %v577
        %584 = vrot.lane.b32.xlu0 %v582, 96
        %v585 = vpop.permute.xlu0 %584
        %vm586 = vcmask 64512
        %v588 = vsel %vm586, %v582, 0
        %v591 = vsel %vm586, %v585, 0
        %593 = vmatprep.subr.bf16.mxu0 0
        %594 = vmatpush1.bf16.xpose.msra.mxu0 %v591
        %595 = vmatprep.subr.bf16.mxu0 0
        %596 = vmatpush1.bf16.xpose.msra.mxu0 0
        %597 = vmatprep.subr.bf16.mxu0 0
        %598 = vmatpush1.bf16.xpose.msra.mxu0 0
        %599 = vmatprep.subr.bf16.mxu0 0
        %600 = vmatpush1.bf16.xpose.msra.mxu0 0
        %601 = vmatprep.subr.bf16.mxu0 0
        %602 = vmatpush1.bf16.xpose.msra.mxu0 0
        %603 = vmatprep.subr.bf16.mxu0 0
        %604 = vmatpush1.bf16.xpose.msra.mxu0 0
        %605 = vmatprep.subr.bf16.mxu0 0
        %606 = vmatpush1.bf16.xpose.msra.mxu0 0
        %607 = vmatprep.subr.bf16.mxu0 0
        %608 = vmatpush1.bf16.xpose.msra.mxu0 0
        %609 = vmatprep.subr.bf16.mxu0 0
        %610 = vmatpush1.bf16.xpose.msra.mxu0 0
        %611 = vmatprep.subr.bf16.mxu0 0
        %612 = vmatpush1.bf16.xpose.msra.mxu0 0
        %613 = vmatprep.subr.bf16.mxu0 0
        %614 = vmatpush1.bf16.xpose.msra.mxu0 0
        %615 = vmatprep.subr.bf16.mxu0 0
        %616 = vmatpush1.bf16.xpose.msra.mxu0 0
        %617 = vmatprep.subr.bf16.mxu0 0
        %618 = vmatpush1.bf16.xpose.msra.mxu0 0
        %619 = vmatprep.subr.bf16.mxu0 0
        %620 = vmatpush1.bf16.xpose.msra.mxu0 0
        %621 = vmatprep.subr.bf16.mxu0 0
        %622 = vmatpush1.bf16.xpose.msra.mxu0 0
        %623 = vmatprep.subr.bf16.mxu0 0
        %624 = vmatpush1.bf16.xpose.msra.mxu0 0
        %625 = vmatprep.mubr.bf16.mxu0 0
        %626 = vmatmul.mubr.bf16.gmra.mrb[0].mxu0 %v588
        %v627 = vpop.f32.mrb[0].mxu0
        %v628 = vadd.f32 0.0, %v627
        %v629 = vpop.f32.mrb[0].mxu0
        %v630 = vpop.f32.mrb[0].mxu0
        %v631 = vpop.f32.mrb[0].mxu0
        %632 = vdwg.mxu0
        %v633 = vsel %vm586, %v628, -inf
        %634 = vmax.xlane.f32.xlu0 %v633
        %v635 = vpop.xlane.xlu0 %634
        %v636 = vsub.f32 %v628, %v635
        %v637 = vmul.f32 %v636, 1.442695
        %v638 = vpow.pop %v637
        %v639 = vsel %vm586, %v638, 0.0
        %640 = vadd.xlane.f32.xlu0 %v639
        %v641 = vpop.xlane.xlu0 %640
        %v642 = vrcp.pop %v641
        %v643 = vmul.f32 %v638, %v642
        %v644 = vpack.c.bf16 %v643, %v643
        %645 = vrot.lane.b32.xlu0 %v582, 64
        %v646 = vpop.permute.xlu0 %645
        %v648 = vsel %vm586, %v644, 0
        %vm650 = vcmask 1043456
        %v652 = vsel %vm650, %v646, 0
        %654 = vmatprep.subr.bf16.mxu0 0
        %655 = vmatpush1.bf16.msra.mxu0 %v652
        %656 = vmatprep.subr.bf16.mxu0 0
        %657 = vmatpush1.bf16.msra.mxu0 0
        %658 = vmatprep.subr.bf16.mxu0 0
        %659 = vmatpush1.bf16.msra.mxu0 0
        %660 = vmatprep.subr.bf16.mxu0 0
        %661 = vmatpush1.bf16.msra.mxu0 0
        %662 = vmatprep.subr.bf16.mxu0 0
        %663 = vmatpush1.bf16.msra.mxu0 0
        %664 = vmatprep.subr.bf16.mxu0 0
        %665 = vmatpush1.bf16.msra.mxu0 0
        %666 = vmatprep.subr.bf16.mxu0 0
        %667 = vmatpush1.bf16.msra.mxu0 0
        %668 = vmatprep.subr.bf16.mxu0 0
        %669 = vmatpush1.bf16.msra.mxu0 0
        %670 = vmatprep.subr.bf16.mxu0 0
        %671 = vmatpush1.bf16.msra.mxu0 0
        %672 = vmatprep.subr.bf16.mxu0 0
        %673 = vmatpush1.bf16.msra.mxu0 0
        %674 = vmatprep.subr.bf16.mxu0 0
        %675 = vmatpush1.bf16.msra.mxu0 0
        %676 = vmatprep.subr.bf16.mxu0 0
        %677 = vmatpush1.bf16.msra.mxu0 0
        %678 = vmatprep.subr.bf16.mxu0 0
        %679 = vmatpush1.bf16.msra.mxu0 0
        %680 = vmatprep.subr.bf16.mxu0 0
        %681 = vmatpush1.bf16.msra.mxu0 0
        %682 = vmatprep.subr.bf16.mxu0 0
        %683 = vmatpush1.bf16.msra.mxu0 0
        %684 = vmatprep.subr.bf16.mxu0 0
        %685 = vmatpush1.bf16.msra.mxu0 0
        %686 = vmatprep.mubr.bf16.mxu0 0
        %687 = vmatmul.mubr.bf16.gmra.mrb[0].mxu0 %v648
        %v688 = vpop.f32.mrb[0].mxu0
        %v689 = vadd.f32 0.0, %v688
        %v690 = vpop.f32.mrb[0].mxu0
        %v691 = vpop.f32.mrb[0].mxu0
        %v692 = vpop.f32.mrb[0].mxu0
        %693 = vdwg.mxu0
        %694 = vrot.lane.b32.xlu0 %v582, 120
        %v695 = vpop.permute.xlu0 %694
        %696 = vrot.lane.b32.xlu0 %v582, 88
        %v697 = vpop.permute.xlu0 %696
        %v699 = vsel %vm586, %v695, 0
        %v702 = vsel %vm586, %v697, 0
        %704 = vmatprep.subr.bf16.mxu0 0
        %705 = vmatpush1.bf16.xpose.msra.mxu0 %v702
        %706 = vmatprep.subr.bf16.mxu0 0
        %707 = vmatpush1.bf16.xpose.msra.mxu0 0
        %708 = vmatprep.subr.bf16.mxu0 0
        %709 = vmatpush1.bf16.xpose.msra.mxu0 0
        %710 = vmatprep.subr.bf16.mxu0 0
        %711 = vmatpush1.bf16.xpose.msra.mxu0 0
        %712 = vmatprep.subr.bf16.mxu0 0
        %713 = vmatpush1.bf16.xpose.msra.mxu0 0
        %714 = vmatprep.subr.bf16.mxu0 0
        %715 = vmatpush1.bf16.xpose.msra.mxu0 0
        %716 = vmatprep.subr.bf16.mxu0 0
        %717 = vmatpush1.bf16.xpose.msra.mxu0 0
        %718 = vmatprep.subr.bf16.mxu0 0
        %719 = vmatpush1.bf16.xpose.msra.mxu0 0
        %720 = vmatprep.subr.bf16.mxu0 0
        %721 = vmatpush1.bf16.xpose.msra.mxu0 0
        %722 = vmatprep.subr.bf16.mxu0 0
        %723 = vmatpush1.bf16.xpose.msra.mxu0 0
        %724 = vmatprep.subr.bf16.mxu0 0
        %725 = vmatpush1.bf16.xpose.msra.mxu0 0
        %726 = vmatprep.subr.bf16.mxu0 0
        %727 = vmatpush1.bf16.xpose.msra.mxu0 0
        %728 = vmatprep.subr.bf16.mxu0 0
        %729 = vmatpush1.bf16.xpose.msra.mxu0 0
        %730 = vmatprep.subr.bf16.mxu0 0
        %731 = vmatpush1.bf16.xpose.msra.mxu0 0
        %732 = vmatprep.subr.bf16.mxu0 0
        %733 = vmatpush1.bf16.xpose.msra.mxu0 0
        %734 = vmatprep.subr.bf16.mxu0 0
        %735 = vmatpush1.bf16.xpose.msra.mxu0 0
        %736 = vmatprep.mubr.bf16.mxu0 0
        %737 = vmatmul.mubr.bf16.gmra.mrb[0].mxu0 %v699
        %v738 = vpop.f32.mrb[0].mxu0
        %v739 = vadd.f32 0.0, %v738
        %v740 = vpop.f32.mrb[0].mxu0
        %v741 = vpop.f32.mrb[0].mxu0
        %v742 = vpop.f32.mrb[0].mxu0
        %743 = vdwg.mxu0
        %v744 = vsel %vm586, %v739, -inf
        %745 = vmax.xlane.f32.xlu0 %v744
        %v746 = vpop.xlane.xlu0 %745
        %v747 = vsub.f32 %v739, %v746
        %v748 = vmul.f32 %v747, 1.442695
        %v749 = vpow.pop %v748
        %v750 = vsel %vm586, %v749, 0.0
        %751 = vadd.xlane.f32.xlu0 %v750
        %v752 = vpop.xlane.xlu0 %751
        %v753 = vrcp.pop %v752
        %v754 = vmul.f32 %v749, %v753
        %v755 = vpack.c.bf16 %v754, %v754
        %756 = vrot.lane.b32.xlu0 %v582, 56
        %v757 = vpop.permute.xlu0 %756
        %v759 = vsel %vm586, %v755, 0
        %v762 = vsel %vm650, %v757, 0
        %764 = vmatprep.subr.bf16.mxu0 0
        %765 = vmatpush1.bf16.msra.mxu0 %v762
        %766 = vmatprep.subr.bf16.mxu0 0
        %767 = vmatpush1.bf16.msra.mxu0 0
        %768 = vmatprep.subr.bf16.mxu0 0
        %769 = vmatpush1.bf16.msra.mxu0 0
        %770 = vmatprep.subr.bf16.mxu0 0
        %771 = vmatpush1.bf16.msra.mxu0 0
        %772 = vmatprep.subr.bf16.mxu0 0
        %773 = vmatpush1.bf16.msra.mxu0 0
        %774 = vmatprep.subr.bf16.mxu0 0
        %775 = vmatpush1.bf16.msra.mxu0 0
        %776 = vmatprep.subr.bf16.mxu0 0
        %777 = vmatpush1.bf16.msra.mxu0 0
        %778 = vmatprep.subr.bf16.mxu0 0
        %779 = vmatpush1.bf16.msra.mxu0 0
        %780 = vmatprep.subr.bf16.mxu0 0
        %781 = vmatpush1.bf16.msra.mxu0 0
        %782 = vmatprep.subr.bf16.mxu0 0
        %783 = vmatpush1.bf16.msra.mxu0 0
        %784 = vmatprep.subr.bf16.mxu0 0
        %785 = vmatpush1.bf16.msra.mxu0 0
        %786 = vmatprep.subr.bf16.mxu0 0
        %787 = vmatpush1.bf16.msra.mxu0 0
        %788 = vmatprep.subr.bf16.mxu0 0
        %789 = vmatpush1.bf16.msra.mxu0 0
        %790 = vmatprep.subr.bf16.mxu0 0
        %791 = vmatpush1.bf16.msra.mxu0 0
        %792 = vmatprep.subr.bf16.mxu0 0
        %793 = vmatpush1.bf16.msra.mxu0 0
        %794 = vmatprep.subr.bf16.mxu0 0
        %795 = vmatpush1.bf16.msra.mxu0 0
        %796 = vmatprep.mubr.bf16.mxu0 0
        %797 = vmatmul.mubr.bf16.gmra.mrb[0].mxu0 %v759
        %v798 = vpop.f32.mrb[0].mxu0
        %v799 = vadd.f32 0.0, %v798
        %v800 = vpop.f32.mrb[0].mxu0
        %v801 = vpop.f32.mrb[0].mxu0
        %v802 = vpop.f32.mrb[0].mxu0
        %803 = vdwg.mxu0
        %804 = vrot.lane.b32.xlu0 %v582, 112
        %v805 = vpop.permute.xlu0 %804
        %806 = vrot.lane.b32.xlu0 %v582, 80
        %v807 = vpop.permute.xlu0 %806
        %v809 = vsel %vm586, %v805, 0
        %v812 = vsel %vm586, %v807, 0
        %814 = vmatprep.subr.bf16.mxu0 0
        %815 = vmatpush1.bf16.xpose.msra.mxu0 %v812
        %816 = vmatprep.subr.bf16.mxu0 0
        %817 = vmatpush1.bf16.xpose.msra.mxu0 0
        %818 = vmatprep.subr.bf16.mxu0 0
        %819 = vmatpush1.bf16.xpose.msra.mxu0 0
        %820 = vmatprep.subr.bf16.mxu0 0
        %821 = vmatpush1.bf16.xpose.msra.mxu0 0
        %822 = vmatprep.subr.bf16.mxu0 0
        %823 = vmatpush1.bf16.xpose.msra.mxu0 0
        %824 = vmatprep.subr.bf16.mxu0 0
        %825 = vmatpush1.bf16.xpose.msra.mxu0 0
        %826 = vmatprep.subr.bf16.mxu0 0
        %827 = vmatpush1.bf16.xpose.msra.mxu0 0
        %828 = vmatprep.subr.bf16.mxu0 0
        %829 = vmatpush1.bf16.xpose.msra.mxu0 0
        %830 = vmatprep.subr.bf16.mxu0 0
        %831 = vmatpush1.bf16.xpose.msra.mxu0 0
        %832 = vmatprep.subr.bf16.mxu0 0
        %833 = vmatpush1.bf16.xpose.msra.mxu0 0
        %834 = vmatprep.subr.bf16.mxu0 0
        %835 = vmatpush1.bf16.xpose.msra.mxu0 0
        %836 = vmatprep.subr.bf16.mxu0 0
        %837 = vmatpush1.bf16.xpose.msra.mxu0 0
        %838 = vmatprep.subr.bf16.mxu0 0
        %839 = vmatpush1.bf16.xpose.msra.mxu0 0
        %840 = vmatprep.subr.bf16.mxu0 0
        %841 = vmatpush1.bf16.xpose.msra.mxu0 0
        %842 = vmatprep.subr.bf16.mxu0 0
        %843 = vmatpush1.bf16.xpose.msra.mxu0 0
        %844 = vmatprep.subr.bf16.mxu0 0
        %845 = vmatpush1.bf16.xpose.msra.mxu0 0
        %846 = vmatprep.mubr.bf16.mxu0 0
        %847 = vmatmul.mubr.bf16.gmra.mrb[0].mxu0 %v809
        %v848 = vpop.f32.mrb[0].mxu0
        %v849 = vadd.f32 0.0, %v848
        %v850 = vpop.f32.mrb[0].mxu0
        %v851 = vpop.f32.mrb[0].mxu0
        %v852 = vpop.f32.mrb[0].mxu0
        %853 = vdwg.mxu0
        %v854 = vsel %vm586, %v849, -inf
        %855 = vmax.xlane.f32.xlu0 %v854
        %v856 = vpop.xlane.xlu0 %855
        %v857 = vsub.f32 %v849, %v856
        %v858 = vmul.f32 %v857, 1.442695
        %v859 = vpow.pop %v858
        %v860 = vsel %vm586, %v859, 0.0
        %861 = vadd.xlane.f32.xlu0 %v860
        %v862 = vpop.xlane.xlu0 %861
        %v863 = vrcp.pop %v862
        %v864 = vmul.f32 %v859, %v863
        %v865 = vpack.c.bf16 %v864, %v864
        %866 = vrot.lane.b32.xlu0 %v582, 48
        %v867 = vpop.permute.xlu0 %866
        %v869 = vsel %vm586, %v865, 0
        %v872 = vsel %vm650, %v867, 0
        %874 = vmatprep.subr.bf16.mxu0 0
        %875 = vmatpush1.bf16.msra.mxu0 %v872
        %876 = vmatprep.subr.bf16.mxu0 0
        %877 = vmatpush1.bf16.msra.mxu0 0
        %878 = vmatprep.subr.bf16.mxu0 0
        %879 = vmatpush1.bf16.msra.mxu0 0
        %880 = vmatprep.subr.bf16.mxu0 0
        %881 = vmatpush1.bf16.msra.mxu0 0
        %882 = vmatprep.subr.bf16.mxu0 0
        %883 = vmatpush1.bf16.msra.mxu0 0
        %884 = vmatprep.subr.bf16.mxu0 0
        %885 = vmatpush1.bf16.msra.mxu0 0
        %886 = vmatprep.subr.bf16.mxu0 0
        %887 = vmatpush1.bf16.msra.mxu0 0
        %888 = vmatprep.subr.bf16.mxu0 0
        %889 = vmatpush1.bf16.msra.mxu0 0
        %890 = vmatprep.subr.bf16.mxu0 0
        %891 = vmatpush1.bf16.msra.mxu0 0
        %892 = vmatprep.subr.bf16.mxu0 0
        %893 = vmatpush1.bf16.msra.mxu0 0
        %894 = vmatprep.subr.bf16.mxu0 0
        %895 = vmatpush1.bf16.msra.mxu0 0
        %896 = vmatprep.subr.bf16.mxu0 0
        %897 = vmatpush1.bf16.msra.mxu0 0
        %898 = vmatprep.subr.bf16.mxu0 0
        %899 = vmatpush1.bf16.msra.mxu0 0
        %900 = vmatprep.subr.bf16.mxu0 0
        %901 = vmatpush1.bf16.msra.mxu0 0
        %902 = vmatprep.subr.bf16.mxu0 0
        %903 = vmatpush1.bf16.msra.mxu0 0
        %904 = vmatprep.subr.bf16.mxu0 0
        %905 = vmatpush1.bf16.msra.mxu0 0
        %906 = vmatprep.mubr.bf16.mxu0 0
        %907 = vmatmul.mubr.bf16.gmra.mrb[0].mxu0 %v869
        %v908 = vpop.f32.mrb[0].mxu0
        %v909 = vadd.f32 0.0, %v908
        %v910 = vpop.f32.mrb[0].mxu0
        %v911 = vpop.f32.mrb[0].mxu0
        %v912 = vpop.f32.mrb[0].mxu0
        %913 = vdwg.mxu0
        %914 = vrot.lane.b32.xlu0 %v582, 104
        %v915 = vpop.permute.xlu0 %914
        %916 = vrot.lane.b32.xlu0 %v582, 72
        %v917 = vpop.permute.xlu0 %916
        %v919 = vsel %vm586, %v915, 0
        %v922 = vsel %vm586, %v917, 0
        %924 = vmatprep.subr.bf16.mxu0 0
        %925 = vmatpush1.bf16.xpose.msra.mxu0 %v922
        %926 = vmatprep.subr.bf16.mxu0 0
        %927 = vmatpush1.bf16.xpose.msra.mxu0 0
        %928 = vmatprep.subr.bf16.mxu0 0
        %929 = vmatpush1.bf16.xpose.msra.mxu0 0
        %930 = vmatprep.subr.bf16.mxu0 0
        %931 = vmatpush1.bf16.xpose.msra.mxu0 0
        %932 = vmatprep.subr.bf16.mxu0 0
        %933 = vmatpush1.bf16.xpose.msra.mxu0 0
        %934 = vmatprep.subr.bf16.mxu0 0
        %935 = vmatpush1.bf16.xpose.msra.mxu0 0
        %936 = vmatprep.subr.bf16.mxu0 0
        %937 = vmatpush1.bf16.xpose.msra.mxu0 0
        %938 = vmatprep.subr.bf16.mxu0 0
        %939 = vmatpush1.bf16.xpose.msra.mxu0 0
        %940 = vmatprep.subr.bf16.mxu0 0
        %941 = vmatpush1.bf16.xpose.msra.mxu0 0
        %942 = vmatprep.subr.bf16.mxu0 0
        %943 = vmatpush1.bf16.xpose.msra.mxu0 0
        %944 = vmatprep.subr.bf16.mxu0 0
        %945 = vmatpush1.bf16.xpose.msra.mxu0 0
        %946 = vmatprep.subr.bf16.mxu0 0
        %947 = vmatpush1.bf16.xpose.msra.mxu0 0
        %948 = vmatprep.subr.bf16.mxu0 0
        %949 = vmatpush1.bf16.xpose.msra.mxu0 0
        %950 = vmatprep.subr.bf16.mxu0 0
        %951 = vmatpush1.bf16.xpose.msra.mxu0 0
        %952 = vmatprep.subr.bf16.mxu0 0
        %953 = vmatpush1.bf16.xpose.msra.mxu0 0
        %954 = vmatprep.subr.bf16.mxu0 0
        %955 = vmatpush1.bf16.xpose.msra.mxu0 0
        %956 = vmatprep.mubr.bf16.mxu0 0
        %957 = vmatmul.mubr.bf16.gmra.mrb[0].mxu0 %v919
        %v958 = vpop.f32.mrb[0].mxu0
        %v959 = vadd.f32 0.0, %v958
        %v960 = vpop.f32.mrb[0].mxu0
        %v961 = vpop.f32.mrb[0].mxu0
        %v962 = vpop.f32.mrb[0].mxu0
        %963 = vdwg.mxu0
        %v964 = vsel %vm586, %v959, -inf
        %965 = vmax.xlane.f32.xlu0 %v964
        %v966 = vpop.xlane.xlu0 %965
        %v967 = vsub.f32 %v959, %v966
        %v968 = vmul.f32 %v967, 1.442695
        %v969 = vpow.pop %v968
        %v970 = vsel %vm586, %v969, 0.0
        %971 = vadd.xlane.f32.xlu0 %v970
        %v972 = vpop.xlane.xlu0 %971
        %v973 = vrcp.pop %v972
        %v974 = vmul.f32 %v969, %v973
        %v975 = vpack.c.bf16 %v974, %v974
        %976 = vrot.lane.b32.xlu0 %v582, 40
        %v977 = vpop.permute.xlu0 %976
        %v979 = vsel %vm586, %v975, 0
        %v982 = vsel %vm650, %v977, 0
        %984 = vmatprep.subr.bf16.mxu0 0
        %985 = vmatpush1.bf16.msra.mxu0 %v982
        %986 = vmatprep.subr.bf16.mxu0 0
        %987 = vmatpush1.bf16.msra.mxu0 0
        %988 = vmatprep.subr.bf16.mxu0 0
        %989 = vmatpush1.bf16.msra.mxu0 0
        %990 = vmatprep.subr.bf16.mxu0 0
        %991 = vmatpush1.bf16.msra.mxu0 0
        %992 = vmatprep.subr.bf16.mxu0 0
        %993 = vmatpush1.bf16.msra.mxu0 0
        %994 = vmatprep.subr.bf16.mxu0 0
        %995 = vmatpush1.bf16.msra.mxu0 0
        %996 = vmatprep.subr.bf16.mxu0 0
        %997 = vmatpush1.bf16.msra.mxu0 0
        %998 = vmatprep.subr.bf16.mxu0 0
        %999 = vmatpush1.bf16.msra.mxu0 0
        %1000 = vmatprep.subr.bf16.mxu0 0
        %1001 = vmatpush1.bf16.msra.mxu0 0
        %1002 = vmatprep.subr.bf16.mxu0 0
        %1003 = vmatpush1.bf16.msra.mxu0 0
        %1004 = vmatprep.subr.bf16.mxu0 0
        %1005 = vmatpush1.bf16.msra.mxu0 0
        %1006 = vmatprep.subr.bf16.mxu0 0
        %1007 = vmatpush1.bf16.msra.mxu0 0
        %1008 = vmatprep.subr.bf16.mxu0 0
        %1009 = vmatpush1.bf16.msra.mxu0 0
        %1010 = vmatprep.subr.bf16.mxu0 0
        %1011 = vmatpush1.bf16.msra.mxu0 0
        %1012 = vmatprep.subr.bf16.mxu0 0
        %1013 = vmatpush1.bf16.msra.mxu0 0
        %1014 = vmatprep.subr.bf16.mxu0 0
        %1015 = vmatpush1.bf16.msra.mxu0 0
        %1016 = vmatprep.mubr.bf16.mxu0 0
        %1017 = vmatmul.mubr.bf16.gmra.mrb[0].mxu0 %v979
        %v1018 = vpop.f32.mrb[0].mxu0
        %v1019 = vadd.f32 0.0, %v1018
        %v1020 = vpop.f32.mrb[0].mxu0
        %v1021 = vpop.f32.mrb[0].mxu0
        %v1022 = vpop.f32.mrb[0].mxu0
        %1023 = vdwg.mxu0
        %1025 = vrot.lane.b32.xlu0 %v799, 8
        %v1026 = vpop.permute.xlu0 %1025
        %1029 = vrot.lane.b32.xlu0 %v909, 16
        %v1030 = vpop.permute.xlu0 %1029
        %1033 = vrot.lane.b32.xlu0 %v1019, 24
        %v1034 = vpop.permute.xlu0 %1033
        %v1036 = vsel %vm586, %v689, %v1026
        %vm1037 = vcmask 130048
        %v1038 = vsel %vm1037, %v1036, %v1030
        %vm1039 = vcmask 195584
        %v1040 = vsel %vm1039, %v1038, %v1034
        %v1041 = vtanh.pop %v1040
        %v1042 = vpack.c.bf16 %v1041, %v1041
        %v1043 = vld [vmem:[%s7] sm:$0xf]
        %v1044 = vld [vmem:[%s7 + $0x4] sm:$0xf]
        %v1045 = vld [vmem:[%s7 + $0x8] sm:$0xf]
        %v1046 = vld [vmem:[%s7 + $0xc] sm:$0xf]
        %v1047 = vld [vmem:[%s8] sm:$0x1]
        %v1049 = vlaneseq
        %v1050 = vshrl.u32 %v1049, 7
        %v1051 = vsub.s32 0, %v1050
        %v1052 = vrot.slane %v1047, %v1051
        %v1058 = vunpack.c.l.b16 %v1043
        %v1059 = vunpack.c.l.b16 %v1044
        %v1060 = vunpack.c.l.b16 %v1045
        %v1061 = vunpack.c.l.b16 %v1046
        %v1062 = vpack.c.b16 %v1059, %v1058
        %v1063 = vpack.c.b16 %v1061, %v1060
        %v1067 = vsel %vm538, %v512, 0
        %1069 = vmatprep.subr.bf16.mxu0 0
        %1070 = vmatpush1.bf16.msra.mxu0 %v1062
        %1071 = vmatprep.subr.bf16.mxu0 0
        %1072 = vmatpush1.bf16.msra.mxu0 %v1063
        %1073 = vmatprep.subr.bf16.mxu0 0
        %1074 = vmatpush1.bf16.msra.mxu0 0
        %1075 = vmatprep.subr.bf16.mxu0 0
        %1076 = vmatpush1.bf16.msra.mxu0 0
        %1077 = vmatprep.subr.bf16.mxu0 0
        %1078 = vmatpush1.bf16.msra.mxu0 0
        %1079 = vmatprep.subr.bf16.mxu0 0
        %1080 = vmatpush1.bf16.msra.mxu0 0
        %1081 = vmatprep.subr.bf16.mxu0 0
        %1082 = vmatpush1.bf16.msra.mxu0 0
        %1083 = vmatprep.subr.bf16.mxu0 0
        %1084 = vmatpush1.bf16.msra.mxu0 0
        %1085 = vmatprep.subr.bf16.mxu0 0
        %1086 = vmatpush1.bf16.msra.mxu0 0
        %1087 = vmatprep.subr.bf16.mxu0 0
        %1088 = vmatpush1.bf16.msra.mxu0 0
        %1089 = vmatprep.subr.bf16.mxu0 0
        %1090 = vmatpush1.bf16.msra.mxu0 0
        %1091 = vmatprep.subr.bf16.mxu0 0
        %1092 = vmatpush1.bf16.msra.mxu0 0
        %1093 = vmatprep.subr.bf16.mxu0 0
        %1094 = vmatpush1.bf16.msra.mxu0 0
        %1095 = vmatprep.subr.bf16.mxu0 0
        %1096 = vmatpush1.bf16.msra.mxu0 0
        %1097 = vmatprep.subr.bf16.mxu0 0
        %1098 = vmatpush1.bf16.msra.mxu0 0
        %1099 = vmatprep.subr.bf16.mxu0 0
        %1100 = vmatpush1.bf16.msra.mxu0 0
        %1101 = vmatprep.mubr.bf16.mxu0 0
        %1102 = vmatmul.mubr.bf16.gmra.mrb[0].mxu0 %v1067
        %v1103 = vpop.f32.mrb[0].mxu0
        %v1104 = vadd.f32 %v1052, %v1103
        %v1105 = vpop.f32.mrb[0].mxu0
        %v1106 = vpop.f32.mrb[0].mxu0
        %v1107 = vpop.f32.mrb[0].mxu0
        %1108 = vdwg.mxu0
        %v1109 = vpack.c.bf16 %v1104, %v1104
        %1111 = vrot.lane.b32.xlu0 %v1109, 96
        %v1112 = vpop.permute.xlu0 %1111
        %v1114 = vsel %vm586, %v1109, 0
        %v1117 = vsel %vm586, %v1112, 0
        %1119 = vmatprep.subr.bf16.mxu0 0
        %1120 = vmatpush1.bf16.xpose.msra.mxu0 %v1117
        %1121 = vmatprep.subr.bf16.mxu0 0
        %1122 = vmatpush1.bf16.xpose.msra.mxu0 0
        %1123 = vmatprep.subr.bf16.mxu0 0
        %1124 = vmatpush1.bf16.xpose.msra.mxu0 0
        %1125 = vmatprep.subr.bf16.mxu0 0
        %1126 = vmatpush1.bf16.xpose.msra.mxu0 0
        %1127 = vmatprep.subr.bf16.mxu0 0
        %1128 = vmatpush1.bf16.xpose.msra.mxu0 0
        %1129 = vmatprep.subr.bf16.mxu0 0
        %1130 = vmatpush1.bf16.xpose.msra.mxu0 0
        %1131 = vmatprep.subr.bf16.mxu0 0
        %1132 = vmatpush1.bf16.xpose.msra.mxu0 0
        %1133 = vmatprep.subr.bf16.mxu0 0
        %1134 = vmatpush1.bf16.xpose.msra.mxu0 0
        %1135 = vmatprep.subr.bf16.mxu0 0
        %1136 = vmatpush1.bf16.xpose.msra.mxu0 0
        %1137 = vmatprep.subr.bf16.mxu0 0
        %1138 = vmatpush1.bf16.xpose.msra.mxu0 0
        %1139 = vmatprep.subr.bf16.mxu0 0
        %1140 = vmatpush1.bf16.xpose.msra.mxu0 0
        %1141 = vmatprep.subr.bf16.mxu0 0
        %1142 = vmatpush1.bf16.xpose.msra.mxu0 0
        %1143 = vmatprep.subr.bf16.mxu0 0
        %1144 = vmatpush1.bf16.xpose.msra.mxu0 0
        %1145 = vmatprep.subr.bf16.mxu0 0
        %1146 = vmatpush1.bf16.xpose.msra.mxu0 0
        %1147 = vmatprep.subr.bf16.mxu0 0
        %1148 = vmatpush1.bf16.xpose.msra.mxu0 0
        %1149 = vmatprep.subr.bf16.mxu0 0
        %1150 = vmatpush1.bf16.xpose.msra.mxu0 0
        %1151 = vmatprep.mubr.bf16.mxu0 0
        %1152 = vmatmul.mubr.bf16.gmra.mrb[0].mxu0 %v1114
        %v1153 = vpop.f32.mrb[0].mxu0
        %v1154 = vadd.f32 0.0, %v1153
        %v1155 = vpop.f32.mrb[0].mxu0
        %v1156 = vpop.f32.mrb[0].mxu0
        %v1157 = vpop.f32.mrb[0].mxu0
        %1158 = vdwg.mxu0
        %v1159 = vsel %vm586, %v1154, -inf
        %1160 = vmax.xlane.f32.xlu0 %v1159
        %v1161 = vpop.xlane.xlu0 %1160
        %v1162 = vsub.f32 %v1154, %v1161
        %v1163 = vmul.f32 %v1162, 1.442695
        %v1164 = vpow.pop %v1163
        %v1165 = vsel %vm586, %v1164, 0.0
        %1166 = vadd.xlane.f32.xlu0 %v1165
        %v1167 = vpop.xlane.xlu0 %1166
        %v1168 = vrcp.pop %v1167
        %v1169 = vmul.f32 %v1164, %v1168
        %v1170 = vpack.c.bf16 %v1169, %v1169
        %1171 = vrot.lane.b32.xlu0 %v1109, 64
        %v1172 = vpop.permute.xlu0 %1171
        %v1174 = vsel %vm586, %v1170, 0
        %v1177 = vsel %vm650, %v1172, 0
        %1179 = vmatprep.subr.bf16.mxu0 0
        %1180 = vmatpush1.bf16.msra.mxu0 %v1177
        %1181 = vmatprep.subr.bf16.mxu0 0
        %1182 = vmatpush1.bf16.msra.mxu0 0
        %1183 = vmatprep.subr.bf16.mxu0 0
        %1184 = vmatpush1.bf16.msra.mxu0 0
        %1185 = vmatprep.subr.bf16.mxu0 0
        %1186 = vmatpush1.bf16.msra.mxu0 0
        %1187 = vmatprep.subr.bf16.mxu0 0
        %1188 = vmatpush1.bf16.msra.mxu0 0
        %1189 = vmatprep.subr.bf16.mxu0 0
        %1190 = vmatpush1.bf16.msra.mxu0 0
        %1191 = vmatprep.subr.bf16.mxu0 0
        %1192 = vmatpush1.bf16.msra.mxu0 0
        %1193 = vmatprep.subr.bf16.mxu0 0
        %1194 = vmatpush1.bf16.msra.mxu0 0
        %1195 = vmatprep.subr.bf16.mxu0 0
        %1196 = vmatpush1.bf16.msra.mxu0 0
        %1197 = vmatprep.subr.bf16.mxu0 0
        %1198 = vmatpush1.bf16.msra.mxu0 0
        %1199 = vmatprep.subr.bf16.mxu0 0
        %1200 = vmatpush1.bf16.msra.mxu0 0
        %1201 = vmatprep.subr.bf16.mxu0 0
        %1202 = vmatpush1.bf16.msra.mxu0 0
        %1203 = vmatprep.subr.bf16.mxu0 0
        %1204 = vmatpush1.bf16.msra.mxu0 0
        %1205 = vmatprep.subr.bf16.mxu0 0
        %1206 = vmatpush1.bf16.msra.mxu0 0
        %1207 = vmatprep.subr.bf16.mxu0 0
        %1208 = vmatpush1.bf16.msra.mxu0 0
        %1209 = vmatprep.subr.bf16.mxu0 0
        %1210 = vmatpush1.bf16.msra.mxu0 0
        %1211 = vmatprep.mubr.bf16.mxu0 0
        %1212 = vmatmul.mubr.bf16.gmra.mrb[0].mxu0 %v1174
        %v1213 = vpop.f32.mrb[0].mxu0
        %v1214 = vadd.f32 0.0, %v1213
        %v1215 = vpop.f32.mrb[0].mxu0
        %v1216 = vpop.f32.mrb[0].mxu0
        %v1217 = vpop.f32.mrb[0].mxu0
        %1218 = vdwg.mxu0
        %1219 = vrot.lane.b32.xlu0 %v1109, 120
        %v1220 = vpop.permute.xlu0 %1219
        %1221 = vrot.lane.b32.xlu0 %v1109, 88
        %v1222 = vpop.permute.xlu0 %1221
        %v1224 = vsel %vm586, %v1220, 0
        %v1227 = vsel %vm586, %v1222, 0
        %1229 = vmatprep.subr.bf16.mxu0 0
        %1230 = vmatpush1.bf16.xpose.msra.mxu0 %v1227
        %1231 = vmatprep.subr.bf16.mxu0 0
        %1232 = vmatpush1.bf16.xpose.msra.mxu0 0
        %1233 = vmatprep.subr.bf16.mxu0 0
        %1234 = vmatpush1.bf16.xpose.msra.mxu0 0
        %1235 = vmatprep.subr.bf16.mxu0 0
        %1236 = vmatpush1.bf16.xpose.msra.mxu0 0
        %1237 = vmatprep.subr.bf16.mxu0 0
        %1238 = vmatpush1.bf16.xpose.msra.mxu0 0
        %1239 = vmatprep.subr.bf16.mxu0 0
        %1240 = vmatpush1.bf16.xpose.msra.mxu0 0
        %1241 = vmatprep.subr.bf16.mxu0 0
        %1242 = vmatpush1.bf16.xpose.msra.mxu0 0
        %1243 = vmatprep.subr.bf16.mxu0 0
        %1244 = vmatpush1.bf16.xpose.msra.mxu0 0
        %1245 = vmatprep.subr.bf16.mxu0 0
        %1246 = vmatpush1.bf16.xpose.msra.mxu0 0
        %1247 = vmatprep.subr.bf16.mxu0 0
        %1248 = vmatpush1.bf16.xpose.msra.mxu0 0
        %1249 = vmatprep.subr.bf16.mxu0 0
        %1250 = vmatpush1.bf16.xpose.msra.mxu0 0
        %1251 = vmatprep.subr.bf16.mxu0 0
        %1252 = vmatpush1.bf16.xpose.msra.mxu0 0
        %1253 = vmatprep.subr.bf16.mxu0 0
        %1254 = vmatpush1.bf16.xpose.msra.mxu0 0
        %1255 = vmatprep.subr.bf16.mxu0 0
        %1256 = vmatpush1.bf16.xpose.msra.mxu0 0
        %1257 = vmatprep.subr.bf16.mxu0 0
        %1258 = vmatpush1.bf16.xpose.msra.mxu0 0
        %1259 = vmatprep.subr.bf16.mxu0 0
        %1260 = vmatpush1.bf16.xpose.msra.mxu0 0
        %1261 = vmatprep.mubr.bf16.mxu0 0
        %1262 = vmatmul.mubr.bf16.gmra.mrb[0].mxu0 %v1224
        %v1263 = vpop.f32.mrb[0].mxu0
        %v1264 = vadd.f32 0.0, %v1263
        %v1265 = vpop.f32.mrb[0].mxu0
        %v1266 = vpop.f32.mrb[0].mxu0
        %v1267 = vpop.f32.mrb[0].mxu0
        %1268 = vdwg.mxu0
        %v1269 = vsel %vm586, %v1264, -inf
        %1270 = vmax.xlane.f32.xlu0 %v1269
        %v1271 = vpop.xlane.xlu0 %1270
        %v1272 = vsub.f32 %v1264, %v1271
        %v1273 = vmul.f32 %v1272, 1.442695
        %v1274 = vpow.pop %v1273
        %v1275 = vsel %vm586, %v1274, 0.0
        %1276 = vadd.xlane.f32.xlu0 %v1275
        %v1277 = vpop.xlane.xlu0 %1276
        %v1278 = vrcp.pop %v1277
        %v1279 = vmul.f32 %v1274, %v1278
        %v1280 = vpack.c.bf16 %v1279, %v1279
        %1281 = vrot.lane.b32.xlu0 %v1109, 56
        %v1282 = vpop.permute.xlu0 %1281
        %v1284 = vsel %vm586, %v1280, 0
        %v1287 = vsel %vm650, %v1282, 0
        %1289 = vmatprep.subr.bf16.mxu0 0
        %1290 = vmatpush1.bf16.msra.mxu0 %v1287
        %1291 = vmatprep.subr.bf16.mxu0 0
        %1292 = vmatpush1.bf16.msra.mxu0 0
        %1293 = vmatprep.subr.bf16.mxu0 0
        %1294 = vmatpush1.bf16.msra.mxu0 0
        %1295 = vmatprep.subr.bf16.mxu0 0
        %1296 = vmatpush1.bf16.msra.mxu0 0
        %1297 = vmatprep.subr.bf16.mxu0 0
        %1298 = vmatpush1.bf16.msra.mxu0 0
        %1299 = vmatprep.subr.bf16.mxu0 0
        %1300 = vmatpush1.bf16.msra.mxu0 0
        %1301 = vmatprep.subr.bf16.mxu0 0
        %1302 = vmatpush1.bf16.msra.mxu0 0
        %1303 = vmatprep.subr.bf16.mxu0 0
        %1304 = vmatpush1.bf16.msra.mxu0 0
        %1305 = vmatprep.subr.bf16.mxu0 0
        %1306 = vmatpush1.bf16.msra.mxu0 0
        %1307 = vmatprep.subr.bf16.mxu0 0
        %1308 = vmatpush1.bf16.msra.mxu0 0
        %1309 = vmatprep.subr.bf16.mxu0 0
        %1310 = vmatpush1.bf16.msra.mxu0 0
        %1311 = vmatprep.subr.bf16.mxu0 0
        %1312 = vmatpush1.bf16.msra.mxu0 0
        %1313 = vmatprep.subr.bf16.mxu0 0
        %1314 = vmatpush1.bf16.msra.mxu0 0
        %1315 = vmatprep.subr.bf16.mxu0 0
        %1316 = vmatpush1.bf16.msra.mxu0 0
        %1317 = vmatprep.subr.bf16.mxu0 0
        %1318 = vmatpush1.bf16.msra.mxu0 0
        %1319 = vmatprep.subr.bf16.mxu0 0
        %1320 = vmatpush1.bf16.msra.mxu0 0
        %1321 = vmatprep.mubr.bf16.mxu0 0
        %1322 = vmatmul.mubr.bf16.gmra.mrb[0].mxu0 %v1284
        %v1323 = vpop.f32.mrb[0].mxu0
        %v1324 = vadd.f32 0.0, %v1323
        %v1325 = vpop.f32.mrb[0].mxu0
        %v1326 = vpop.f32.mrb[0].mxu0
        %v1327 = vpop.f32.mrb[0].mxu0
        %1328 = vdwg.mxu0
        %1329 = vrot.lane.b32.xlu0 %v1109, 112
        %v1330 = vpop.permute.xlu0 %1329
        %1331 = vrot.lane.b32.xlu0 %v1109, 80
        %v1332 = vpop.permute.xlu0 %1331
        %v1334 = vsel %vm586, %v1330, 0
        %v1337 = vsel %vm586, %v1332, 0
        %1339 = vmatprep.subr.bf16.mxu0 0
        %1340 = vmatpush1.bf16.xpose.msra.mxu0 %v1337
        %1341 = vmatprep.subr.bf16.mxu0 0
        %1342 = vmatpush1.bf16.xpose.msra.mxu0 0
        %1343 = vmatprep.subr.bf16.mxu0 0
        %1344 = vmatpush1.bf16.xpose.msra.mxu0 0
        %1345 = vmatprep.subr.bf16.mxu0 0
        %1346 = vmatpush1.bf16.xpose.msra.mxu0 0
        %1347 = vmatprep.subr.bf16.mxu0 0
        %1348 = vmatpush1.bf16.xpose.msra.mxu0 0
        %1349 = vmatprep.subr.bf16.mxu0 0
        %1350 = vmatpush1.bf16.xpose.msra.mxu0 0
        %1351 = vmatprep.subr.bf16.mxu0 0
        %1352 = vmatpush1.bf16.xpose.msra.mxu0 0
        %1353 = vmatprep.subr.bf16.mxu0 0
        %1354 = vmatpush1.bf16.xpose.msra.mxu0 0
        %1355 = vmatprep.subr.bf16.mxu0 0
        %1356 = vmatpush1.bf16.xpose.msra.mxu0 0
        %1357 = vmatprep.subr.bf16.mxu0 0
        %1358 = vmatpush1.bf16.xpose.msra.mxu0 0
        %1359 = vmatprep.subr.bf16.mxu0 0
        %1360 = vmatpush1.bf16.xpose.msra.mxu0 0
        %1361 = vmatprep.subr.bf16.mxu0 0
        %1362 = vmatpush1.bf16.xpose.msra.mxu0 0
        %1363 = vmatprep.subr.bf16.mxu0 0
        %1364 = vmatpush1.bf16.xpose.msra.mxu0 0
        %1365 = vmatprep.subr.bf16.mxu0 0
        %1366 = vmatpush1.bf16.xpose.msra.mxu0 0
        %1367 = vmatprep.subr.bf16.mxu0 0
        %1368 = vmatpush1.bf16.xpose.msra.mxu0 0
        %1369 = vmatprep.subr.bf16.mxu0 0
        %1370 = vmatpush1.bf16.xpose.msra.mxu0 0
        %1371 = vmatprep.mubr.bf16.mxu0 0
        %1372 = vmatmul.mubr.bf16.gmra.mrb[0].mxu0 %v1334
        %v1373 = vpop.f32.mrb[0].mxu0
        %v1374 = vadd.f32 0.0, %v1373
        %v1375 = vpop.f32.mrb[0].mxu0
        %v1376 = vpop.f32.mrb[0].mxu0
        %v1377 = vpop.f32.mrb[0].mxu0
        %1378 = vdwg.mxu0
        %v1379 = vsel %vm586, %v1374, -inf
        %1380 = vmax.xlane.f32.xlu0 %v1379
        %v1381 = vpop.xlane.xlu0 %1380
        %v1382 = vsub.f32 %v1374, %v1381
        %v1383 = vmul.f32 %v1382, 1.442695
        %v1384 = vpow.pop %v1383
        %v1385 = vsel %vm586, %v1384, 0.0
        %1386 = vadd.xlane.f32.xlu0 %v1385
        %v1387 = vpop.xlane.xlu0 %1386
        %v1388 = vrcp.pop %v1387
        %v1389 = vmul.f32 %v1384, %v1388
        %v1390 = vpack.c.bf16 %v1389, %v1389
        %1391 = vrot.lane.b32.xlu0 %v1109, 48
        %v1392 = vpop.permute.xlu0 %1391
        %v1394 = vsel %vm586, %v1390, 0
        %v1397 = vsel %vm650, %v1392, 0
        %1399 = vmatprep.subr.bf16.mxu0 0
        %1400 = vmatpush1.bf16.msra.mxu0 %v1397
        %1401 = vmatprep.subr.bf16.mxu0 0
        %1402 = vmatpush1.bf16.msra.mxu0 0
        %1403 = vmatprep.subr.bf16.mxu0 0
        %1404 = vmatpush1.bf16.msra.mxu0 0
        %1405 = vmatprep.subr.bf16.mxu0 0
        %1406 = vmatpush1.bf16.msra.mxu0 0
        %1407 = vmatprep.subr.bf16.mxu0 0
        %1408 = vmatpush1.bf16.msra.mxu0 0
        %1409 = vmatprep.subr.bf16.mxu0 0
        %1410 = vmatpush1.bf16.msra.mxu0 0
        %1411 = vmatprep.subr.bf16.mxu0 0
        %1412 = vmatpush1.bf16.msra.mxu0 0
        %1413 = vmatprep.subr.bf16.mxu0 0
        %1414 = vmatpush1.bf16.msra.mxu0 0
        %1415 = vmatprep.subr.bf16.mxu0 0
        %1416 = vmatpush1.bf16.msra.mxu0 0
        %1417 = vmatprep.subr.bf16.mxu0 0
        %1418 = vmatpush1.bf16.msra.mxu0 0
        %1419 = vmatprep.subr.bf16.mxu0 0
        %1420 = vmatpush1.bf16.msra.mxu0 0
        %1421 = vmatprep.subr.bf16.mxu0 0
        %1422 = vmatpush1.bf16.msra.mxu0 0
        %1423 = vmatprep.subr.bf16.mxu0 0
        %1424 = vmatpush1.bf16.msra.mxu0 0
        %1425 = vmatprep.subr.bf16.mxu0 0
        %1426 = vmatpush1.bf16.msra.mxu0 0
        %1427 = vmatprep.subr.bf16.mxu0 0
        %1428 = vmatpush1.bf16.msra.mxu0 0
        %1429 = vmatprep.subr.bf16.mxu0 0
        %1430 = vmatpush1.bf16.msra.mxu0 0
        %1431 = vmatprep.mubr.bf16.mxu0 0
        %1432 = vmatmul.mubr.bf16.gmra.mrb[0].mxu0 %v1394
        %v1433 = vpop.f32.mrb[0].mxu0
        %v1434 = vadd.f32 0.0, %v1433
        %v1435 = vpop.f32.mrb[0].mxu0
        %v1436 = vpop.f32.mrb[0].mxu0
        %v1437 = vpop.f32.mrb[0].mxu0
        %1438 = vdwg.mxu0
        %1439 = vrot.lane.b32.xlu0 %v1109, 104
        %v1440 = vpop.permute.xlu0 %1439
        %1441 = vrot.lane.b32.xlu0 %v1109, 72
        %v1442 = vpop.permute.xlu0 %1441
        %v1444 = vsel %vm586, %v1440, 0
        %v1447 = vsel %vm586, %v1442, 0
        %1449 = vmatprep.subr.bf16.mxu0 0
        %1450 = vmatpush1.bf16.xpose.msra.mxu0 %v1447
        %1451 = vmatprep.subr.bf16.mxu0 0
        %1452 = vmatpush1.bf16.xpose.msra.mxu0 0
        %1453 = vmatprep.subr.bf16.mxu0 0
        %1454 = vmatpush1.bf16.xpose.msra.mxu0 0
        %1455 = vmatprep.subr.bf16.mxu0 0
        %1456 = vmatpush1.bf16.xpose.msra.mxu0 0
        %1457 = vmatprep.subr.bf16.mxu0 0
        %1458 = vmatpush1.bf16.xpose.msra.mxu0 0
        %1459 = vmatprep.subr.bf16.mxu0 0
        %1460 = vmatpush1.bf16.xpose.msra.mxu0 0
        %1461 = vmatprep.subr.bf16.mxu0 0
        %1462 = vmatpush1.bf16.xpose.msra.mxu0 0
        %1463 = vmatprep.subr.bf16.mxu0 0
        %1464 = vmatpush1.bf16.xpose.msra.mxu0 0
        %1465 = vmatprep.subr.bf16.mxu0 0
        %1466 = vmatpush1.bf16.xpose.msra.mxu0 0
        %1467 = vmatprep.subr.bf16.mxu0 0
        %1468 = vmatpush1.bf16.xpose.msra.mxu0 0
        %1469 = vmatprep.subr.bf16.mxu0 0
        %1470 = vmatpush1.bf16.xpose.msra.mxu0 0
        %1471 = vmatprep.subr.bf16.mxu0 0
        %1472 = vmatpush1.bf16.xpose.msra.mxu0 0
        %1473 = vmatprep.subr.bf16.mxu0 0
        %1474 = vmatpush1.bf16.xpose.msra.mxu0 0
        %1475 = vmatprep.subr.bf16.mxu0 0
        %1476 = vmatpush1.bf16.xpose.msra.mxu0 0
        %1477 = vmatprep.subr.bf16.mxu0 0
        %1478 = vmatpush1.bf16.xpose.msra.mxu0 0
        %1479 = vmatprep.subr.bf16.mxu0 0
        %1480 = vmatpush1.bf16.xpose.msra.mxu0 0
        %1481 = vmatprep.mubr.bf16.mxu0 0
        %1482 = vmatmul.mubr.bf16.gmra.mrb[0].mxu0 %v1444
        %v1483 = vpop.f32.mrb[0].mxu0
        %v1484 = vadd.f32 0.0, %v1483
        %v1485 = vpop.f32.mrb[0].mxu0
        %v1486 = vpop.f32.mrb[0].mxu0
        %v1487 = vpop.f32.mrb[0].mxu0
        %1488 = vdwg.mxu0
        %v1489 = vsel %vm586, %v1484, -inf
        %1490 = vmax.xlane.f32.xlu0 %v1489
        %v1491 = vpop.xlane.xlu0 %1490
        %v1492 = vsub.f32 %v1484, %v1491
        %v1493 = vmul.f32 %v1492, 1.442695
        %v1494 = vpow.pop %v1493
        %v1495 = vsel %vm586, %v1494, 0.0
        %1496 = vadd.xlane.f32.xlu0 %v1495
        %v1497 = vpop.xlane.xlu0 %1496
        %v1498 = vrcp.pop %v1497
        %v1499 = vmul.f32 %v1494, %v1498
        %v1500 = vpack.c.bf16 %v1499, %v1499
        %1501 = vrot.lane.b32.xlu0 %v1109, 40
        %v1502 = vpop.permute.xlu0 %1501
        %v1504 = vsel %vm586, %v1500, 0
        %v1507 = vsel %vm650, %v1502, 0
        %1509 = vmatprep.subr.bf16.mxu0 0
        %1510 = vmatpush1.bf16.msra.mxu0 %v1507
        %1511 = vmatprep.subr.bf16.mxu0 0
        %1512 = vmatpush1.bf16.msra.mxu0 0
        %1513 = vmatprep.subr.bf16.mxu0 0
        %1514 = vmatpush1.bf16.msra.mxu0 0
        %1515 = vmatprep.subr.bf16.mxu0 0
        %1516 = vmatpush1.bf16.msra.mxu0 0
        %1517 = vmatprep.subr.bf16.mxu0 0
        %1518 = vmatpush1.bf16.msra.mxu0 0
        %1519 = vmatprep.subr.bf16.mxu0 0
        %1520 = vmatpush1.bf16.msra.mxu0 0
        %1521 = vmatprep.subr.bf16.mxu0 0
        %1522 = vmatpush1.bf16.msra.mxu0 0
        %1523 = vmatprep.subr.bf16.mxu0 0
        %1524 = vmatpush1.bf16.msra.mxu0 0
        %1525 = vmatprep.subr.bf16.mxu0 0
        %1526 = vmatpush1.bf16.msra.mxu0 0
        %1527 = vmatprep.subr.bf16.mxu0 0
        %1528 = vmatpush1.bf16.msra.mxu0 0
        %1529 = vmatprep.subr.bf16.mxu0 0
        %1530 = vmatpush1.bf16.msra.mxu0 0
        %1531 = vmatprep.subr.bf16.mxu0 0
        %1532 = vmatpush1.bf16.msra.mxu0 0
        %1533 = vmatprep.subr.bf16.mxu0 0
        %1534 = vmatpush1.bf16.msra.mxu0 0
        %1535 = vmatprep.subr.bf16.mxu0 0
        %1536 = vmatpush1.bf16.msra.mxu0 0
        %1537 = vmatprep.subr.bf16.mxu0 0
        %1538 = vmatpush1.bf16.msra.mxu0 0
        %1539 = vmatprep.subr.bf16.mxu0 0
        %1540 = vmatpush1.bf16.msra.mxu0 0
        %1541 = vmatprep.mubr.bf16.mxu0 0
        %1542 = vmatmul.mubr.bf16.gmra.mrb[0].mxu0 %v1504
        %v1543 = vpop.f32.mrb[0].mxu0
        %v1544 = vadd.f32 0.0, %v1543
        %v1545 = vpop.f32.mrb[0].mxu0
        %v1546 = vpop.f32.mrb[0].mxu0
        %v1547 = vpop.f32.mrb[0].mxu0
        %1548 = vdwg.mxu0
        %1550 = vrot.lane.b32.xlu0 %v1324, 8
        %v1551 = vpop.permute.xlu0 %1550
        %1554 = vrot.lane.b32.xlu0 %v1434, 16
        %v1555 = vpop.permute.xlu0 %1554
        %1558 = vrot.lane.b32.xlu0 %v1544, 24
        %v1559 = vpop.permute.xlu0 %1558
        %v1561 = vsel %vm586, %v1214, %v1551
        %v1562 = vsel %vm1037, %v1561, %v1555
        %v1563 = vsel %vm1039, %v1562, %v1559
        %v1564 = vtanh.pop %v1563
        %v1565 = vpack.c.bf16 %v1564, %v1564
        %v1566 = vld [vmem:[%s9] sm:$0xf]
        %v1567 = vld [vmem:[%s9 + $0x4] sm:$0xf]
        %v1568 = vld [vmem:[%s9 + $0x8] sm:$0xf]
        %v1569 = vld [vmem:[%s9 + $0xc] sm:$0xf]
        %v1570 = vld [vmem:[%s10] sm:$0x1]
        %v1572 = vlaneseq
        %v1573 = vshrl.u32 %v1572, 7
        %v1574 = vsub.s32 0, %v1573
        %v1575 = vrot.slane %v1570, %v1574
        %v1581 = vunpack.c.l.b16 %v1566
        %v1582 = vunpack.c.l.b16 %v1567
        %v1583 = vunpack.c.l.b16 %v1568
        %v1584 = vunpack.c.l.b16 %v1569
        %v1585 = vpack.c.b16 %v1582, %v1581
        %v1586 = vpack.c.b16 %v1584, %v1583
        %v1590 = vsel %vm538, %v514, 0
        %1592 = vmatprep.subr.bf16.mxu0 0
        %1593 = vmatpush1.bf16.msra.mxu0 %v1585
        %1594 = vmatprep.subr.bf16.mxu0 0
        %1595 = vmatpush1.bf16.msra.mxu0 %v1586
        %1596 = vmatprep.subr.bf16.mxu0 0
        %1597 = vmatpush1.bf16.msra.mxu0 0
        %1598 = vmatprep.subr.bf16.mxu0 0
        %1599 = vmatpush1.bf16.msra.mxu0 0
        %1600 = vmatprep.subr.bf16.mxu0 0
        %1601 = vmatpush1.bf16.msra.mxu0 0
        %1602 = vmatprep.subr.bf16.mxu0 0
        %1603 = vmatpush1.bf16.msra.mxu0 0
        %1604 = vmatprep.subr.bf16.mxu0 0
        %1605 = vmatpush1.bf16.msra.mxu0 0
        %1606 = vmatprep.subr.bf16.mxu0 0
        %1607 = vmatpush1.bf16.msra.mxu0 0
        %1608 = vmatprep.subr.bf16.mxu0 0
        %1609 = vmatpush1.bf16.msra.mxu0 0
        %1610 = vmatprep.subr.bf16.mxu0 0
        %1611 = vmatpush1.bf16.msra.mxu0 0
        %1612 = vmatprep.subr.bf16.mxu0 0
        %1613 = vmatpush1.bf16.msra.mxu0 0
        %1614 = vmatprep.subr.bf16.mxu0 0
        %1615 = vmatpush1.bf16.msra.mxu0 0
        %1616 = vmatprep.subr.bf16.mxu0 0
        %1617 = vmatpush1.bf16.msra.mxu0 0
        %1618 = vmatprep.subr.bf16.mxu0 0
        %1619 = vmatpush1.bf16.msra.mxu0 0
        %1620 = vmatprep.subr.bf16.mxu0 0
        %1621 = vmatpush1.bf16.msra.mxu0 0
        %1622 = vmatprep.subr.bf16.mxu0 0
        %1623 = vmatpush1.bf16.msra.mxu0 0
        %1624 = vmatprep.mubr.bf16.mxu0 0
        %1625 = vmatmul.mubr.bf16.gmra.mrb[0].mxu0 %v1590
        %v1626 = vpop.f32.mrb[0].mxu0
        %v1627 = vadd.f32 %v1575, %v1626
        %v1628 = vpop.f32.mrb[0].mxu0
        %v1629 = vpop.f32.mrb[0].mxu0
        %v1630 = vpop.f32.mrb[0].mxu0
        %1631 = vdwg.mxu0
        %v1632 = vpack.c.bf16 %v1627, %v1627
        %1634 = vrot.lane.b32.xlu0 %v1632, 96
        %v1635 = vpop.permute.xlu0 %1634
        %v1637 = vsel %vm586, %v1632, 0
        %v1640 = vsel %vm586, %v1635, 0
        %1642 = vmatprep.subr.bf16.mxu0 0
        %1643 = vmatpush1.bf16.xpose.msra.mxu0 %v1640
        %1644 = vmatprep.subr.bf16.mxu0 0
        %1645 = vmatpush1.bf16.xpose.msra.mxu0 0
        %1646 = vmatprep.subr.bf16.mxu0 0
        %1647 = vmatpush1.bf16.xpose.msra.mxu0 0
        %1648 = vmatprep.subr.bf16.mxu0 0
        %1649 = vmatpush1.bf16.xpose.msra.mxu0 0
        %1650 = vmatprep.subr.bf16.mxu0 0
        %1651 = vmatpush1.bf16.xpose.msra.mxu0 0
        %1652 = vmatprep.subr.bf16.mxu0 0
        %1653 = vmatpush1.bf16.xpose.msra.mxu0 0
        %1654 = vmatprep.subr.bf16.mxu0 0
        %1655 = vmatpush1.bf16.xpose.msra.mxu0 0
        %1656 = vmatprep.subr.bf16.mxu0 0
        %1657 = vmatpush1.bf16.xpose.msra.mxu0 0
        %1658 = vmatprep.subr.bf16.mxu0 0
        %1659 = vmatpush1.bf16.xpose.msra.mxu0 0
        %1660 = vmatprep.subr.bf16.mxu0 0
        %1661 = vmatpush1.bf16.xpose.msra.mxu0 0
        %1662 = vmatprep.subr.bf16.mxu0 0
        %1663 = vmatpush1.bf16.xpose.msra.mxu0 0
        %1664 = vmatprep.subr.bf16.mxu0 0
        %1665 = vmatpush1.bf16.xpose.msra.mxu0 0
        %1666 = vmatprep.subr.bf16.mxu0 0
        %1667 = vmatpush1.bf16.xpose.msra.mxu0 0
        %1668 = vmatprep.subr.bf16.mxu0 0
        %1669 = vmatpush1.bf16.xpose.msra.mxu0 0
        %1670 = vmatprep.subr.bf16.mxu0 0
        %1671 = vmatpush1.bf16.xpose.msra.mxu0 0
        %1672 = vmatprep.subr.bf16.mxu0 0
        %1673 = vmatpush1.bf16.xpose.msra.mxu0 0
        %1674 = vmatprep.mubr.bf16.mxu0 0
        %1675 = vmatmul.mubr.bf16.gmra.mrb[0].mxu0 %v1637
        %v1676 = vpop.f32.mrb[0].mxu0
        %v1677 = vadd.f32 0.0, %v1676
        %v1678 = vpop.f32.mrb[0].mxu0
        %v1679 = vpop.f32.mrb[0].mxu0
        %v1680 = vpop.f32.mrb[0].mxu0
        %1681 = vdwg.mxu0
        %v1682 = vsel %vm586, %v1677, -inf
        %1683 = vmax.xlane.f32.xlu0 %v1682
        %v1684 = vpop.xlane.xlu0 %1683
        %v1685 = vsub.f32 %v1677, %v1684
        %v1686 = vmul.f32 %v1685, 1.442695
        %v1687 = vpow.pop %v1686
        %v1688 = vsel %vm586, %v1687, 0.0
        %1689 = vadd.xlane.f32.xlu0 %v1688
        %v1690 = vpop.xlane.xlu0 %1689
        %v1691 = vrcp.pop %v1690
        %v1692 = vmul.f32 %v1687, %v1691
        %v1693 = vpack.c.bf16 %v1692, %v1692
        %1694 = vrot.lane.b32.xlu0 %v1632, 64
        %v1695 = vpop.permute.xlu0 %1694
        %v1697 = vsel %vm586, %v1693, 0
        %v1700 = vsel %vm650, %v1695, 0
        %1702 = vmatprep.subr.bf16.mxu0 0
        %1703 = vmatpush1.bf16.msra.mxu0 %v1700
        %1704 = vmatprep.subr.bf16.mxu0 0
        %1705 = vmatpush1.bf16.msra.mxu0 0
        %1706 = vmatprep.subr.bf16.mxu0 0
        %1707 = vmatpush1.bf16.msra.mxu0 0
        %1708 = vmatprep.subr.bf16.mxu0 0
        %1709 = vmatpush1.bf16.msra.mxu0 0
        %1710 = vmatprep.subr.bf16.mxu0 0
        %1711 = vmatpush1.bf16.msra.mxu0 0
        %1712 = vmatprep.subr.bf16.mxu0 0
        %1713 = vmatpush1.bf16.msra.mxu0 0
        %1714 = vmatprep.subr.bf16.mxu0 0
        %1715 = vmatpush1.bf16.msra.mxu0 0
        %1716 = vmatprep.subr.bf16.mxu0 0
        %1717 = vmatpush1.bf16.msra.mxu0 0
        %1718 = vmatprep.subr.bf16.mxu0 0
        %1719 = vmatpush1.bf16.msra.mxu0 0
        %1720 = vmatprep.subr.bf16.mxu0 0
        %1721 = vmatpush1.bf16.msra.mxu0 0
        %1722 = vmatprep.subr.bf16.mxu0 0
        %1723 = vmatpush1.bf16.msra.mxu0 0
        %1724 = vmatprep.subr.bf16.mxu0 0
        %1725 = vmatpush1.bf16.msra.mxu0 0
        %1726 = vmatprep.subr.bf16.mxu0 0
        %1727 = vmatpush1.bf16.msra.mxu0 0
        %1728 = vmatprep.subr.bf16.mxu0 0
        %1729 = vmatpush1.bf16.msra.mxu0 0
        %1730 = vmatprep.subr.bf16.mxu0 0
        %1731 = vmatpush1.bf16.msra.mxu0 0
        %1732 = vmatprep.subr.bf16.mxu0 0
        %1733 = vmatpush1.bf16.msra.mxu0 0
        %1734 = vmatprep.mubr.bf16.mxu0 0
        %1735 = vmatmul.mubr.bf16.gmra.mrb[0].mxu0 %v1697
        %v1736 = vpop.f32.mrb[0].mxu0
        %v1737 = vadd.f32 0.0, %v1736
        %v1738 = vpop.f32.mrb[0].mxu0
        %v1739 = vpop.f32.mrb[0].mxu0
        %v1740 = vpop.f32.mrb[0].mxu0
        %1741 = vdwg.mxu0
        %1742 = vrot.lane.b32.xlu0 %v1632, 120
        %v1743 = vpop.permute.xlu0 %1742
        %1744 = vrot.lane.b32.xlu0 %v1632, 88
        %v1745 = vpop.permute.xlu0 %1744
        %v1747 = vsel %vm586, %v1743, 0
        %v1750 = vsel %vm586, %v1745, 0
        %1752 = vmatprep.subr.bf16.mxu0 0
        %1753 = vmatpush1.bf16.xpose.msra.mxu0 %v1750
        %1754 = vmatprep.subr.bf16.mxu0 0
        %1755 = vmatpush1.bf16.xpose.msra.mxu0 0
        %1756 = vmatprep.subr.bf16.mxu0 0
        %1757 = vmatpush1.bf16.xpose.msra.mxu0 0
        %1758 = vmatprep.subr.bf16.mxu0 0
        %1759 = vmatpush1.bf16.xpose.msra.mxu0 0
        %1760 = vmatprep.subr.bf16.mxu0 0
        %1761 = vmatpush1.bf16.xpose.msra.mxu0 0
        %1762 = vmatprep.subr.bf16.mxu0 0
        %1763 = vmatpush1.bf16.xpose.msra.mxu0 0
        %1764 = vmatprep.subr.bf16.mxu0 0
        %1765 = vmatpush1.bf16.xpose.msra.mxu0 0
        %1766 = vmatprep.subr.bf16.mxu0 0
        %1767 = vmatpush1.bf16.xpose.msra.mxu0 0
        %1768 = vmatprep.subr.bf16.mxu0 0
        %1769 = vmatpush1.bf16.xpose.msra.mxu0 0
        %1770 = vmatprep.subr.bf16.mxu0 0
        %1771 = vmatpush1.bf16.xpose.msra.mxu0 0
        %1772 = vmatprep.subr.bf16.mxu0 0
        %1773 = vmatpush1.bf16.xpose.msra.mxu0 0
        %1774 = vmatprep.subr.bf16.mxu0 0
        %1775 = vmatpush1.bf16.xpose.msra.mxu0 0
        %1776 = vmatprep.subr.bf16.mxu0 0
        %1777 = vmatpush1.bf16.xpose.msra.mxu0 0
        %1778 = vmatprep.subr.bf16.mxu0 0
        %1779 = vmatpush1.bf16.xpose.msra.mxu0 0
        %1780 = vmatprep.subr.bf16.mxu0 0
        %1781 = vmatpush1.bf16.xpose.msra.mxu0 0
        %1782 = vmatprep.subr.bf16.mxu0 0
        %1783 = vmatpush1.bf16.xpose.msra.mxu0 0
        %1784 = vmatprep.mubr.bf16.mxu0 0
        %1785 = vmatmul.mubr.bf16.gmra.mrb[0].mxu0 %v1747
        %v1786 = vpop.f32.mrb[0].mxu0
        %v1787 = vadd.f32 0.0, %v1786
        %v1788 = vpop.f32.mrb[0].mxu0
        %v1789 = vpop.f32.mrb[0].mxu0
        %v1790 = vpop.f32.mrb[0].mxu0
        %1791 = vdwg.mxu0
        %v1792 = vsel %vm586, %v1787, -inf
        %1793 = vmax.xlane.f32.xlu0 %v1792
        %v1794 = vpop.xlane.xlu0 %1793
        %v1795 = vsub.f32 %v1787, %v1794
        %v1796 = vmul.f32 %v1795, 1.442695
        %v1797 = vpow.pop %v1796
        %v1798 = vsel %vm586, %v1797, 0.0
        %1799 = vadd.xlane.f32.xlu0 %v1798
        %v1800 = vpop.xlane.xlu0 %1799
        %v1801 = vrcp.pop %v1800
        %v1802 = vmul.f32 %v1797, %v1801
        %v1803 = vpack.c.bf16 %v1802, %v1802
        %1804 = vrot.lane.b32.xlu0 %v1632, 56
        %v1805 = vpop.permute.xlu0 %1804
        %v1807 = vsel %vm586, %v1803, 0
        %v1810 = vsel %vm650, %v1805, 0
        %1812 = vmatprep.subr.bf16.mxu0 0
        %1813 = vmatpush1.bf16.msra.mxu0 %v1810
        %1814 = vmatprep.subr.bf16.mxu0 0
        %1815 = vmatpush1.bf16.msra.mxu0 0
        %1816 = vmatprep.subr.bf16.mxu0 0
        %1817 = vmatpush1.bf16.msra.mxu0 0
        %1818 = vmatprep.subr.bf16.mxu0 0
        %1819 = vmatpush1.bf16.msra.mxu0 0
        %1820 = vmatprep.subr.bf16.mxu0 0
        %1821 = vmatpush1.bf16.msra.mxu0 0
        %1822 = vmatprep.subr.bf16.mxu0 0
        %1823 = vmatpush1.bf16.msra.mxu0 0
        %1824 = vmatprep.subr.bf16.mxu0 0
        %1825 = vmatpush1.bf16.msra.mxu0 0
        %1826 = vmatprep.subr.bf16.mxu0 0
        %1827 = vmatpush1.bf16.msra.mxu0 0
        %1828 = vmatprep.subr.bf16.mxu0 0
        %1829 = vmatpush1.bf16.msra.mxu0 0
        %1830 = vmatprep.subr.bf16.mxu0 0
        %1831 = vmatpush1.bf16.msra.mxu0 0
        %1832 = vmatprep.subr.bf16.mxu0 0
        %1833 = vmatpush1.bf16.msra.mxu0 0
        %1834 = vmatprep.subr.bf16.mxu0 0
        %1835 = vmatpush1.bf16.msra.mxu0 0
        %1836 = vmatprep.subr.bf16.mxu0 0
        %1837 = vmatpush1.bf16.msra.mxu0 0
        %1838 = vmatprep.subr.bf16.mxu0 0
        %1839 = vmatpush1.bf16.msra.mxu0 0
        %1840 = vmatprep.subr.bf16.mxu0 0
        %1841 = vmatpush1.bf16.msra.mxu0 0
        %1842 = vmatprep.subr.bf16.mxu0 0
        %1843 = vmatpush1.bf16.msra.mxu0 0
        %1844 = vmatprep.mubr.bf16.mxu0 0
        %1845 = vmatmul.mubr.bf16.gmra.mrb[0].mxu0 %v1807
        %v1846 = vpop.f32.mrb[0].mxu0
        %v1847 = vadd.f32 0.0, %v1846
        %v1848 = vpop.f32.mrb[0].mxu0
        %v1849 = vpop.f32.mrb[0].mxu0
        %v1850 = vpop.f32.mrb[0].mxu0
        %1851 = vdwg.mxu0
        %1852 = vrot.lane.b32.xlu0 %v1632, 112
        %v1853 = vpop.permute.xlu0 %1852
        %1854 = vrot.lane.b32.xlu0 %v1632, 80
        %v1855 = vpop.permute.xlu0 %1854
        %v1857 = vsel %vm586, %v1853, 0
        %v1860 = vsel %vm586, %v1855, 0
        %1862 = vmatprep.subr.bf16.mxu0 0
        %1863 = vmatpush1.bf16.xpose.msra.mxu0 %v1860
        %1864 = vmatprep.subr.bf16.mxu0 0
        %1865 = vmatpush1.bf16.xpose.msra.mxu0 0
        %1866 = vmatprep.subr.bf16.mxu0 0
        %1867 = vmatpush1.bf16.xpose.msra.mxu0 0
        %1868 = vmatprep.subr.bf16.mxu0 0
        %1869 = vmatpush1.bf16.xpose.msra.mxu0 0
        %1870 = vmatprep.subr.bf16.mxu0 0
        %1871 = vmatpush1.bf16.xpose.msra.mxu0 0
        %1872 = vmatprep.subr.bf16.mxu0 0
        %1873 = vmatpush1.bf16.xpose.msra.mxu0 0
        %1874 = vmatprep.subr.bf16.mxu0 0
        %1875 = vmatpush1.bf16.xpose.msra.mxu0 0
        %1876 = vmatprep.subr.bf16.mxu0 0
        %1877 = vmatpush1.bf16.xpose.msra.mxu0 0
        %1878 = vmatprep.subr.bf16.mxu0 0
        %1879 = vmatpush1.bf16.xpose.msra.mxu0 0
        %1880 = vmatprep.subr.bf16.mxu0 0
        %1881 = vmatpush1.bf16.xpose.msra.mxu0 0
        %1882 = vmatprep.subr.bf16.mxu0 0
        %1883 = vmatpush1.bf16.xpose.msra.mxu0 0
        %1884 = vmatprep.subr.bf16.mxu0 0
        %1885 = vmatpush1.bf16.xpose.msra.mxu0 0
        %1886 = vmatprep.subr.bf16.mxu0 0
        %1887 = vmatpush1.bf16.xpose.msra.mxu0 0
        %1888 = vmatprep.subr.bf16.mxu0 0
        %1889 = vmatpush1.bf16.xpose.msra.mxu0 0
        %1890 = vmatprep.subr.bf16.mxu0 0
        %1891 = vmatpush1.bf16.xpose.msra.mxu0 0
        %1892 = vmatprep.subr.bf16.mxu0 0
        %1893 = vmatpush1.bf16.xpose.msra.mxu0 0
        %1894 = vmatprep.mubr.bf16.mxu0 0
        %1895 = vmatmul.mubr.bf16.gmra.mrb[0].mxu0 %v1857
        %v1896 = vpop.f32.mrb[0].mxu0
        %v1897 = vadd.f32 0.0, %v1896
        %v1898 = vpop.f32.mrb[0].mxu0
        %v1899 = vpop.f32.mrb[0].mxu0
        %v1900 = vpop.f32.mrb[0].mxu0
        %1901 = vdwg.mxu0
        %v1902 = vsel %vm586, %v1897, -inf
        %1903 = vmax.xlane.f32.xlu0 %v1902
        %v1904 = vpop.xlane.xlu0 %1903
        %v1905 = vsub.f32 %v1897, %v1904
        %v1906 = vmul.f32 %v1905, 1.442695
        %v1907 = vpow.pop %v1906
        %v1908 = vsel %vm586, %v1907, 0.0
        %1909 = vadd.xlane.f32.xlu0 %v1908
        %v1910 = vpop.xlane.xlu0 %1909
        %v1911 = vrcp.pop %v1910
        %v1912 = vmul.f32 %v1907, %v1911
        %v1913 = vpack.c.bf16 %v1912, %v1912
        %1914 = vrot.lane.b32.xlu0 %v1632, 48
        %v1915 = vpop.permute.xlu0 %1914
        %v1917 = vsel %vm586, %v1913, 0
        %v1920 = vsel %vm650, %v1915, 0
        %1922 = vmatprep.subr.bf16.mxu0 0
        %1923 = vmatpush1.bf16.msra.mxu0 %v1920
        %1924 = vmatprep.subr.bf16.mxu0 0
        %1925 = vmatpush1.bf16.msra.mxu0 0
        %1926 = vmatprep.subr.bf16.mxu0 0
        %1927 = vmatpush1.bf16.msra.mxu0 0
        %1928 = vmatprep.subr.bf16.mxu0 0
        %1929 = vmatpush1.bf16.msra.mxu0 0
        %1930 = vmatprep.subr.bf16.mxu0 0
        %1931 = vmatpush1.bf16.msra.mxu0 0
        %1932 = vmatprep.subr.bf16.mxu0 0
        %1933 = vmatpush1.bf16.msra.mxu0 0
        %1934 = vmatprep.subr.bf16.mxu0 0
        %1935 = vmatpush1.bf16.msra.mxu0 0
        %1936 = vmatprep.subr.bf16.mxu0 0
        %1937 = vmatpush1.bf16.msra.mxu0 0
        %1938 = vmatprep.subr.bf16.mxu0 0
        %1939 = vmatpush1.bf16.msra.mxu0 0
        %1940 = vmatprep.subr.bf16.mxu0 0
        %1941 = vmatpush1.bf16.msra.mxu0 0
        %1942 = vmatprep.subr.bf16.mxu0 0
        %1943 = vmatpush1.bf16.msra.mxu0 0
        %1944 = vmatprep.subr.bf16.mxu0 0
        %1945 = vmatpush1.bf16.msra.mxu0 0
        %1946 = vmatprep.subr.bf16.mxu0 0
        %1947 = vmatpush1.bf16.msra.mxu0 0
        %1948 = vmatprep.subr.bf16.mxu0 0
        %1949 = vmatpush1.bf16.msra.mxu0 0
        %1950 = vmatprep.subr.bf16.mxu0 0
        %1951 = vmatpush1.bf16.msra.mxu0 0
        %1952 = vmatprep.subr.bf16.mxu0 0
        %1953 = vmatpush1.bf16.msra.mxu0 0
        %1954 = vmatprep.mubr.bf16.mxu0 0
        %1955 = vmatmul.mubr.bf16.gmra.mrb[0].mxu0 %v1917
        %v1956 = vpop.f32.mrb[0].mxu0
        %v1957 = vadd.f32 0.0, %v1956
        %v1958 = vpop.f32.mrb[0].mxu0
        %v1959 = vpop.f32.mrb[0].mxu0
        %v1960 = vpop.f32.mrb[0].mxu0
        %1961 = vdwg.mxu0
        %1962 = vrot.lane.b32.xlu0 %v1632, 104
        %v1963 = vpop.permute.xlu0 %1962
        %1964 = vrot.lane.b32.xlu0 %v1632, 72
        %v1965 = vpop.permute.xlu0 %1964
        %v1967 = vsel %vm586, %v1963, 0
        %v1970 = vsel %vm586, %v1965, 0
        %1972 = vmatprep.subr.bf16.mxu0 0
        %1973 = vmatpush1.bf16.xpose.msra.mxu0 %v1970
        %1974 = vmatprep.subr.bf16.mxu0 0
        %1975 = vmatpush1.bf16.xpose.msra.mxu0 0
        %1976 = vmatprep.subr.bf16.mxu0 0
        %1977 = vmatpush1.bf16.xpose.msra.mxu0 0
        %1978 = vmatprep.subr.bf16.mxu0 0
        %1979 = vmatpush1.bf16.xpose.msra.mxu0 0
        %1980 = vmatprep.subr.bf16.mxu0 0
        %1981 = vmatpush1.bf16.xpose.msra.mxu0 0
        %1982 = vmatprep.subr.bf16.mxu0 0
        %1983 = vmatpush1.bf16.xpose.msra.mxu0 0
        %1984 = vmatprep.subr.bf16.mxu0 0
        %1985 = vmatpush1.bf16.xpose.msra.mxu0 0
        %1986 = vmatprep.subr.bf16.mxu0 0
        %1987 = vmatpush1.bf16.xpose.msra.mxu0 0
        %1988 = vmatprep.subr.bf16.mxu0 0
        %1989 = vmatpush1.bf16.xpose.msra.mxu0 0
        %1990 = vmatprep.subr.bf16.mxu0 0
        %1991 = vmatpush1.bf16.xpose.msra.mxu0 0
        %1992 = vmatprep.subr.bf16.mxu0 0
        %1993 = vmatpush1.bf16.xpose.msra.mxu0 0
        %1994 = vmatprep.subr.bf16.mxu0 0
        %1995 = vmatpush1.bf16.xpose.msra.mxu0 0
        %1996 = vmatprep.subr.bf16.mxu0 0
        %1997 = vmatpush1.bf16.xpose.msra.mxu0 0
        %1998 = vmatprep.subr.bf16.mxu0 0
        %1999 = vmatpush1.bf16.xpose.msra.mxu0 0
        %2000 = vmatprep.subr.bf16.mxu0 0
        %2001 = vmatpush1.bf16.xpose.msra.mxu0 0
        %2002 = vmatprep.subr.bf16.mxu0 0
        %2003 = vmatpush1.bf16.xpose.msra.mxu0 0
        %2004 = vmatprep.mubr.bf16.mxu0 0
        %2005 = vmatmul.mubr.bf16.gmra.mrb[0].mxu0 %v1967
        %v2006 = vpop.f32.mrb[0].mxu0
        %v2007 = vadd.f32 0.0, %v2006
        %v2008 = vpop.f32.mrb[0].mxu0
        %v2009 = vpop.f32.mrb[0].mxu0
        %v2010 = vpop.f32.mrb[0].mxu0
        %2011 = vdwg.mxu0
        %v2012 = vsel %vm586, %v2007, -inf
        %2013 = vmax.xlane.f32.xlu0 %v2012
        %v2014 = vpop.xlane.xlu0 %2013
        %v2015 = vsub.f32 %v2007, %v2014
        %v2016 = vmul.f32 %v2015, 1.442695
        %v2017 = vpow.pop %v2016
        %v2018 = vsel %vm586, %v2017, 0.0
        %2019 = vadd.xlane.f32.xlu0 %v2018
        %v2020 = vpop.xlane.xlu0 %2019
        %v2021 = vrcp.pop %v2020
        %v2022 = vmul.f32 %v2017, %v2021
        %v2023 = vpack.c.bf16 %v2022, %v2022
        %2024 = vrot.lane.b32.xlu0 %v1632, 40
        %v2025 = vpop.permute.xlu0 %2024
        %v2027 = vsel %vm586, %v2023, 0
        %v2030 = vsel %vm650, %v2025, 0
        %2032 = vmatprep.subr.bf16.mxu0 0
        %2033 = vmatpush1.bf16.msra.mxu0 %v2030
        %2034 = vmatprep.subr.bf16.mxu0 0
        %2035 = vmatpush1.bf16.msra.mxu0 0
        %2036 = vmatprep.subr.bf16.mxu0 0
        %2037 = vmatpush1.bf16.msra.mxu0 0
        %2038 = vmatprep.subr.bf16.mxu0 0
        %2039 = vmatpush1.bf16.msra.mxu0 0
        %2040 = vmatprep.subr.bf16.mxu0 0
        %2041 = vmatpush1.bf16.msra.mxu0 0
        %2042 = vmatprep.subr.bf16.mxu0 0
        %2043 = vmatpush1.bf16.msra.mxu0 0
        %2044 = vmatprep.subr.bf16.mxu0 0
        %2045 = vmatpush1.bf16.msra.mxu0 0
        %2046 = vmatprep.subr.bf16.mxu0 0
        %2047 = vmatpush1.bf16.msra.mxu0 0
        %2048 = vmatprep.subr.bf16.mxu0 0
        %2049 = vmatpush1.bf16.msra.mxu0 0
        %2050 = vmatprep.subr.bf16.mxu0 0
        %2051 = vmatpush1.bf16.msra.mxu0 0
        %2052 = vmatprep.subr.bf16.mxu0 0
        %2053 = vmatpush1.bf16.msra.mxu0 0
        %2054 = vmatprep.subr.bf16.mxu0 0
        %2055 = vmatpush1.bf16.msra.mxu0 0
        %2056 = vmatprep.subr.bf16.mxu0 0
        %2057 = vmatpush1.bf16.msra.mxu0 0
        %2058 = vmatprep.subr.bf16.mxu0 0
        %2059 = vmatpush1.bf16.msra.mxu0 0
        %2060 = vmatprep.subr.bf16.mxu0 0
        %2061 = vmatpush1.bf16.msra.mxu0 0
        %2062 = vmatprep.subr.bf16.mxu0 0
        %2063 = vmatpush1.bf16.msra.mxu0 0
        %2064 = vmatprep.mubr.bf16.mxu0 0
        %2065 = vmatmul.mubr.bf16.gmra.mrb[0].mxu0 %v2027
        %v2066 = vpop.f32.mrb[0].mxu0
        %v2067 = vadd.f32 0.0, %v2066
        %v2068 = vpop.f32.mrb[0].mxu0
        %v2069 = vpop.f32.mrb[0].mxu0
        %v2070 = vpop.f32.mrb[0].mxu0
        %2071 = vdwg.mxu0
        %2073 = vrot.lane.b32.xlu0 %v1847, 8
        %v2074 = vpop.permute.xlu0 %2073
        %2077 = vrot.lane.b32.xlu0 %v1957, 16
        %v2078 = vpop.permute.xlu0 %2077
        %2081 = vrot.lane.b32.xlu0 %v2067, 24
        %v2082 = vpop.permute.xlu0 %2081
        %v2084 = vsel %vm586, %v1737, %v2074
        %v2085 = vsel %vm1037, %v2084, %v2078
        %v2086 = vsel %vm1039, %v2085, %v2082
        %v2087 = vtanh.pop %v2086
        %v2088 = vpack.c.bf16 %v2087, %v2087
        %v2089 = vld [vmem:[%s11] sm:$0xf]
        %v2090 = vld [vmem:[%s11 + $0x4] sm:$0xf]
        %v2091 = vld [vmem:[%s11 + $0x8] sm:$0xf]
        %v2092 = vld [vmem:[%s11 + $0xc] sm:$0xf]
        %s2093 = scalar_lea.vmem %s11, 16
        %v2094 = vld [vmem:[%s2093] sm:$0xf]
        %v2095 = vld [vmem:[%s2093 + $0x4] sm:$0xf]
        %v2096 = vld [vmem:[%s2093 + $0x8] sm:$0xf]
        %v2097 = vld [vmem:[%s2093 + $0xc] sm:$0xf]
        %v2102 = vunpack.c.l.b16 %v2094
        %v2103 = vunpack.c.l.b16 %v2095
        %v2104 = vunpack.c.l.b16 %v2096
        %v2105 = vunpack.c.l.b16 %v2097
        %v2106 = vpack.c.b16 %v2103, %v2102
        %v2107 = vpack.c.b16 %v2105, %v2104
        %v2111 = vsel %vm538, %v1565, 0
        %2113 = vmatprep.subr.bf16.mxu0 0
        %2114 = vmatpush1.bf16.msra.mxu0 %v2106
        %2115 = vmatprep.subr.bf16.mxu0 0
        %2116 = vmatpush1.bf16.msra.mxu0 %v2107
        %2117 = vmatprep.subr.bf16.mxu0 0
        %2118 = vmatpush1.bf16.msra.mxu0 0
        %2119 = vmatprep.subr.bf16.mxu0 0
        %2120 = vmatpush1.bf16.msra.mxu0 0
        %2121 = vmatprep.subr.bf16.mxu0 0
        %2122 = vmatpush1.bf16.msra.mxu0 0
        %2123 = vmatprep.subr.bf16.mxu0 0
        %2124 = vmatpush1.bf16.msra.mxu0 0
        %2125 = vmatprep.subr.bf16.mxu0 0
        %2126 = vmatpush1.bf16.msra.mxu0 0
        %2127 = vmatprep.subr.bf16.mxu0 0
        %2128 = vmatpush1.bf16.msra.mxu0 0
        %2129 = vmatprep.subr.bf16.mxu0 0
        %2130 = vmatpush1.bf16.msra.mxu0 0
        %2131 = vmatprep.subr.bf16.mxu0 0
        %2132 = vmatpush1.bf16.msra.mxu0 0
        %2133 = vmatprep.subr.bf16.mxu0 0
        %2134 = vmatpush1.bf16.msra.mxu0 0
        %2135 = vmatprep.subr.bf16.mxu0 0
        %2136 = vmatpush1.bf16.msra.mxu0 0
        %2137 = vmatprep.subr.bf16.mxu0 0
        %2138 = vmatpush1.bf16.msra.mxu0 0
        %2139 = vmatprep.subr.bf16.mxu0 0
        %2140 = vmatpush1.bf16.msra.mxu0 0
        %2141 = vmatprep.subr.bf16.mxu0 0
        %2142 = vmatpush1.bf16.msra.mxu0 0
        %2143 = vmatprep.subr.bf16.mxu0 0
        %2144 = vmatpush1.bf16.msra.mxu0 0
        %2145 = vmatprep.mubr.bf16.mxu0 0
        %2146 = vmatmul.mubr.bf16.gmra.mrb[0].mxu0 %v2111
        %v2147 = vpop.f32.mrb[0].mxu0
        %v2148 = vadd.f32 0.0, %v2147
        %v2149 = vpop.f32.mrb[0].mxu0
        %v2150 = vpop.f32.mrb[0].mxu0
        %v2151 = vpop.f32.mrb[0].mxu0
        %2152 = vdwg.mxu0
        %v2157 = vunpack.c.l.b16 %v2089
        %v2158 = vunpack.c.l.b16 %v2090
        %v2159 = vunpack.c.l.b16 %v2091
        %v2160 = vunpack.c.l.b16 %v2092
        %v2161 = vpack.c.b16 %v2158, %v2157
        %v2162 = vpack.c.b16 %v2160, %v2159
        %v2166 = vsel %vm538, %v1042, 0
        %2168 = vmatprep.subr.bf16.mxu0 0
        %2169 = vmatpush1.bf16.msra.mxu0 %v2161
        %2170 = vmatprep.subr.bf16.mxu0 0
        %2171 = vmatpush1.bf16.msra.mxu0 %v2162
        %2172 = vmatprep.subr.bf16.mxu0 0
        %2173 = vmatpush1.bf16.msra.mxu0 0
        %2174 = vmatprep.subr.bf16.mxu0 0
        %2175 = vmatpush1.bf16.msra.mxu0 0
        %2176 = vmatprep.subr.bf16.mxu0 0
        %2177 = vmatpush1.bf16.msra.mxu0 0
        %2178 = vmatprep.subr.bf16.mxu0 0
        %2179 = vmatpush1.bf16.msra.mxu0 0
        %2180 = vmatprep.subr.bf16.mxu0 0
        %2181 = vmatpush1.bf16.msra.mxu0 0
        %2182 = vmatprep.subr.bf16.mxu0 0
        %2183 = vmatpush1.bf16.msra.mxu0 0
        %2184 = vmatprep.subr.bf16.mxu0 0
        %2185 = vmatpush1.bf16.msra.mxu0 0
        %2186 = vmatprep.subr.bf16.mxu0 0
        %2187 = vmatpush1.bf16.msra.mxu0 0
        %2188 = vmatprep.subr.bf16.mxu0 0
        %2189 = vmatpush1.bf16.msra.mxu0 0
        %2190 = vmatprep.subr.bf16.mxu0 0
        %2191 = vmatpush1.bf16.msra.mxu0 0
        %2192 = vmatprep.subr.bf16.mxu0 0
        %2193 = vmatpush1.bf16.msra.mxu0 0
        %2194 = vmatprep.subr.bf16.mxu0 0
        %2195 = vmatpush1.bf16.msra.mxu0 0
        %2196 = vmatprep.subr.bf16.mxu0 0
        %2197 = vmatpush1.bf16.msra.mxu0 0
        %2198 = vmatprep.subr.bf16.mxu0 0
        %2199 = vmatpush1.bf16.msra.mxu0 0
        %2200 = vmatprep.mubr.bf16.mxu0 0
        %2201 = vmatmul.mubr.bf16.gmra.mrb[0].mxu0 %v2166
        %v2202 = vpop.f32.mrb[0].mxu0
        %v2203 = vadd.f32 %v2148, %v2202
        %v2204 = vpop.f32.mrb[0].mxu0
        %v2205 = vpop.f32.mrb[0].mxu0
        %v2206 = vpop.f32.mrb[0].mxu0
        %2207 = vdwg.mxu0
        %s2208 = scalar_lea.vmem %s11, 32
        %v2209 = vld [vmem:[%s2208] sm:$0xf]
        %v2210 = vld [vmem:[%s2208 + $0x4] sm:$0xf]
        %v2211 = vld [vmem:[%s2208 + $0x8] sm:$0xf]
        %v2212 = vld [vmem:[%s2208 + $0xc] sm:$0xf]
        %v2217 = vunpack.c.l.b16 %v2209
        %v2218 = vunpack.c.l.b16 %v2210
        %v2219 = vunpack.c.l.b16 %v2211
        %v2220 = vunpack.c.l.b16 %v2212
        %v2221 = vpack.c.b16 %v2218, %v2217
        %v2222 = vpack.c.b16 %v2220, %v2219
        %v2226 = vsel %vm538, %v2088, 0
        %2228 = vmatprep.subr.bf16.mxu0 0
        %2229 = vmatpush1.bf16.msra.mxu0 %v2221
        %2230 = vmatprep.subr.bf16.mxu0 0
        %2231 = vmatpush1.bf16.msra.mxu0 %v2222
        %2232 = vmatprep.subr.bf16.mxu0 0
        %2233 = vmatpush1.bf16.msra.mxu0 0
        %2234 = vmatprep.subr.bf16.mxu0 0
        %2235 = vmatpush1.bf16.msra.mxu0 0
        %2236 = vmatprep.subr.bf16.mxu0 0
        %2237 = vmatpush1.bf16.msra.mxu0 0
        %2238 = vmatprep.subr.bf16.mxu0 0
        %2239 = vmatpush1.bf16.msra.mxu0 0
        %2240 = vmatprep.subr.bf16.mxu0 0
        %2241 = vmatpush1.bf16.msra.mxu0 0
        %2242 = vmatprep.subr.bf16.mxu0 0
        %2243 = vmatpush1.bf16.msra.mxu0 0
        %2244 = vmatprep.subr.bf16.mxu0 0
        %2245 = vmatpush1.bf16.msra.mxu0 0
        %2246 = vmatprep.subr.bf16.mxu0 0
        %2247 = vmatpush1.bf16.msra.mxu0 0
        %2248 = vmatprep.subr.bf16.mxu0 0
        %2249 = vmatpush1.bf16.msra.mxu0 0
        %2250 = vmatprep.subr.bf16.mxu0 0
        %2251 = vmatpush1.bf16.msra.mxu0 0
        %2252 = vmatprep.subr.bf16.mxu0 0
        %2253 = vmatpush1.bf16.msra.mxu0 0
        %2254 = vmatprep.subr.bf16.mxu0 0
        %2255 = vmatpush1.bf16.msra.mxu0 0
        %2256 = vmatprep.subr.bf16.mxu0 0
        %2257 = vmatpush1.bf16.msra.mxu0 0
        %2258 = vmatprep.subr.bf16.mxu0 0
        %2259 = vmatpush1.bf16.msra.mxu0 0
        %2260 = vmatprep.mubr.bf16.mxu0 0
        %2261 = vmatmul.mubr.bf16.gmra.mrb[0].mxu0 %v2226
        %v2262 = vpop.f32.mrb[0].mxu0
        %v2263 = vadd.f32 0.0, %v2262
        %v2264 = vpop.f32.mrb[0].mxu0
        %v2265 = vpop.f32.mrb[0].mxu0
        %v2266 = vpop.f32.mrb[0].mxu0
        %2267 = vdwg.mxu0
        %v2268 = vadd.f32 %v2203, %v2263
        %v2269 = vld [vmem:[%s12] sm:$0x1]
        %v2271 = vlaneseq
        %v2272 = vshrl.u32 %v2271, 7
        %v2273 = vsub.s32 0, %v2272
        %v2274 = vrot.slane %v2269, %v2273
        %v2276 = vadd.f32 %v2268, %v2274
        %2277 = vst.msk [vmem:[%s483] sm:$0xff] %vm538, %v2276
        %s2278 = sand.u32 %s333, 1
        %s2279 = scalar_lea.sflag [#allocation3], %s2278
        %s2280 = sand.u32 %s333, 1
        %s2281 = smul.addr %s2280, 8
        %s2282 = scalar_lea.vmem [#allocation2], %s2281
        // Predicated region
        $region73: #{lsa_forward.1} parent=71 // pred_check
          %p2283 = pneg %p343
        $region74: #{lsa_forward.1} parent=71 // pred_check_branch
          %2285 = sbr.rel (%p2283) target = $region76
        $region75: #{lsa_forward.1} parent=71 // pred_region
          %s2287 = ssub.s32 128, 128
          %2288 = vsyncadd %s2279, %s2287
          %s2289 = smul.addr %s27, 128
          %s2290 = scalar_lea.hbm %s13, %s2289
          %s2292 = sshll.u32 %s2282, 4
          %s2293 = int_to_ptr.vmem [resolvable:$true] %s2292
          %2295 = dma.vmem_to_hbm [thread:$0]  %s2293, 128, %s2290, %s2279
        $region76: #{lsa_forward.1} parent=71 // pred_fallthru
          _
      $region72: #{lsa_forward.1} parent=5 // pred_fallthru
        _
      %p2296 = scmp.le.s32.totalorder 2, %s22
      // Predicated region
      $region77: #{lsa_forward.1} parent=5 // pred_check
        %p2297 = pneg %p2296
      $region78: #{lsa_forward.1} parent=5 // pred_check_branch
        %2299 = sbr.rel (%p2297) target = $region80
      $region79: #{lsa_forward.1} parent=5 // pred_region
        %s2300 = ssub.s32 %s22, 2
        // Predicated region
        $region81: #{lsa_forward.1} parent=79 // pred_check
          %p2301 = pneg %p349
        $region82: #{lsa_forward.1} parent=79 // pred_check_branch
          %2303 = sbr.rel (%p2301) target = $region84
        $region83: #{lsa_forward.1} parent=79 // pred_region
          %s2304 = sand.u32 %s334, 1
          %s2305 = scalar_lea.sflag [#allocation3], %s2304
          %s2306 = sand.u32 %s334, 1
          %s2307 = smul.addr %s2306, 8
          %s2308 = scalar_lea.vmem [#allocation2], %s2307
          %2309 = dma.done %s2305, 128
        $region84: #{lsa_forward.1} parent=79 // pred_fallthru
          _
      $region80: #{lsa_forward.1} parent=5 // pred_fallthru
        _
    $region6: #{lsa_forward.1} parent=1 // loop_footer
      %s26 = sadd.s32 1, %s22
    $region7: #{lsa_forward.1} parent=1 // loop_footer_branch
      %21 = sbr.rel target = $region3
    $region8: #{lsa_forward.1} parent=1 // loop_exit
      _
    %2310 = vsyncpa [#allocation3], 1
    %s2311 = scalar_lea.sflag [#allocation3], 1
    %2312 = vsyncpa %s2311, 1

</llo_original>
